<compile_context>
chip_gen: v7x
topology: tpu7x:2x2x1
jax: 0.10.0
libtpu: 0.0.40
codegen_flags: <defaults>
</compile_context>

<pallas_src>
import jax
import jax.numpy as jnp
from jax.experimental import pallas as pl
from jax.experimental.pallas import tpu as pltpu

_H = 16
_W = 16


# --------------------------- fused forward kernel ----------------------------
def _fused_kernel(x_ref, w1, b1, w2, b2, wt1, bt1, wt2, bt2, o_ref, pad_ref):
    f32 = jnp.float32

    # Zero the padded canvas once; the 2-wide margins are never written again,
    # so they provide the zero boundary condition for every stage below.
    pad_ref[...] = jnp.zeros((20, 20), f32)

    def put(plane):
        """Write a 16x16 canvas into the padded scratch, return padded value."""
        pad_ref[2:18, 2:18] = plane
        return pad_ref[...]

    def shifted(pv, a, b):
        """r[p,q] = canvas[p+a, q+b]  (zero outside the 16x16 canvas)."""
        return pv[2 + a:18 + a, 2 + b:18 + b]

    # Parity masks for the stride-2 / stride-4 canvas grids (built in-kernel).
    row = jax.lax.broadcasted_iota(jnp.int32, (_H, _W), 0)
    col = jax.lax.broadcasted_iota(jnp.int32, (_H, _W), 1)
    row2, col2 = row & 1, col & 1
    row4, col4 = row & 3, col & 3

    x0 = x_ref[0, 0, :, :]                                  # (16,16), Cin = 1

    # ---------------- Conv2d(1,4,3,pad=1) + ReLU  (dense 16x16) --------------
    pv = put(x0)
    taps = {(kh, kw): shifted(pv, kh - 1, kw - 1)
            for kh in range(3) for kw in range(3)}
    e1 = []
    for co in range(4):
        acc = jnp.zeros((_H, _W), f32)
        for kh in range(3):
            for kw in range(3):
                acc = acc + taps[(kh, kw)] * w1[(co * 3 + kh) * 3 + kw]
        e1.append(jnp.maximum(acc + b1[co], 0.0))

    # ---------------- MaxPool2d(2) #1: valid at canvas ≡ 0 (mod 2) -----------
    p1 = []
    for c in range(4):
        pv = put(e1[c])
        m = shifted(pv, 0, 0)
        for dh, dw in ((0, 1), (1, 0), (1, 1)):
            m = jnp.maximum(m, shifted(pv, dh, dw))
        p1.append(m)

    # ---------------- Conv2d(4,2,3,pad=1) + ReLU  on stride-2 canvas ---------
    acc2 = [jnp.zeros((_H, _W), f32) for _ in range(2)]
    for ci in range(4):
        pv = put(p1[ci])
        for kh in range(3):
            for kw in range(3):
                s = shifted(pv, 2 * (kh - 1), 2 * (kw - 1))
                for co in range(2):
                    acc2[co] = acc2[co] + s * w2[((co * 4 + ci) * 3 + kh) * 3 + kw]
    e2 = [jnp.maximum(acc2[co] + b2[co], 0.0) for co in range(2)]

    # ---------------- MaxPool2d(2) #2: valid at canvas ≡ 0 (mod 4) -----------
    p2 = []
    for c in range(2):
        pv = put(e2[c])
        m = shifted(pv, 0, 0)
        for dh, dw in ((0, 2), (2, 0), (2, 2)):
            m = jnp.maximum(m, shifted(pv, dh, dw))
        p2.append(m)

    # -------- ConvTranspose2d(2,4,2,stride=2) + ReLU  (valid ≡ 0 mod 2) ------
    acc3 = [jnp.zeros((_H, _W), f32) for _ in range(4)]
    for ci in range(2):
        pv = put(p2[ci])
        for ki in range(2):
            for kj in range(2):
                s = jnp.where((row4 == 2 * ki) & (col4 == 2 * kj),
                              shifted(pv, -2 * ki, -2 * kj), 0.0)
                for co in range(4):
                    acc3[co] = acc3[co] + s * wt1[((ci * 4 + co) * 2 + ki) * 2 + kj]
    d1 = [jnp.maximum(acc3[co] + bt1[co], 0.0) for co in range(4)]

    # -------- ConvTranspose2d(4,1,2,stride=2) + Sigmoid  (dense 16x16) -------
    acc4 = jnp.zeros((_H, _W), f32)
    for ci in range(4):
        pv = put(d1[ci])
        for ki in range(2):
            for kj in range(2):
                s = jnp.where((row2 == ki) & (col2 == kj),
                              shifted(pv, -ki, -kj), 0.0)
                acc4 = acc4 + s * wt2[(ci * 2 + ki) * 2 + kj]
    o_ref[0, 0, :, :] = jax.nn.sigmoid(acc4 + bt2[0])


# --------------------------------- wrapper -----------------------------------
def conv_autoencoder_forward(x, p):
    N, Cin, H, W = x.shape
    assert (Cin, H, W) == (1, _H, _W), (Cin, H, W)

    def flat(a):
        return jnp.asarray(a, jnp.float32).reshape(-1)

    smem = pl.BlockSpec(memory_space=pltpu.MemorySpace.SMEM)
    return pl.pallas_call(
        _fused_kernel,
        out_shape=jax.ShapeDtypeStruct((N, 1, H, W), jnp.float32),
        grid=(N,),
        in_specs=[pl.BlockSpec((1, 1, H, W), lambda n: (n, 0, 0, 0))] + [smem] * 8,
        out_specs=pl.BlockSpec((1, 1, H, W), lambda n: (n, 0, 0, 0)),
        scratch_shapes=[pltpu.VMEM((20, 20), jnp.float32)],
        compiler_params=pltpu.CompilerParams(
            dimension_semantics=("parallel",)),
    )(x.astype(jnp.float32),
      flat(p["w1"]), flat(p["b1"]), flat(p["w2"]), flat(p["b2"]),
      flat(p["wt1"]), flat(p["bt1"]), flat(p["wt2"]), flat(p["bt2"]))


def init_params(key):
    def uinit(k, shape, fan_in):
        bound = 1.0 / (fan_in ** 0.5)
        return jax.random.uniform(k, shape, jnp.float32, -bound, bound)

    ks = jax.random.split(key, 8)
    return {
        "w1": uinit(ks[0], (4, 1, 3, 3), 1 * 9),   # Conv2d(1, 4, 3)
        "b1": uinit(ks[1], (4,), 1 * 9),
        "w2": uinit(ks[2], (2, 4, 3, 3), 4 * 9),   # Conv2d(4, 2, 3)
        "b2": uinit(ks[3], (2,), 4 * 9),
        "wt1": uinit(ks[4], (2, 4, 2, 2), 2 * 4),  # ConvTranspose2d(2, 4, 2)
        "bt1": uinit(ks[5], (4,), 2 * 4),
        "wt2": uinit(ks[6], (4, 1, 2, 2), 4 * 4),  # ConvTranspose2d(4, 1, 2)
        "bt2": uinit(ks[7], (1,), 4 * 4),
    }


# ------------------------- Pure-JAX reference (check) ------------------------
def ref_forward(x, p):
    def conv(x, w, b):
        y = jax.lax.conv_general_dilated(
            x, w, (1, 1), ((1, 1), (1, 1)),
            dimension_numbers=("NCHW", "OIHW", "NCHW"))
        return jnp.maximum(y + b[None, :, None, None], 0.0)

    def pool(x):
        return jax.lax.reduce_window(x, -jnp.inf, jax.lax.max,
                                     (1, 1, 2, 2), (1, 1, 2, 2), "VALID")

    def deconv(x, w, b, act):
        N, Cin, H, W = x.shape
        Cout = w.shape[1]
        y = jnp.einsum("ncij,cokl->noklij", x, w)
        out = jnp.zeros((N, Cout, 2 * H, 2 * W), jnp.float32)
        for ki in range(2):
            for kj in range(2):
                out = out.at[:, :, ki::2, kj::2].set(y[:, :, ki, kj])
        return act(out + b[None, :, None, None])

    h = conv(x, p["w1"], p["b1"])
    h = pool(h)
    h = conv(h, p["w2"], p["b2"])
    h = pool(h)
    h = deconv(h, p["wt1"], p["bt1"], lambda z: jnp.maximum(z, 0.0))
    h = deconv(h, p["wt2"], p["bt2"], jax.nn.sigmoid)
    return h


if __name__ == "__main__":
    key = jax.random.PRNGKey(0)
    kx, kp = jax.random.split(key)
    x = jax.random.uniform(kx, (2, 1, 16, 16), jnp.float32)  # NCHW, 1 input channel
    params = init_params(kp)

    out = conv_autoencoder_forward(x, params)
    out = jax.block_until_ready(out)
    assert out.shape == (2, 1, 16, 16), out.shape

    ref = ref_forward(x, params)
    if not jnp.allclose(out, ref, rtol=1e-3, atol=1e-3):
        raise SystemExit(
            f"mismatch vs reference, max abs err = {float(jnp.max(jnp.abs(out - ref)))}")
    print("KERNEL_OK")
</pallas_src>

<mosaic_0001>
module attributes {stable_mosaic.version = 11 : i64} {
  func.func @_fused_kernel(%arg0: i32, %arg1: memref<1x1x16x16xf32, #tpu.memory_space<vmem>>, %arg2: memref<36xf32, #tpu.memory_space<smem>>, %arg3: memref<4xf32, #tpu.memory_space<smem>>, %arg4: memref<72xf32, #tpu.memory_space<smem>>, %arg5: memref<2xf32, #tpu.memory_space<smem>>, %arg6: memref<32xf32, #tpu.memory_space<smem>>, %arg7: memref<4xf32, #tpu.memory_space<smem>>, %arg8: memref<16xf32, #tpu.memory_space<smem>>, %arg9: memref<1xf32, #tpu.memory_space<smem>>, %arg10: memref<1x1x16x16xf32, #tpu.memory_space<vmem>>, %arg11: memref<20x20xf32, #tpu.memory_space<vmem>>) attributes {dimension_semantics = [#tpu.dimension_semantics<parallel>], iteration_bounds = array<i64: 2>, scalar_prefetch = 0 : i64, scratch_operands = 1 : i64, tpu.core_type = #tpu.core_type<tc>, window_params = [{transform_indices = @transform_0, window_bounds = array<i64: 1, 1, 16, 16>}, {transform_indices = @transform_1, window_bounds = array<i64: 36>}, {transform_indices = @transform_2, window_bounds = array<i64: 4>}, {transform_indices = @transform_3, window_bounds = array<i64: 72>}, {transform_indices = @transform_4, window_bounds = array<i64: 2>}, {transform_indices = @transform_5, window_bounds = array<i64: 32>}, {transform_indices = @transform_6, window_bounds = array<i64: 4>}, {transform_indices = @transform_7, window_bounds = array<i64: 16>}, {transform_indices = @transform_8, window_bounds = array<i64: 1>}, {transform_indices = @transform_9, window_bounds = array<i64: 1, 1, 16, 16>}]} {
    %cst = arith.constant 0.000000e+00 : f32
    %0 = vector.broadcast %cst : f32 to vector<20x20xf32>
    %c0 = arith.constant 0 : index
    %c0_0 = arith.constant 0 : index
    %1 = vector.load %arg11[%c0, %c0_0] : memref<20x20xf32, #tpu.memory_space<vmem>>, vector<20x20xf32>
    tpu.vector_store %arg11[%c0, %c0_0], %0 {strides = array<i32>} : memref<20x20xf32, #tpu.memory_space<vmem>>, vector<20x20xf32>,
    %2 = tpu.iota {dimensions = array<i32: 0>} : vector<16x16xi32>
    %3 = tpu.iota {dimensions = array<i32: 1>} : vector<16x16xi32>
    %c1_i32 = arith.constant 1 : i32
    %4 = vector.broadcast %c1_i32 : i32 to vector<16x16xi32>
    %5 = arith.andi %2, %4 : vector<16x16xi32>
    %c1_i32_1 = arith.constant 1 : i32
    %6 = vector.broadcast %c1_i32_1 : i32 to vector<16x16xi32>
    %7 = arith.andi %3, %6 : vector<16x16xi32>
    %c3_i32 = arith.constant 3 : i32
    %8 = vector.broadcast %c3_i32 : i32 to vector<16x16xi32>
    %9 = arith.andi %2, %8 : vector<16x16xi32>
    %c3_i32_2 = arith.constant 3 : i32
    %10 = vector.broadcast %c3_i32_2 : i32 to vector<16x16xi32>
    %11 = arith.andi %3, %10 : vector<16x16xi32>
    %c0_3 = arith.constant 0 : index
    %c0_4 = arith.constant 0 : index
    %c0_5 = arith.constant 0 : index
    %c0_6 = arith.constant 0 : index
    %12 = vector.load %arg1[%c0_3, %c0_4, %c0_5, %c0_6] : memref<1x1x16x16xf32, #tpu.memory_space<vmem>>, vector<1x1x16x16xf32>
    %13 = vector.shape_cast %12 : vector<1x1x16x16xf32> to vector<16x16xf32>
    %c2 = arith.constant 2 : index
    %c2_7 = arith.constant 2 : index
    %14 = vector.load %arg11[%c2, %c2_7] : memref<20x20xf32, #tpu.memory_space<vmem>>, vector<16x16xf32>
    tpu.vector_store %arg11[%c2, %c2_7], %13 {strides = array<i32>} : memref<20x20xf32, #tpu.memory_space<vmem>>, vector<16x16xf32>,
    %c0_8 = arith.constant 0 : index
    %c0_9 = arith.constant 0 : index
    %15 = vector.load %arg11[%c0_8, %c0_9] : memref<20x20xf32, #tpu.memory_space<vmem>>, vector<20x20xf32>
    %16 = vector.extract_strided_slice %15 {offsets = [1, 1], sizes = [16, 16], strides = [1, 1]} : vector<20x20xf32> to vector<16x16xf32>
    %17 = vector.extract_strided_slice %15 {offsets = [1, 2], sizes = [16, 16], strides = [1, 1]} : vector<20x20xf32> to vector<16x16xf32>
    %18 = vector.extract_strided_slice %15 {offsets = [1, 3], sizes = [16, 16], strides = [1, 1]} : vector<20x20xf32> to vector<16x16xf32>
    %19 = vector.extract_strided_slice %15 {offsets = [2, 1], sizes = [16, 16], strides = [1, 1]} : vector<20x20xf32> to vector<16x16xf32>
    %20 = vector.extract_strided_slice %15 {offsets = [2, 2], sizes = [16, 16], strides = [1, 1]} : vector<20x20xf32> to vector<16x16xf32>
    %21 = vector.extract_strided_slice %15 {offsets = [2, 3], sizes = [16, 16], strides = [1, 1]} : vector<20x20xf32> to vector<16x16xf32>
    %22 = vector.extract_strided_slice %15 {offsets = [3, 1], sizes = [16, 16], strides = [1, 1]} : vector<20x20xf32> to vector<16x16xf32>
    %23 = vector.extract_strided_slice %15 {offsets = [3, 2], sizes = [16, 16], strides = [1, 1]} : vector<20x20xf32> to vector<16x16xf32>
    %24 = vector.extract_strided_slice %15 {offsets = [3, 3], sizes = [16, 16], strides = [1, 1]} : vector<20x20xf32> to vector<16x16xf32>
    %cst_10 = arith.constant 0.000000e+00 : f32
    %25 = vector.broadcast %cst_10 : f32 to vector<16x16xf32>
    %c0_11 = arith.constant 0 : index
    %26 = memref.load %arg2[%c0_11] : memref<36xf32, #tpu.memory_space<smem>>
    %27 = vector.broadcast %26 : f32 to vector<16x16xf32>
    %28 = arith.mulf %16, %27 : vector<16x16xf32>
    %29 = arith.addf %25, %28 : vector<16x16xf32>
    %c1 = arith.constant 1 : index
    %30 = memref.load %arg2[%c1] : memref<36xf32, #tpu.memory_space<smem>>
    %31 = vector.broadcast %30 : f32 to vector<16x16xf32>
    %32 = arith.mulf %17, %31 : vector<16x16xf32>
    %33 = arith.addf %29, %32 : vector<16x16xf32>
    %c2_12 = arith.constant 2 : index
    %34 = memref.load %arg2[%c2_12] : memref<36xf32, #tpu.memory_space<smem>>
    %35 = vector.broadcast %34 : f32 to vector<16x16xf32>
    %36 = arith.mulf %18, %35 : vector<16x16xf32>
    %37 = arith.addf %33, %36 : vector<16x16xf32>
    %c3 = arith.constant 3 : index
    %38 = memref.load %arg2[%c3] : memref<36xf32, #tpu.memory_space<smem>>
    %39 = vector.broadcast %38 : f32 to vector<16x16xf32>
    %40 = arith.mulf %19, %39 : vector<16x16xf32>
    %41 = arith.addf %37, %40 : vector<16x16xf32>
    %c4 = arith.constant 4 : index
    %42 = memref.load %arg2[%c4] : memref<36xf32, #tpu.memory_space<smem>>
    %43 = vector.broadcast %42 : f32 to vector<16x16xf32>
    %44 = arith.mulf %20, %43 : vector<16x16xf32>
    %45 = arith.addf %41, %44 : vector<16x16xf32>
    %c5 = arith.constant 5 : index
    %46 = memref.load %arg2[%c5] : memref<36xf32, #tpu.memory_space<smem>>
    %47 = vector.broadcast %46 : f32 to vector<16x16xf32>
    %48 = arith.mulf %21, %47 : vector<16x16xf32>
    %49 = arith.addf %45, %48 : vector<16x16xf32>
    %c6 = arith.constant 6 : index
    %50 = memref.load %arg2[%c6] : memref<36xf32, #tpu.memory_space<smem>>
    %51 = vector.broadcast %50 : f32 to vector<16x16xf32>
    %52 = arith.mulf %22, %51 : vector<16x16xf32>
    %53 = arith.addf %49, %52 : vector<16x16xf32>
    %c7 = arith.constant 7 : index
    %54 = memref.load %arg2[%c7] : memref<36xf32, #tpu.memory_space<smem>>
    %55 = vector.broadcast %54 : f32 to vector<16x16xf32>
    %56 = arith.mulf %23, %55 : vector<16x16xf32>
    %57 = arith.addf %53, %56 : vector<16x16xf32>
    %c8 = arith.constant 8 : index
    %58 = memref.load %arg2[%c8] : memref<36xf32, #tpu.memory_space<smem>>
    %59 = vector.broadcast %58 : f32 to vector<16x16xf32>
    %60 = arith.mulf %24, %59 : vector<16x16xf32>
    %61 = arith.addf %57, %60 : vector<16x16xf32>
    %c0_13 = arith.constant 0 : index
    %62 = memref.load %arg3[%c0_13] : memref<4xf32, #tpu.memory_space<smem>>
    %63 = vector.broadcast %62 : f32 to vector<16x16xf32>
    %64 = arith.addf %61, %63 : vector<16x16xf32>
    %cst_14 = arith.constant 0.000000e+00 : f32
    %65 = vector.broadcast %cst_14 : f32 to vector<16x16xf32>
    %66 = arith.maximumf %64, %65 : vector<16x16xf32>
    %cst_15 = arith.constant 0.000000e+00 : f32
    %67 = vector.broadcast %cst_15 : f32 to vector<16x16xf32>
    %c9 = arith.constant 9 : index
    %68 = memref.load %arg2[%c9] : memref<36xf32, #tpu.memory_space<smem>>
    %69 = vector.broadcast %68 : f32 to vector<16x16xf32>
    %70 = arith.mulf %16, %69 : vector<16x16xf32>
    %71 = arith.addf %67, %70 : vector<16x16xf32>
    %c10 = arith.constant 10 : index
    %72 = memref.load %arg2[%c10] : memref<36xf32, #tpu.memory_space<smem>>
    %73 = vector.broadcast %72 : f32 to vector<16x16xf32>
    %74 = arith.mulf %17, %73 : vector<16x16xf32>
    %75 = arith.addf %71, %74 : vector<16x16xf32>
    %c11 = arith.constant 11 : index
    %76 = memref.load %arg2[%c11] : memref<36xf32, #tpu.memory_space<smem>>
    %77 = vector.broadcast %76 : f32 to vector<16x16xf32>
    %78 = arith.mulf %18, %77 : vector<16x16xf32>
    %79 = arith.addf %75, %78 : vector<16x16xf32>
    %c12 = arith.constant 12 : index
    %80 = memref.load %arg2[%c12] : memref<36xf32, #tpu.memory_space<smem>>
    %81 = vector.broadcast %80 : f32 to vector<16x16xf32>
    %82 = arith.mulf %19, %81 : vector<16x16xf32>
    %83 = arith.addf %79, %82 : vector<16x16xf32>
    %c13 = arith.constant 13 : index
    %84 = memref.load %arg2[%c13] : memref<36xf32, #tpu.memory_space<smem>>
    %85 = vector.broadcast %84 : f32 to vector<16x16xf32>
    %86 = arith.mulf %20, %85 : vector<16x16xf32>
    %87 = arith.addf %83, %86 : vector<16x16xf32>
    %c14 = arith.constant 14 : index
    %88 = memref.load %arg2[%c14] : memref<36xf32, #tpu.memory_space<smem>>
    %89 = vector.broadcast %88 : f32 to vector<16x16xf32>
    %90 = arith.mulf %21, %89 : vector<16x16xf32>
    %91 = arith.addf %87, %90 : vector<16x16xf32>
    %c15 = arith.constant 15 : index
    %92 = memref.load %arg2[%c15] : memref<36xf32, #tpu.memory_space<smem>>
    %93 = vector.broadcast %92 : f32 to vector<16x16xf32>
    %94 = arith.mulf %22, %93 : vector<16x16xf32>
    %95 = arith.addf %91, %94 : vector<16x16xf32>
    %c16 = arith.constant 16 : index
    %96 = memref.load %arg2[%c16] : memref<36xf32, #tpu.memory_space<smem>>
    %97 = vector.broadcast %96 : f32 to vector<16x16xf32>
    %98 = arith.mulf %23, %97 : vector<16x16xf32>
    %99 = arith.addf %95, %98 : vector<16x16xf32>
    %c17 = arith.constant 17 : index
    %100 = memref.load %arg2[%c17] : memref<36xf32, #tpu.memory_space<smem>>
    %101 = vector.broadcast %100 : f32 to vector<16x16xf32>
    %102 = arith.mulf %24, %101 : vector<16x16xf32>
    %103 = arith.addf %99, %102 : vector<16x16xf32>
    %c1_16 = arith.constant 1 : index
    %104 = memref.load %arg3[%c1_16] : memref<4xf32, #tpu.memory_space<smem>>
    %105 = vector.broadcast %104 : f32 to vector<16x16xf32>
    %106 = arith.addf %103, %105 : vector<16x16xf32>
    %cst_17 = arith.constant 0.000000e+00 : f32
    %107 = vector.broadcast %cst_17 : f32 to vector<16x16xf32>
    %108 = arith.maximumf %106, %107 : vector<16x16xf32>
    %cst_18 = arith.constant 0.000000e+00 : f32
    %109 = vector.broadcast %cst_18 : f32 to vector<16x16xf32>
    %c18 = arith.constant 18 : index
    %110 = memref.load %arg2[%c18] : memref<36xf32, #tpu.memory_space<smem>>
    %111 = vector.broadcast %110 : f32 to vector<16x16xf32>
    %112 = arith.mulf %16, %111 : vector<16x16xf32>
    %113 = arith.addf %109, %112 : vector<16x16xf32>
    %c19 = arith.constant 19 : index
    %114 = memref.load %arg2[%c19] : memref<36xf32, #tpu.memory_space<smem>>
    %115 = vector.broadcast %114 : f32 to vector<16x16xf32>
    %116 = arith.mulf %17, %115 : vector<16x16xf32>
    %117 = arith.addf %113, %116 : vector<16x16xf32>
    %c20 = arith.constant 20 : index
    %118 = memref.load %arg2[%c20] : memref<36xf32, #tpu.memory_space<smem>>
    %119 = vector.broadcast %118 : f32 to vector<16x16xf32>
    %120 = arith.mulf %18, %119 : vector<16x16xf32>
    %121 = arith.addf %117, %120 : vector<16x16xf32>
    %c21 = arith.constant 21 : index
    %122 = memref.load %arg2[%c21] : memref<36xf32, #tpu.memory_space<smem>>
    %123 = vector.broadcast %122 : f32 to vector<16x16xf32>
    %124 = arith.mulf %19, %123 : vector<16x16xf32>
    %125 = arith.addf %121, %124 : vector<16x16xf32>
    %c22 = arith.constant 22 : index
    %126 = memref.load %arg2[%c22] : memref<36xf32, #tpu.memory_space<smem>>
    %127 = vector.broadcast %126 : f32 to vector<16x16xf32>
    %128 = arith.mulf %20, %127 : vector<16x16xf32>
    %129 = arith.addf %125, %128 : vector<16x16xf32>
    %c23 = arith.constant 23 : index
    %130 = memref.load %arg2[%c23] : memref<36xf32, #tpu.memory_space<smem>>
    %131 = vector.broadcast %130 : f32 to vector<16x16xf32>
    %132 = arith.mulf %21, %131 : vector<16x16xf32>
    %133 = arith.addf %129, %132 : vector<16x16xf32>
    %c24 = arith.constant 24 : index
    %134 = memref.load %arg2[%c24] : memref<36xf32, #tpu.memory_space<smem>>
    %135 = vector.broadcast %134 : f32 to vector<16x16xf32>
    %136 = arith.mulf %22, %135 : vector<16x16xf32>
    %137 = arith.addf %133, %136 : vector<16x16xf32>
    %c25 = arith.constant 25 : index
    %138 = memref.load %arg2[%c25] : memref<36xf32, #tpu.memory_space<smem>>
    %139 = vector.broadcast %138 : f32 to vector<16x16xf32>
    %140 = arith.mulf %23, %139 : vector<16x16xf32>
    %141 = arith.addf %137, %140 : vector<16x16xf32>
    %c26 = arith.constant 26 : index
    %142 = memref.load %arg2[%c26] : memref<36xf32, #tpu.memory_space<smem>>
    %143 = vector.broadcast %142 : f32 to vector<16x16xf32>
    %144 = arith.mulf %24, %143 : vector<16x16xf32>
    %145 = arith.addf %141, %144 : vector<16x16xf32>
    %c2_19 = arith.constant 2 : index
    %146 = memref.load %arg3[%c2_19] : memref<4xf32, #tpu.memory_space<smem>>
    %147 = vector.broadcast %146 : f32 to vector<16x16xf32>
    %148 = arith.addf %145, %147 : vector<16x16xf32>
    %cst_20 = arith.constant 0.000000e+00 : f32
    %149 = vector.broadcast %cst_20 : f32 to vector<16x16xf32>
    %150 = arith.maximumf %148, %149 : vector<16x16xf32>
    %cst_21 = arith.constant 0.000000e+00 : f32
    %151 = vector.broadcast %cst_21 : f32 to vector<16x16xf32>
    %c27 = arith.constant 27 : index
    %152 = memref.load %arg2[%c27] : memref<36xf32, #tpu.memory_space<smem>>
    %153 = vector.broadcast %152 : f32 to vector<16x16xf32>
    %154 = arith.mulf %16, %153 : vector<16x16xf32>
    %155 = arith.addf %151, %154 : vector<16x16xf32>
    %c28 = arith.constant 28 : index
    %156 = memref.load %arg2[%c28] : memref<36xf32, #tpu.memory_space<smem>>
    %157 = vector.broadcast %156 : f32 to vector<16x16xf32>
    %158 = arith.mulf %17, %157 : vector<16x16xf32>
    %159 = arith.addf %155, %158 : vector<16x16xf32>
    %c29 = arith.constant 29 : index
    %160 = memref.load %arg2[%c29] : memref<36xf32, #tpu.memory_space<smem>>
    %161 = vector.broadcast %160 : f32 to vector<16x16xf32>
    %162 = arith.mulf %18, %161 : vector<16x16xf32>
    %163 = arith.addf %159, %162 : vector<16x16xf32>
    %c30 = arith.constant 30 : index
    %164 = memref.load %arg2[%c30] : memref<36xf32, #tpu.memory_space<smem>>
    %165 = vector.broadcast %164 : f32 to vector<16x16xf32>
    %166 = arith.mulf %19, %165 : vector<16x16xf32>
    %167 = arith.addf %163, %166 : vector<16x16xf32>
    %c31 = arith.constant 31 : index
    %168 = memref.load %arg2[%c31] : memref<36xf32, #tpu.memory_space<smem>>
    %169 = vector.broadcast %168 : f32 to vector<16x16xf32>
    %170 = arith.mulf %20, %169 : vector<16x16xf32>
    %171 = arith.addf %167, %170 : vector<16x16xf32>
    %c32 = arith.constant 32 : index
    %172 = memref.load %arg2[%c32] : memref<36xf32, #tpu.memory_space<smem>>
    %173 = vector.broadcast %172 : f32 to vector<16x16xf32>
    %174 = arith.mulf %21, %173 : vector<16x16xf32>
    %175 = arith.addf %171, %174 : vector<16x16xf32>
    %c33 = arith.constant 33 : index
    %176 = memref.load %arg2[%c33] : memref<36xf32, #tpu.memory_space<smem>>
    %177 = vector.broadcast %176 : f32 to vector<16x16xf32>
    %178 = arith.mulf %22, %177 : vector<16x16xf32>
    %179 = arith.addf %175, %178 : vector<16x16xf32>
    %c34 = arith.constant 34 : index
    %180 = memref.load %arg2[%c34] : memref<36xf32, #tpu.memory_space<smem>>
    %181 = vector.broadcast %180 : f32 to vector<16x16xf32>
    %182 = arith.mulf %23, %181 : vector<16x16xf32>
    %183 = arith.addf %179, %182 : vector<16x16xf32>
    %c35 = arith.constant 35 : index
    %184 = memref.load %arg2[%c35] : memref<36xf32, #tpu.memory_space<smem>>
    %185 = vector.broadcast %184 : f32 to vector<16x16xf32>
    %186 = arith.mulf %24, %185 : vector<16x16xf32>
    %187 = arith.addf %183, %186 : vector<16x16xf32>
    %c3_22 = arith.constant 3 : index
    %188 = memref.load %arg3[%c3_22] : memref<4xf32, #tpu.memory_space<smem>>
    %189 = vector.broadcast %188 : f32 to vector<16x16xf32>
    %190 = arith.addf %187, %189 : vector<16x16xf32>
    %cst_23 = arith.constant 0.000000e+00 : f32
    %191 = vector.broadcast %cst_23 : f32 to vector<16x16xf32>
    %192 = arith.maximumf %190, %191 : vector<16x16xf32>
    %c2_24 = arith.constant 2 : index
    %c2_25 = arith.constant 2 : index
    %193 = vector.load %arg11[%c2_24, %c2_25] : memref<20x20xf32, #tpu.memory_space<vmem>>, vector<16x16xf32>
    tpu.vector_store %arg11[%c2_24, %c2_25], %66 {strides = array<i32>} : memref<20x20xf32, #tpu.memory_space<vmem>>, vector<16x16xf32>,
    %c0_26 = arith.constant 0 : index
    %c0_27 = arith.constant 0 : index
    %194 = vector.load %arg11[%c0_26, %c0_27] : memref<20x20xf32, #tpu.memory_space<vmem>>, vector<20x20xf32>
    %195 = vector.extract_strided_slice %194 {offsets = [2, 2], sizes = [16, 16], strides = [1, 1]} : vector<20x20xf32> to vector<16x16xf32>
    %196 = vector.extract_strided_slice %194 {offsets = [2, 3], sizes = [16, 16], strides = [1, 1]} : vector<20x20xf32> to vector<16x16xf32>
    %197 = arith.maximumf %195, %196 : vector<16x16xf32>
    %198 = vector.extract_strided_slice %194 {offsets = [3, 2], sizes = [16, 16], strides = [1, 1]} : vector<20x20xf32> to vector<16x16xf32>
    %199 = arith.maximumf %197, %198 : vector<16x16xf32>
    %200 = vector.extract_strided_slice %194 {offsets = [3, 3], sizes = [16, 16], strides = [1, 1]} : vector<20x20xf32> to vector<16x16xf32>
    %201 = arith.maximumf %199, %200 : vector<16x16xf32>
    %c2_28 = arith.constant 2 : index
    %c2_29 = arith.constant 2 : index
    %202 = vector.load %arg11[%c2_28, %c2_29] : memref<20x20xf32, #tpu.memory_space<vmem>>, vector<16x16xf32>
    tpu.vector_store %arg11[%c2_28, %c2_29], %108 {strides = array<i32>} : memref<20x20xf32, #tpu.memory_space<vmem>>, vector<16x16xf32>,
    %c0_30 = arith.constant 0 : index
    %c0_31 = arith.constant 0 : index
    %203 = vector.load %arg11[%c0_30, %c0_31] : memref<20x20xf32, #tpu.memory_space<vmem>>, vector<20x20xf32>
    %204 = vector.extract_strided_slice %203 {offsets = [2, 2], sizes = [16, 16], strides = [1, 1]} : vector<20x20xf32> to vector<16x16xf32>
    %205 = vector.extract_strided_slice %203 {offsets = [2, 3], sizes = [16, 16], strides = [1, 1]} : vector<20x20xf32> to vector<16x16xf32>
    %206 = arith.maximumf %204, %205 : vector<16x16xf32>
    %207 = vector.extract_strided_slice %203 {offsets = [3, 2], sizes = [16, 16], strides = [1, 1]} : vector<20x20xf32> to vector<16x16xf32>
    %208 = arith.maximumf %206, %207 : vector<16x16xf32>
    %209 = vector.extract_strided_slice %203 {offsets = [3, 3], sizes = [16, 16], strides = [1, 1]} : vector<20x20xf32> to vector<16x16xf32>
    %210 = arith.maximumf %208, %209 : vector<16x16xf32>
    %c2_32 = arith.constant 2 : index
    %c2_33 = arith.constant 2 : index
    %211 = vector.load %arg11[%c2_32, %c2_33] : memref<20x20xf32, #tpu.memory_space<vmem>>, vector<16x16xf32>
    tpu.vector_store %arg11[%c2_32, %c2_33], %150 {strides = array<i32>} : memref<20x20xf32, #tpu.memory_space<vmem>>, vector<16x16xf32>,
    %c0_34 = arith.constant 0 : index
    %c0_35 = arith.constant 0 : index
    %212 = vector.load %arg11[%c0_34, %c0_35] : memref<20x20xf32, #tpu.memory_space<vmem>>, vector<20x20xf32>
    %213 = vector.extract_strided_slice %212 {offsets = [2, 2], sizes = [16, 16], strides = [1, 1]} : vector<20x20xf32> to vector<16x16xf32>
    %214 = vector.extract_strided_slice %212 {offsets = [2, 3], sizes = [16, 16], strides = [1, 1]} : vector<20x20xf32> to vector<16x16xf32>
    %215 = arith.maximumf %213, %214 : vector<16x16xf32>
    %216 = vector.extract_strided_slice %212 {offsets = [3, 2], sizes = [16, 16], strides = [1, 1]} : vector<20x20xf32> to vector<16x16xf32>
    %217 = arith.maximumf %215, %216 : vector<16x16xf32>
    %218 = vector.extract_strided_slice %212 {offsets = [3, 3], sizes = [16, 16], strides = [1, 1]} : vector<20x20xf32> to vector<16x16xf32>
    %219 = arith.maximumf %217, %218 : vector<16x16xf32>
    %c2_36 = arith.constant 2 : index
    %c2_37 = arith.constant 2 : index
    %220 = vector.load %arg11[%c2_36, %c2_37] : memref<20x20xf32, #tpu.memory_space<vmem>>, vector<16x16xf32>
    tpu.vector_store %arg11[%c2_36, %c2_37], %192 {strides = array<i32>} : memref<20x20xf32, #tpu.memory_space<vmem>>, vector<16x16xf32>,
    %c0_38 = arith.constant 0 : index
    %c0_39 = arith.constant 0 : index
    %221 = vector.load %arg11[%c0_38, %c0_39] : memref<20x20xf32, #tpu.memory_space<vmem>>, vector<20x20xf32>
    %222 = vector.extract_strided_slice %221 {offsets = [2, 2], sizes = [16, 16], strides = [1, 1]} : vector<20x20xf32> to vector<16x16xf32>
    %223 = vector.extract_strided_slice %221 {offsets = [2, 3], sizes = [16, 16], strides = [1, 1]} : vector<20x20xf32> to vector<16x16xf32>
    %224 = arith.maximumf %222, %223 : vector<16x16xf32>
    %225 = vector.extract_strided_slice %221 {offsets = [3, 2], sizes = [16, 16], strides = [1, 1]} : vector<20x20xf32> to vector<16x16xf32>
    %226 = arith.maximumf %224, %225 : vector<16x16xf32>
    %227 = vector.extract_strided_slice %221 {offsets = [3, 3], sizes = [16, 16], strides = [1, 1]} : vector<20x20xf32> to vector<16x16xf32>
    %228 = arith.maximumf %226, %227 : vector<16x16xf32>
    %cst_40 = arith.constant 0.000000e+00 : f32
    %229 = vector.broadcast %cst_40 : f32 to vector<16x16xf32>
    %cst_41 = arith.constant 0.000000e+00 : f32
    %230 = vector.broadcast %cst_41 : f32 to vector<16x16xf32>
    %c2_42 = arith.constant 2 : index
    %c2_43 = arith.constant 2 : index
    %231 = vector.load %arg11[%c2_42, %c2_43] : memref<20x20xf32, #tpu.memory_space<vmem>>, vector<16x16xf32>
    tpu.vector_store %arg11[%c2_42, %c2_43], %201 {strides = array<i32>} : memref<20x20xf32, #tpu.memory_space<vmem>>, vector<16x16xf32>,
    %c0_44 = arith.constant 0 : index
    %c0_45 = arith.constant 0 : index
    %232 = vector.load %arg11[%c0_44, %c0_45] : memref<20x20xf32, #tpu.memory_space<vmem>>, vector<20x20xf32>
    %233 = vector.extract_strided_slice %232 {offsets = [0, 0], sizes = [16, 16], strides = [1, 1]} : vector<20x20xf32> to vector<16x16xf32>
    %c0_46 = arith.constant 0 : index
    %234 = memref.load %arg4[%c0_46] : memref<72xf32, #tpu.memory_space<smem>>
    %235 = vector.broadcast %234 : f32 to vector<16x16xf32>
    %236 = arith.mulf %233, %235 : vector<16x16xf32>
    %237 = arith.addf %229, %236 : vector<16x16xf32>
    %c36 = arith.constant 36 : index
    %238 = memref.load %arg4[%c36] : memref<72xf32, #tpu.memory_space<smem>>
    %239 = vector.broadcast %238 : f32 to vector<16x16xf32>
    %240 = arith.mulf %233, %239 : vector<16x16xf32>
    %241 = arith.addf %230, %240 : vector<16x16xf32>
    %242 = vector.extract_strided_slice %232 {offsets = [0, 2], sizes = [16, 16], strides = [1, 1]} : vector<20x20xf32> to vector<16x16xf32>
    %c1_47 = arith.constant 1 : index
    %243 = memref.load %arg4[%c1_47] : memref<72xf32, #tpu.memory_space<smem>>
    %244 = vector.broadcast %243 : f32 to vector<16x16xf32>
    %245 = arith.mulf %242, %244 : vector<16x16xf32>
    %246 = arith.addf %237, %245 : vector<16x16xf32>
    %c37 = arith.constant 37 : index
    %247 = memref.load %arg4[%c37] : memref<72xf32, #tpu.memory_space<smem>>
    %248 = vector.broadcast %247 : f32 to vector<16x16xf32>
    %249 = arith.mulf %242, %248 : vector<16x16xf32>
    %250 = arith.addf %241, %249 : vector<16x16xf32>
    %251 = vector.extract_strided_slice %232 {offsets = [0, 4], sizes = [16, 16], strides = [1, 1]} : vector<20x20xf32> to vector<16x16xf32>
    %c2_48 = arith.constant 2 : index
    %252 = memref.load %arg4[%c2_48] : memref<72xf32, #tpu.memory_space<smem>>
    %253 = vector.broadcast %252 : f32 to vector<16x16xf32>
    %254 = arith.mulf %251, %253 : vector<16x16xf32>
    %255 = arith.addf %246, %254 : vector<16x16xf32>
    %c38 = arith.constant 38 : index
    %256 = memref.load %arg4[%c38] : memref<72xf32, #tpu.memory_space<smem>>
    %257 = vector.broadcast %256 : f32 to vector<16x16xf32>
    %258 = arith.mulf %251, %257 : vector<16x16xf32>
    %259 = arith.addf %250, %258 : vector<16x16xf32>
    %260 = vector.extract_strided_slice %232 {offsets = [2, 0], sizes = [16, 16], strides = [1, 1]} : vector<20x20xf32> to vector<16x16xf32>
    %c3_49 = arith.constant 3 : index
    %261 = memref.load %arg4[%c3_49] : memref<72xf32, #tpu.memory_space<smem>>
    %262 = vector.broadcast %261 : f32 to vector<16x16xf32>
    %263 = arith.mulf %260, %262 : vector<16x16xf32>
    %264 = arith.addf %255, %263 : vector<16x16xf32>
    %c39 = arith.constant 39 : index
    %265 = memref.load %arg4[%c39] : memref<72xf32, #tpu.memory_space<smem>>
    %266 = vector.broadcast %265 : f32 to vector<16x16xf32>
    %267 = arith.mulf %260, %266 : vector<16x16xf32>
    %268 = arith.addf %259, %267 : vector<16x16xf32>
    %269 = vector.extract_strided_slice %232 {offsets = [2, 2], sizes = [16, 16], strides = [1, 1]} : vector<20x20xf32> to vector<16x16xf32>
    %c4_50 = arith.constant 4 : index
    %270 = memref.load %arg4[%c4_50] : memref<72xf32, #tpu.memory_space<smem>>
    %271 = vector.broadcast %270 : f32 to vector<16x16xf32>
    %272 = arith.mulf %269, %271 : vector<16x16xf32>
    %273 = arith.addf %264, %272 : vector<16x16xf32>
    %c40 = arith.constant 40 : index
    %274 = memref.load %arg4[%c40] : memref<72xf32, #tpu.memory_space<smem>>
    %275 = vector.broadcast %274 : f32 to vector<16x16xf32>
    %276 = arith.mulf %269, %275 : vector<16x16xf32>
    %277 = arith.addf %268, %276 : vector<16x16xf32>
    %278 = vector.extract_strided_slice %232 {offsets = [2, 4], sizes = [16, 16], strides = [1, 1]} : vector<20x20xf32> to vector<16x16xf32>
    %c5_51 = arith.constant 5 : index
    %279 = memref.load %arg4[%c5_51] : memref<72xf32, #tpu.memory_space<smem>>
    %280 = vector.broadcast %279 : f32 to vector<16x16xf32>
    %281 = arith.mulf %278, %280 : vector<16x16xf32>
    %282 = arith.addf %273, %281 : vector<16x16xf32>
    %c41 = arith.constant 41 : index
    %283 = memref.load %arg4[%c41] : memref<72xf32, #tpu.memory_space<smem>>
    %284 = vector.broadcast %283 : f32 to vector<16x16xf32>
    %285 = arith.mulf %278, %284 : vector<16x16xf32>
    %286 = arith.addf %277, %285 : vector<16x16xf32>
    %287 = vector.extract_strided_slice %232 {offsets = [4, 0], sizes = [16, 16], strides = [1, 1]} : vector<20x20xf32> to vector<16x16xf32>
    %c6_52 = arith.constant 6 : index
    %288 = memref.load %arg4[%c6_52] : memref<72xf32, #tpu.memory_space<smem>>
    %289 = vector.broadcast %288 : f32 to vector<16x16xf32>
    %290 = arith.mulf %287, %289 : vector<16x16xf32>
    %291 = arith.addf %282, %290 : vector<16x16xf32>
    %c42 = arith.constant 42 : index
    %292 = memref.load %arg4[%c42] : memref<72xf32, #tpu.memory_space<smem>>
    %293 = vector.broadcast %292 : f32 to vector<16x16xf32>
    %294 = arith.mulf %287, %293 : vector<16x16xf32>
    %295 = arith.addf %286, %294 : vector<16x16xf32>
    %296 = vector.extract_strided_slice %232 {offsets = [4, 2], sizes = [16, 16], strides = [1, 1]} : vector<20x20xf32> to vector<16x16xf32>
    %c7_53 = arith.constant 7 : index
    %297 = memref.load %arg4[%c7_53] : memref<72xf32, #tpu.memory_space<smem>>
    %298 = vector.broadcast %297 : f32 to vector<16x16xf32>
    %299 = arith.mulf %296, %298 : vector<16x16xf32>
    %300 = arith.addf %291, %299 : vector<16x16xf32>
    %c43 = arith.constant 43 : index
    %301 = memref.load %arg4[%c43] : memref<72xf32, #tpu.memory_space<smem>>
    %302 = vector.broadcast %301 : f32 to vector<16x16xf32>
    %303 = arith.mulf %296, %302 : vector<16x16xf32>
    %304 = arith.addf %295, %303 : vector<16x16xf32>
    %305 = vector.extract_strided_slice %232 {offsets = [4, 4], sizes = [16, 16], strides = [1, 1]} : vector<20x20xf32> to vector<16x16xf32>
    %c8_54 = arith.constant 8 : index
    %306 = memref.load %arg4[%c8_54] : memref<72xf32, #tpu.memory_space<smem>>
    %307 = vector.broadcast %306 : f32 to vector<16x16xf32>
    %308 = arith.mulf %305, %307 : vector<16x16xf32>
    %309 = arith.addf %300, %308 : vector<16x16xf32>
    %c44 = arith.constant 44 : index
    %310 = memref.load %arg4[%c44] : memref<72xf32, #tpu.memory_space<smem>>
    %311 = vector.broadcast %310 : f32 to vector<16x16xf32>
    %312 = arith.mulf %305, %311 : vector<16x16xf32>
    %313 = arith.addf %304, %312 : vector<16x16xf32>
    %c2_55 = arith.constant 2 : index
    %c2_56 = arith.constant 2 : index
    %314 = vector.load %arg11[%c2_55, %c2_56] : memref<20x20xf32, #tpu.memory_space<vmem>>, vector<16x16xf32>
    tpu.vector_store %arg11[%c2_55, %c2_56], %210 {strides = array<i32>} : memref<20x20xf32, #tpu.memory_space<vmem>>, vector<16x16xf32>,
    %c0_57 = arith.constant 0 : index
    %c0_58 = arith.constant 0 : index
    %315 = vector.load %arg11[%c0_57, %c0_58] : memref<20x20xf32, #tpu.memory_space<vmem>>, vector<20x20xf32>
    %316 = vector.extract_strided_slice %315 {offsets = [0, 0], sizes = [16, 16], strides = [1, 1]} : vector<20x20xf32> to vector<16x16xf32>
    %c9_59 = arith.constant 9 : index
    %317 = memref.load %arg4[%c9_59] : memref<72xf32, #tpu.memory_space<smem>>
    %318 = vector.broadcast %317 : f32 to vector<16x16xf32>
    %319 = arith.mulf %316, %318 : vector<16x16xf32>
    %320 = arith.addf %309, %319 : vector<16x16xf32>
    %c45 = arith.constant 45 : index
    %321 = memref.load %arg4[%c45] : memref<72xf32, #tpu.memory_space<smem>>
    %322 = vector.broadcast %321 : f32 to vector<16x16xf32>
    %323 = arith.mulf %316, %322 : vector<16x16xf32>
    %324 = arith.addf %313, %323 : vector<16x16xf32>
    %325 = vector.extract_strided_slice %315 {offsets = [0, 2], sizes = [16, 16], strides = [1, 1]} : vector<20x20xf32> to vector<16x16xf32>
    %c10_60 = arith.constant 10 : index
    %326 = memref.load %arg4[%c10_60] : memref<72xf32, #tpu.memory_space<smem>>
    %327 = vector.broadcast %326 : f32 to vector<16x16xf32>
    %328 = arith.mulf %325, %327 : vector<16x16xf32>
    %329 = arith.addf %320, %328 : vector<16x16xf32>
    %c46 = arith.constant 46 : index
    %330 = memref.load %arg4[%c46] : memref<72xf32, #tpu.memory_space<smem>>
    %331 = vector.broadcast %330 : f32 to vector<16x16xf32>
    %332 = arith.mulf %325, %331 : vector<16x16xf32>
    %333 = arith.addf %324, %332 : vector<16x16xf32>
    %334 = vector.extract_strided_slice %315 {offsets = [0, 4], sizes = [16, 16], strides = [1, 1]} : vector<20x20xf32> to vector<16x16xf32>
    %c11_61 = arith.constant 11 : index
    %335 = memref.load %arg4[%c11_61] : memref<72xf32, #tpu.memory_space<smem>>
    %336 = vector.broadcast %335 : f32 to vector<16x16xf32>
    %337 = arith.mulf %334, %336 : vector<16x16xf32>
    %338 = arith.addf %329, %337 : vector<16x16xf32>
    %c47 = arith.constant 47 : index
    %339 = memref.load %arg4[%c47] : memref<72xf32, #tpu.memory_space<smem>>
    %340 = vector.broadcast %339 : f32 to vector<16x16xf32>
    %341 = arith.mulf %334, %340 : vector<16x16xf32>
    %342 = arith.addf %333, %341 : vector<16x16xf32>
    %343 = vector.extract_strided_slice %315 {offsets = [2, 0], sizes = [16, 16], strides = [1, 1]} : vector<20x20xf32> to vector<16x16xf32>
    %c12_62 = arith.constant 12 : index
    %344 = memref.load %arg4[%c12_62] : memref<72xf32, #tpu.memory_space<smem>>
    %345 = vector.broadcast %344 : f32 to vector<16x16xf32>
    %346 = arith.mulf %343, %345 : vector<16x16xf32>
    %347 = arith.addf %338, %346 : vector<16x16xf32>
    %c48 = arith.constant 48 : index
    %348 = memref.load %arg4[%c48] : memref<72xf32, #tpu.memory_space<smem>>
    %349 = vector.broadcast %348 : f32 to vector<16x16xf32>
    %350 = arith.mulf %343, %349 : vector<16x16xf32>
    %351 = arith.addf %342, %350 : vector<16x16xf32>
    %352 = vector.extract_strided_slice %315 {offsets = [2, 2], sizes = [16, 16], strides = [1, 1]} : vector<20x20xf32> to vector<16x16xf32>
    %c13_63 = arith.constant 13 : index
    %353 = memref.load %arg4[%c13_63] : memref<72xf32, #tpu.memory_space<smem>>
    %354 = vector.broadcast %353 : f32 to vector<16x16xf32>
    %355 = arith.mulf %352, %354 : vector<16x16xf32>
    %356 = arith.addf %347, %355 : vector<16x16xf32>
    %c49 = arith.constant 49 : index
    %357 = memref.load %arg4[%c49] : memref<72xf32, #tpu.memory_space<smem>>
    %358 = vector.broadcast %357 : f32 to vector<16x16xf32>
    %359 = arith.mulf %352, %358 : vector<16x16xf32>
    %360 = arith.addf %351, %359 : vector<16x16xf32>
    %361 = vector.extract_strided_slice %315 {offsets = [2, 4], sizes = [16, 16], strides = [1, 1]} : vector<20x20xf32> to vector<16x16xf32>
    %c14_64 = arith.constant 14 : index
    %362 = memref.load %arg4[%c14_64] : memref<72xf32, #tpu.memory_space<smem>>
    %363 = vector.broadcast %362 : f32 to vector<16x16xf32>
    %364 = arith.mulf %361, %363 : vector<16x16xf32>
    %365 = arith.addf %356, %364 : vector<16x16xf32>
    %c50 = arith.constant 50 : index
    %366 = memref.load %arg4[%c50] : memref<72xf32, #tpu.memory_space<smem>>
    %367 = vector.broadcast %366 : f32 to vector<16x16xf32>
    %368 = arith.mulf %361, %367 : vector<16x16xf32>
    %369 = arith.addf %360, %368 : vector<16x16xf32>
    %370 = vector.extract_strided_slice %315 {offsets = [4, 0], sizes = [16, 16], strides = [1, 1]} : vector<20x20xf32> to vector<16x16xf32>
    %c15_65 = arith.constant 15 : index
    %371 = memref.load %arg4[%c15_65] : memref<72xf32, #tpu.memory_space<smem>>
    %372 = vector.broadcast %371 : f32 to vector<16x16xf32>
    %373 = arith.mulf %370, %372 : vector<16x16xf32>
    %374 = arith.addf %365, %373 : vector<16x16xf32>
    %c51 = arith.constant 51 : index
    %375 = memref.load %arg4[%c51] : memref<72xf32, #tpu.memory_space<smem>>
    %376 = vector.broadcast %375 : f32 to vector<16x16xf32>
    %377 = arith.mulf %370, %376 : vector<16x16xf32>
    %378 = arith.addf %369, %377 : vector<16x16xf32>
    %379 = vector.extract_strided_slice %315 {offsets = [4, 2], sizes = [16, 16], strides = [1, 1]} : vector<20x20xf32> to vector<16x16xf32>
    %c16_66 = arith.constant 16 : index
    %380 = memref.load %arg4[%c16_66] : memref<72xf32, #tpu.memory_space<smem>>
    %381 = vector.broadcast %380 : f32 to vector<16x16xf32>
    %382 = arith.mulf %379, %381 : vector<16x16xf32>
    %383 = arith.addf %374, %382 : vector<16x16xf32>
    %c52 = arith.constant 52 : index
    %384 = memref.load %arg4[%c52] : memref<72xf32, #tpu.memory_space<smem>>
    %385 = vector.broadcast %384 : f32 to vector<16x16xf32>
    %386 = arith.mulf %379, %385 : vector<16x16xf32>
    %387 = arith.addf %378, %386 : vector<16x16xf32>
    %388 = vector.extract_strided_slice %315 {offsets = [4, 4], sizes = [16, 16], strides = [1, 1]} : vector<20x20xf32> to vector<16x16xf32>
    %c17_67 = arith.constant 17 : index
    %389 = memref.load %arg4[%c17_67] : memref<72xf32, #tpu.memory_space<smem>>
    %390 = vector.broadcast %389 : f32 to vector<16x16xf32>
    %391 = arith.mulf %388, %390 : vector<16x16xf32>
    %392 = arith.addf %383, %391 : vector<16x16xf32>
    %c53 = arith.constant 53 : index
    %393 = memref.load %arg4[%c53] : memref<72xf32, #tpu.memory_space<smem>>
    %394 = vector.broadcast %393 : f32 to vector<16x16xf32>
    %395 = arith.mulf %388, %394 : vector<16x16xf32>
    %396 = arith.addf %387, %395 : vector<16x16xf32>
    %c2_68 = arith.constant 2 : index
    %c2_69 = arith.constant 2 : index
    %397 = vector.load %arg11[%c2_68, %c2_69] : memref<20x20xf32, #tpu.memory_space<vmem>>, vector<16x16xf32>
    tpu.vector_store %arg11[%c2_68, %c2_69], %219 {strides = array<i32>} : memref<20x20xf32, #tpu.memory_space<vmem>>, vector<16x16xf32>,
    %c0_70 = arith.constant 0 : index
    %c0_71 = arith.constant 0 : index
    %398 = vector.load %arg11[%c0_70, %c0_71] : memref<20x20xf32, #tpu.memory_space<vmem>>, vector<20x20xf32>
    %399 = vector.extract_strided_slice %398 {offsets = [0, 0], sizes = [16, 16], strides = [1, 1]} : vector<20x20xf32> to vector<16x16xf32>
    %c18_72 = arith.constant 18 : index
    %400 = memref.load %arg4[%c18_72] : memref<72xf32, #tpu.memory_space<smem>>
    %401 = vector.broadcast %400 : f32 to vector<16x16xf32>
    %402 = arith.mulf %399, %401 : vector<16x16xf32>
    %403 = arith.addf %392, %402 : vector<16x16xf32>
    %c54 = arith.constant 54 : index
    %404 = memref.load %arg4[%c54] : memref<72xf32, #tpu.memory_space<smem>>
    %405 = vector.broadcast %404 : f32 to vector<16x16xf32>
    %406 = arith.mulf %399, %405 : vector<16x16xf32>
    %407 = arith.addf %396, %406 : vector<16x16xf32>
    %408 = vector.extract_strided_slice %398 {offsets = [0, 2], sizes = [16, 16], strides = [1, 1]} : vector<20x20xf32> to vector<16x16xf32>
    %c19_73 = arith.constant 19 : index
    %409 = memref.load %arg4[%c19_73] : memref<72xf32, #tpu.memory_space<smem>>
    %410 = vector.broadcast %409 : f32 to vector<16x16xf32>
    %411 = arith.mulf %408, %410 : vector<16x16xf32>
    %412 = arith.addf %403, %411 : vector<16x16xf32>
    %c55 = arith.constant 55 : index
    %413 = memref.load %arg4[%c55] : memref<72xf32, #tpu.memory_space<smem>>
    %414 = vector.broadcast %413 : f32 to vector<16x16xf32>
    %415 = arith.mulf %408, %414 : vector<16x16xf32>
    %416 = arith.addf %407, %415 : vector<16x16xf32>
    %417 = vector.extract_strided_slice %398 {offsets = [0, 4], sizes = [16, 16], strides = [1, 1]} : vector<20x20xf32> to vector<16x16xf32>
    %c20_74 = arith.constant 20 : index
    %418 = memref.load %arg4[%c20_74] : memref<72xf32, #tpu.memory_space<smem>>
    %419 = vector.broadcast %418 : f32 to vector<16x16xf32>
    %420 = arith.mulf %417, %419 : vector<16x16xf32>
    %421 = arith.addf %412, %420 : vector<16x16xf32>
    %c56 = arith.constant 56 : index
    %422 = memref.load %arg4[%c56] : memref<72xf32, #tpu.memory_space<smem>>
    %423 = vector.broadcast %422 : f32 to vector<16x16xf32>
    %424 = arith.mulf %417, %423 : vector<16x16xf32>
    %425 = arith.addf %416, %424 : vector<16x16xf32>
    %426 = vector.extract_strided_slice %398 {offsets = [2, 0], sizes = [16, 16], strides = [1, 1]} : vector<20x20xf32> to vector<16x16xf32>
    %c21_75 = arith.constant 21 : index
    %427 = memref.load %arg4[%c21_75] : memref<72xf32, #tpu.memory_space<smem>>
    %428 = vector.broadcast %427 : f32 to vector<16x16xf32>
    %429 = arith.mulf %426, %428 : vector<16x16xf32>
    %430 = arith.addf %421, %429 : vector<16x16xf32>
    %c57 = arith.constant 57 : index
    %431 = memref.load %arg4[%c57] : memref<72xf32, #tpu.memory_space<smem>>
    %432 = vector.broadcast %431 : f32 to vector<16x16xf32>
    %433 = arith.mulf %426, %432 : vector<16x16xf32>
    %434 = arith.addf %425, %433 : vector<16x16xf32>
    %435 = vector.extract_strided_slice %398 {offsets = [2, 2], sizes = [16, 16], strides = [1, 1]} : vector<20x20xf32> to vector<16x16xf32>
    %c22_76 = arith.constant 22 : index
    %436 = memref.load %arg4[%c22_76] : memref<72xf32, #tpu.memory_space<smem>>
    %437 = vector.broadcast %436 : f32 to vector<16x16xf32>
    %438 = arith.mulf %435, %437 : vector<16x16xf32>
    %439 = arith.addf %430, %438 : vector<16x16xf32>
    %c58 = arith.constant 58 : index
    %440 = memref.load %arg4[%c58] : memref<72xf32, #tpu.memory_space<smem>>
    %441 = vector.broadcast %440 : f32 to vector<16x16xf32>
    %442 = arith.mulf %435, %441 : vector<16x16xf32>
    %443 = arith.addf %434, %442 : vector<16x16xf32>
    %444 = vector.extract_strided_slice %398 {offsets = [2, 4], sizes = [16, 16], strides = [1, 1]} : vector<20x20xf32> to vector<16x16xf32>
    %c23_77 = arith.constant 23 : index
    %445 = memref.load %arg4[%c23_77] : memref<72xf32, #tpu.memory_space<smem>>
    %446 = vector.broadcast %445 : f32 to vector<16x16xf32>
    %447 = arith.mulf %444, %446 : vector<16x16xf32>
    %448 = arith.addf %439, %447 : vector<16x16xf32>
    %c59 = arith.constant 59 : index
    %449 = memref.load %arg4[%c59] : memref<72xf32, #tpu.memory_space<smem>>
    %450 = vector.broadcast %449 : f32 to vector<16x16xf32>
    %451 = arith.mulf %444, %450 : vector<16x16xf32>
    %452 = arith.addf %443, %451 : vector<16x16xf32>
    %453 = vector.extract_strided_slice %398 {offsets = [4, 0], sizes = [16, 16], strides = [1, 1]} : vector<20x20xf32> to vector<16x16xf32>
    %c24_78 = arith.constant 24 : index
    %454 = memref.load %arg4[%c24_78] : memref<72xf32, #tpu.memory_space<smem>>
    %455 = vector.broadcast %454 : f32 to vector<16x16xf32>
    %456 = arith.mulf %453, %455 : vector<16x16xf32>
    %457 = arith.addf %448, %456 : vector<16x16xf32>
    %c60 = arith.constant 60 : index
    %458 = memref.load %arg4[%c60] : memref<72xf32, #tpu.memory_space<smem>>
    %459 = vector.broadcast %458 : f32 to vector<16x16xf32>
    %460 = arith.mulf %453, %459 : vector<16x16xf32>
    %461 = arith.addf %452, %460 : vector<16x16xf32>
    %462 = vector.extract_strided_slice %398 {offsets = [4, 2], sizes = [16, 16], strides = [1, 1]} : vector<20x20xf32> to vector<16x16xf32>
    %c25_79 = arith.constant 25 : index
    %463 = memref.load %arg4[%c25_79] : memref<72xf32, #tpu.memory_space<smem>>
    %464 = vector.broadcast %463 : f32 to vector<16x16xf32>
    %465 = arith.mulf %462, %464 : vector<16x16xf32>
    %466 = arith.addf %457, %465 : vector<16x16xf32>
    %c61 = arith.constant 61 : index
    %467 = memref.load %arg4[%c61] : memref<72xf32, #tpu.memory_space<smem>>
    %468 = vector.broadcast %467 : f32 to vector<16x16xf32>
    %469 = arith.mulf %462, %468 : vector<16x16xf32>
    %470 = arith.addf %461, %469 : vector<16x16xf32>
    %471 = vector.extract_strided_slice %398 {offsets = [4, 4], sizes = [16, 16], strides = [1, 1]} : vector<20x20xf32> to vector<16x16xf32>
    %c26_80 = arith.constant 26 : index
    %472 = memref.load %arg4[%c26_80] : memref<72xf32, #tpu.memory_space<smem>>
    %473 = vector.broadcast %472 : f32 to vector<16x16xf32>
    %474 = arith.mulf %471, %473 : vector<16x16xf32>
    %475 = arith.addf %466, %474 : vector<16x16xf32>
    %c62 = arith.constant 62 : index
    %476 = memref.load %arg4[%c62] : memref<72xf32, #tpu.memory_space<smem>>
    %477 = vector.broadcast %476 : f32 to vector<16x16xf32>
    %478 = arith.mulf %471, %477 : vector<16x16xf32>
    %479 = arith.addf %470, %478 : vector<16x16xf32>
    %c2_81 = arith.constant 2 : index
    %c2_82 = arith.constant 2 : index
    %480 = vector.load %arg11[%c2_81, %c2_82] : memref<20x20xf32, #tpu.memory_space<vmem>>, vector<16x16xf32>
    tpu.vector_store %arg11[%c2_81, %c2_82], %228 {strides = array<i32>} : memref<20x20xf32, #tpu.memory_space<vmem>>, vector<16x16xf32>,
    %c0_83 = arith.constant 0 : index
    %c0_84 = arith.constant 0 : index
    %481 = vector.load %arg11[%c0_83, %c0_84] : memref<20x20xf32, #tpu.memory_space<vmem>>, vector<20x20xf32>
    %482 = vector.extract_strided_slice %481 {offsets = [0, 0], sizes = [16, 16], strides = [1, 1]} : vector<20x20xf32> to vector<16x16xf32>
    %c27_85 = arith.constant 27 : index
    %483 = memref.load %arg4[%c27_85] : memref<72xf32, #tpu.memory_space<smem>>
    %484 = vector.broadcast %483 : f32 to vector<16x16xf32>
    %485 = arith.mulf %482, %484 : vector<16x16xf32>
    %486 = arith.addf %475, %485 : vector<16x16xf32>
    %c63 = arith.constant 63 : index
    %487 = memref.load %arg4[%c63] : memref<72xf32, #tpu.memory_space<smem>>
    %488 = vector.broadcast %487 : f32 to vector<16x16xf32>
    %489 = arith.mulf %482, %488 : vector<16x16xf32>
    %490 = arith.addf %479, %489 : vector<16x16xf32>
    %491 = vector.extract_strided_slice %481 {offsets = [0, 2], sizes = [16, 16], strides = [1, 1]} : vector<20x20xf32> to vector<16x16xf32>
    %c28_86 = arith.constant 28 : index
    %492 = memref.load %arg4[%c28_86] : memref<72xf32, #tpu.memory_space<smem>>
    %493 = vector.broadcast %492 : f32 to vector<16x16xf32>
    %494 = arith.mulf %491, %493 : vector<16x16xf32>
    %495 = arith.addf %486, %494 : vector<16x16xf32>
    %c64 = arith.constant 64 : index
    %496 = memref.load %arg4[%c64] : memref<72xf32, #tpu.memory_space<smem>>
    %497 = vector.broadcast %496 : f32 to vector<16x16xf32>
    %498 = arith.mulf %491, %497 : vector<16x16xf32>
    %499 = arith.addf %490, %498 : vector<16x16xf32>
    %500 = vector.extract_strided_slice %481 {offsets = [0, 4], sizes = [16, 16], strides = [1, 1]} : vector<20x20xf32> to vector<16x16xf32>
    %c29_87 = arith.constant 29 : index
    %501 = memref.load %arg4[%c29_87] : memref<72xf32, #tpu.memory_space<smem>>
    %502 = vector.broadcast %501 : f32 to vector<16x16xf32>
    %503 = arith.mulf %500, %502 : vector<16x16xf32>
    %504 = arith.addf %495, %503 : vector<16x16xf32>
    %c65 = arith.constant 65 : index
    %505 = memref.load %arg4[%c65] : memref<72xf32, #tpu.memory_space<smem>>
    %506 = vector.broadcast %505 : f32 to vector<16x16xf32>
    %507 = arith.mulf %500, %506 : vector<16x16xf32>
    %508 = arith.addf %499, %507 : vector<16x16xf32>
    %509 = vector.extract_strided_slice %481 {offsets = [2, 0], sizes = [16, 16], strides = [1, 1]} : vector<20x20xf32> to vector<16x16xf32>
    %c30_88 = arith.constant 30 : index
    %510 = memref.load %arg4[%c30_88] : memref<72xf32, #tpu.memory_space<smem>>
    %511 = vector.broadcast %510 : f32 to vector<16x16xf32>
    %512 = arith.mulf %509, %511 : vector<16x16xf32>
    %513 = arith.addf %504, %512 : vector<16x16xf32>
    %c66 = arith.constant 66 : index
    %514 = memref.load %arg4[%c66] : memref<72xf32, #tpu.memory_space<smem>>
    %515 = vector.broadcast %514 : f32 to vector<16x16xf32>
    %516 = arith.mulf %509, %515 : vector<16x16xf32>
    %517 = arith.addf %508, %516 : vector<16x16xf32>
    %518 = vector.extract_strided_slice %481 {offsets = [2, 2], sizes = [16, 16], strides = [1, 1]} : vector<20x20xf32> to vector<16x16xf32>
    %c31_89 = arith.constant 31 : index
    %519 = memref.load %arg4[%c31_89] : memref<72xf32, #tpu.memory_space<smem>>
    %520 = vector.broadcast %519 : f32 to vector<16x16xf32>
    %521 = arith.mulf %518, %520 : vector<16x16xf32>
    %522 = arith.addf %513, %521 : vector<16x16xf32>
    %c67 = arith.constant 67 : index
    %523 = memref.load %arg4[%c67] : memref<72xf32, #tpu.memory_space<smem>>
    %524 = vector.broadcast %523 : f32 to vector<16x16xf32>
    %525 = arith.mulf %518, %524 : vector<16x16xf32>
    %526 = arith.addf %517, %525 : vector<16x16xf32>
    %527 = vector.extract_strided_slice %481 {offsets = [2, 4], sizes = [16, 16], strides = [1, 1]} : vector<20x20xf32> to vector<16x16xf32>
    %c32_90 = arith.constant 32 : index
    %528 = memref.load %arg4[%c32_90] : memref<72xf32, #tpu.memory_space<smem>>
    %529 = vector.broadcast %528 : f32 to vector<16x16xf32>
    %530 = arith.mulf %527, %529 : vector<16x16xf32>
    %531 = arith.addf %522, %530 : vector<16x16xf32>
    %c68 = arith.constant 68 : index
    %532 = memref.load %arg4[%c68] : memref<72xf32, #tpu.memory_space<smem>>
    %533 = vector.broadcast %532 : f32 to vector<16x16xf32>
    %534 = arith.mulf %527, %533 : vector<16x16xf32>
    %535 = arith.addf %526, %534 : vector<16x16xf32>
    %536 = vector.extract_strided_slice %481 {offsets = [4, 0], sizes = [16, 16], strides = [1, 1]} : vector<20x20xf32> to vector<16x16xf32>
    %c33_91 = arith.constant 33 : index
    %537 = memref.load %arg4[%c33_91] : memref<72xf32, #tpu.memory_space<smem>>
    %538 = vector.broadcast %537 : f32 to vector<16x16xf32>
    %539 = arith.mulf %536, %538 : vector<16x16xf32>
    %540 = arith.addf %531, %539 : vector<16x16xf32>
    %c69 = arith.constant 69 : index
    %541 = memref.load %arg4[%c69] : memref<72xf32, #tpu.memory_space<smem>>
    %542 = vector.broadcast %541 : f32 to vector<16x16xf32>
    %543 = arith.mulf %536, %542 : vector<16x16xf32>
    %544 = arith.addf %535, %543 : vector<16x16xf32>
    %545 = vector.extract_strided_slice %481 {offsets = [4, 2], sizes = [16, 16], strides = [1, 1]} : vector<20x20xf32> to vector<16x16xf32>
    %c34_92 = arith.constant 34 : index
    %546 = memref.load %arg4[%c34_92] : memref<72xf32, #tpu.memory_space<smem>>
    %547 = vector.broadcast %546 : f32 to vector<16x16xf32>
    %548 = arith.mulf %545, %547 : vector<16x16xf32>
    %549 = arith.addf %540, %548 : vector<16x16xf32>
    %c70 = arith.constant 70 : index
    %550 = memref.load %arg4[%c70] : memref<72xf32, #tpu.memory_space<smem>>
    %551 = vector.broadcast %550 : f32 to vector<16x16xf32>
    %552 = arith.mulf %545, %551 : vector<16x16xf32>
    %553 = arith.addf %544, %552 : vector<16x16xf32>
    %554 = vector.extract_strided_slice %481 {offsets = [4, 4], sizes = [16, 16], strides = [1, 1]} : vector<20x20xf32> to vector<16x16xf32>
    %c35_93 = arith.constant 35 : index
    %555 = memref.load %arg4[%c35_93] : memref<72xf32, #tpu.memory_space<smem>>
    %556 = vector.broadcast %555 : f32 to vector<16x16xf32>
    %557 = arith.mulf %554, %556 : vector<16x16xf32>
    %558 = arith.addf %549, %557 : vector<16x16xf32>
    %c71 = arith.constant 71 : index
    %559 = memref.load %arg4[%c71] : memref<72xf32, #tpu.memory_space<smem>>
    %560 = vector.broadcast %559 : f32 to vector<16x16xf32>
    %561 = arith.mulf %554, %560 : vector<16x16xf32>
    %562 = arith.addf %553, %561 : vector<16x16xf32>
    %c0_94 = arith.constant 0 : index
    %563 = memref.load %arg5[%c0_94] : memref<2xf32, #tpu.memory_space<smem>>
    %564 = vector.broadcast %563 : f32 to vector<16x16xf32>
    %565 = arith.addf %558, %564 : vector<16x16xf32>
    %cst_95 = arith.constant 0.000000e+00 : f32
    %566 = vector.broadcast %cst_95 : f32 to vector<16x16xf32>
    %567 = arith.maximumf %565, %566 : vector<16x16xf32>
    %c1_96 = arith.constant 1 : index
    %568 = memref.load %arg5[%c1_96] : memref<2xf32, #tpu.memory_space<smem>>
    %569 = vector.broadcast %568 : f32 to vector<16x16xf32>
    %570 = arith.addf %562, %569 : vector<16x16xf32>
    %cst_97 = arith.constant 0.000000e+00 : f32
    %571 = vector.broadcast %cst_97 : f32 to vector<16x16xf32>
    %572 = arith.maximumf %570, %571 : vector<16x16xf32>
    %c2_98 = arith.constant 2 : index
    %c2_99 = arith.constant 2 : index
    %573 = vector.load %arg11[%c2_98, %c2_99] : memref<20x20xf32, #tpu.memory_space<vmem>>, vector<16x16xf32>
    tpu.vector_store %arg11[%c2_98, %c2_99], %567 {strides = array<i32>} : memref<20x20xf32, #tpu.memory_space<vmem>>, vector<16x16xf32>,
    %c0_100 = arith.constant 0 : index
    %c0_101 = arith.constant 0 : index
    %574 = vector.load %arg11[%c0_100, %c0_101] : memref<20x20xf32, #tpu.memory_space<vmem>>, vector<20x20xf32>
    %575 = vector.extract_strided_slice %574 {offsets = [2, 2], sizes = [16, 16], strides = [1, 1]} : vector<20x20xf32> to vector<16x16xf32>
    %576 = vector.extract_strided_slice %574 {offsets = [2, 4], sizes = [16, 16], strides = [1, 1]} : vector<20x20xf32> to vector<16x16xf32>
    %577 = arith.maximumf %575, %576 : vector<16x16xf32>
    %578 = vector.extract_strided_slice %574 {offsets = [4, 2], sizes = [16, 16], strides = [1, 1]} : vector<20x20xf32> to vector<16x16xf32>
    %579 = arith.maximumf %577, %578 : vector<16x16xf32>
    %580 = vector.extract_strided_slice %574 {offsets = [4, 4], sizes = [16, 16], strides = [1, 1]} : vector<20x20xf32> to vector<16x16xf32>
    %581 = arith.maximumf %579, %580 : vector<16x16xf32>
    %c2_102 = arith.constant 2 : index
    %c2_103 = arith.constant 2 : index
    %582 = vector.load %arg11[%c2_102, %c2_103] : memref<20x20xf32, #tpu.memory_space<vmem>>, vector<16x16xf32>
    tpu.vector_store %arg11[%c2_102, %c2_103], %572 {strides = array<i32>} : memref<20x20xf32, #tpu.memory_space<vmem>>, vector<16x16xf32>,
    %c0_104 = arith.constant 0 : index
    %c0_105 = arith.constant 0 : index
    %583 = vector.load %arg11[%c0_104, %c0_105] : memref<20x20xf32, #tpu.memory_space<vmem>>, vector<20x20xf32>
    %584 = vector.extract_strided_slice %583 {offsets = [2, 2], sizes = [16, 16], strides = [1, 1]} : vector<20x20xf32> to vector<16x16xf32>
    %585 = vector.extract_strided_slice %583 {offsets = [2, 4], sizes = [16, 16], strides = [1, 1]} : vector<20x20xf32> to vector<16x16xf32>
    %586 = arith.maximumf %584, %585 : vector<16x16xf32>
    %587 = vector.extract_strided_slice %583 {offsets = [4, 2], sizes = [16, 16], strides = [1, 1]} : vector<20x20xf32> to vector<16x16xf32>
    %588 = arith.maximumf %586, %587 : vector<16x16xf32>
    %589 = vector.extract_strided_slice %583 {offsets = [4, 4], sizes = [16, 16], strides = [1, 1]} : vector<20x20xf32> to vector<16x16xf32>
    %590 = arith.maximumf %588, %589 : vector<16x16xf32>
    %cst_106 = arith.constant 0.000000e+00 : f32
    %591 = vector.broadcast %cst_106 : f32 to vector<16x16xf32>
    %cst_107 = arith.constant 0.000000e+00 : f32
    %592 = vector.broadcast %cst_107 : f32 to vector<16x16xf32>
    %cst_108 = arith.constant 0.000000e+00 : f32
    %593 = vector.broadcast %cst_108 : f32 to vector<16x16xf32>
    %cst_109 = arith.constant 0.000000e+00 : f32
    %594 = vector.broadcast %cst_109 : f32 to vector<16x16xf32>
    %c2_110 = arith.constant 2 : index
    %c2_111 = arith.constant 2 : index
    %595 = vector.load %arg11[%c2_110, %c2_111] : memref<20x20xf32, #tpu.memory_space<vmem>>, vector<16x16xf32>
    tpu.vector_store %arg11[%c2_110, %c2_111], %581 {strides = array<i32>} : memref<20x20xf32, #tpu.memory_space<vmem>>, vector<16x16xf32>,
    %c0_112 = arith.constant 0 : index
    %c0_113 = arith.constant 0 : index
    %596 = vector.load %arg11[%c0_112, %c0_113] : memref<20x20xf32, #tpu.memory_space<vmem>>, vector<20x20xf32>
    %c0_i32 = arith.constant 0 : i32
    %597 = vector.broadcast %c0_i32 : i32 to vector<16x16xi32>
    %598 = arith.cmpi eq, %9, %597 : vector<16x16xi32>
    %c0_i32_114 = arith.constant 0 : i32
    %599 = vector.broadcast %c0_i32_114 : i32 to vector<16x16xi32>
    %600 = arith.cmpi eq, %11, %599 : vector<16x16xi32>
    %601 = arith.andi %598, %600 : vector<16x16xi1>
    %602 = vector.extract_strided_slice %596 {offsets = [2, 2], sizes = [16, 16], strides = [1, 1]} : vector<20x20xf32> to vector<16x16xf32>
    %cst_115 = arith.constant 0.000000e+00 : f32
    %603 = vector.broadcast %cst_115 : f32 to vector<16x16xf32>
    %604 = arith.select %601, %602, %603 : vector<16x16xi1>, vector<16x16xf32>
    %c0_116 = arith.constant 0 : index
    %605 = memref.load %arg6[%c0_116] : memref<32xf32, #tpu.memory_space<smem>>
    %606 = vector.broadcast %605 : f32 to vector<16x16xf32>
    %607 = arith.mulf %604, %606 : vector<16x16xf32>
    %608 = arith.addf %591, %607 : vector<16x16xf32>
    %c4_117 = arith.constant 4 : index
    %609 = memref.load %arg6[%c4_117] : memref<32xf32, #tpu.memory_space<smem>>
    %610 = vector.broadcast %609 : f32 to vector<16x16xf32>
    %611 = arith.mulf %604, %610 : vector<16x16xf32>
    %612 = arith.addf %592, %611 : vector<16x16xf32>
    %c8_118 = arith.constant 8 : index
    %613 = memref.load %arg6[%c8_118] : memref<32xf32, #tpu.memory_space<smem>>
    %614 = vector.broadcast %613 : f32 to vector<16x16xf32>
    %615 = arith.mulf %604, %614 : vector<16x16xf32>
    %616 = arith.addf %593, %615 : vector<16x16xf32>
    %c12_119 = arith.constant 12 : index
    %617 = memref.load %arg6[%c12_119] : memref<32xf32, #tpu.memory_space<smem>>
    %618 = vector.broadcast %617 : f32 to vector<16x16xf32>
    %619 = arith.mulf %604, %618 : vector<16x16xf32>
    %620 = arith.addf %594, %619 : vector<16x16xf32>
    %c0_i32_120 = arith.constant 0 : i32
    %621 = vector.broadcast %c0_i32_120 : i32 to vector<16x16xi32>
    %622 = arith.cmpi eq, %9, %621 : vector<16x16xi32>
    %c2_i32 = arith.constant 2 : i32
    %623 = vector.broadcast %c2_i32 : i32 to vector<16x16xi32>
    %624 = arith.cmpi eq, %11, %623 : vector<16x16xi32>
    %625 = arith.andi %622, %624 : vector<16x16xi1>
    %626 = vector.extract_strided_slice %596 {offsets = [2, 0], sizes = [16, 16], strides = [1, 1]} : vector<20x20xf32> to vector<16x16xf32>
    %cst_121 = arith.constant 0.000000e+00 : f32
    %627 = vector.broadcast %cst_121 : f32 to vector<16x16xf32>
    %628 = arith.select %625, %626, %627 : vector<16x16xi1>, vector<16x16xf32>
    %c1_122 = arith.constant 1 : index
    %629 = memref.load %arg6[%c1_122] : memref<32xf32, #tpu.memory_space<smem>>
    %630 = vector.broadcast %629 : f32 to vector<16x16xf32>
    %631 = arith.mulf %628, %630 : vector<16x16xf32>
    %632 = arith.addf %608, %631 : vector<16x16xf32>
    %c5_123 = arith.constant 5 : index
    %633 = memref.load %arg6[%c5_123] : memref<32xf32, #tpu.memory_space<smem>>
    %634 = vector.broadcast %633 : f32 to vector<16x16xf32>
    %635 = arith.mulf %628, %634 : vector<16x16xf32>
    %636 = arith.addf %612, %635 : vector<16x16xf32>
    %c9_124 = arith.constant 9 : index
    %637 = memref.load %arg6[%c9_124] : memref<32xf32, #tpu.memory_space<smem>>
    %638 = vector.broadcast %637 : f32 to vector<16x16xf32>
    %639 = arith.mulf %628, %638 : vector<16x16xf32>
    %640 = arith.addf %616, %639 : vector<16x16xf32>
    %c13_125 = arith.constant 13 : index
    %641 = memref.load %arg6[%c13_125] : memref<32xf32, #tpu.memory_space<smem>>
    %642 = vector.broadcast %641 : f32 to vector<16x16xf32>
    %643 = arith.mulf %628, %642 : vector<16x16xf32>
    %644 = arith.addf %620, %643 : vector<16x16xf32>
    %c2_i32_126 = arith.constant 2 : i32
    %645 = vector.broadcast %c2_i32_126 : i32 to vector<16x16xi32>
    %646 = arith.cmpi eq, %9, %645 : vector<16x16xi32>
    %c0_i32_127 = arith.constant 0 : i32
    %647 = vector.broadcast %c0_i32_127 : i32 to vector<16x16xi32>
    %648 = arith.cmpi eq, %11, %647 : vector<16x16xi32>
    %649 = arith.andi %646, %648 : vector<16x16xi1>
    %650 = vector.extract_strided_slice %596 {offsets = [0, 2], sizes = [16, 16], strides = [1, 1]} : vector<20x20xf32> to vector<16x16xf32>
    %cst_128 = arith.constant 0.000000e+00 : f32
    %651 = vector.broadcast %cst_128 : f32 to vector<16x16xf32>
    %652 = arith.select %649, %650, %651 : vector<16x16xi1>, vector<16x16xf32>
    %c2_129 = arith.constant 2 : index
    %653 = memref.load %arg6[%c2_129] : memref<32xf32, #tpu.memory_space<smem>>
    %654 = vector.broadcast %653 : f32 to vector<16x16xf32>
    %655 = arith.mulf %652, %654 : vector<16x16xf32>
    %656 = arith.addf %632, %655 : vector<16x16xf32>
    %c6_130 = arith.constant 6 : index
    %657 = memref.load %arg6[%c6_130] : memref<32xf32, #tpu.memory_space<smem>>
    %658 = vector.broadcast %657 : f32 to vector<16x16xf32>
    %659 = arith.mulf %652, %658 : vector<16x16xf32>
    %660 = arith.addf %636, %659 : vector<16x16xf32>
    %c10_131 = arith.constant 10 : index
    %661 = memref.load %arg6[%c10_131] : memref<32xf32, #tpu.memory_space<smem>>
    %662 = vector.broadcast %661 : f32 to vector<16x16xf32>
    %663 = arith.mulf %652, %662 : vector<16x16xf32>
    %664 = arith.addf %640, %663 : vector<16x16xf32>
    %c14_132 = arith.constant 14 : index
    %665 = memref.load %arg6[%c14_132] : memref<32xf32, #tpu.memory_space<smem>>
    %666 = vector.broadcast %665 : f32 to vector<16x16xf32>
    %667 = arith.mulf %652, %666 : vector<16x16xf32>
    %668 = arith.addf %644, %667 : vector<16x16xf32>
    %c2_i32_133 = arith.constant 2 : i32
    %669 = vector.broadcast %c2_i32_133 : i32 to vector<16x16xi32>
    %670 = arith.cmpi eq, %9, %669 : vector<16x16xi32>
    %c2_i32_134 = arith.constant 2 : i32
    %671 = vector.broadcast %c2_i32_134 : i32 to vector<16x16xi32>
    %672 = arith.cmpi eq, %11, %671 : vector<16x16xi32>
    %673 = arith.andi %670, %672 : vector<16x16xi1>
    %674 = vector.extract_strided_slice %596 {offsets = [0, 0], sizes = [16, 16], strides = [1, 1]} : vector<20x20xf32> to vector<16x16xf32>
    %cst_135 = arith.constant 0.000000e+00 : f32
    %675 = vector.broadcast %cst_135 : f32 to vector<16x16xf32>
    %676 = arith.select %673, %674, %675 : vector<16x16xi1>, vector<16x16xf32>
    %c3_136 = arith.constant 3 : index
    %677 = memref.load %arg6[%c3_136] : memref<32xf32, #tpu.memory_space<smem>>
    %678 = vector.broadcast %677 : f32 to vector<16x16xf32>
    %679 = arith.mulf %676, %678 : vector<16x16xf32>
    %680 = arith.addf %656, %679 : vector<16x16xf32>
    %c7_137 = arith.constant 7 : index
    %681 = memref.load %arg6[%c7_137] : memref<32xf32, #tpu.memory_space<smem>>
    %682 = vector.broadcast %681 : f32 to vector<16x16xf32>
    %683 = arith.mulf %676, %682 : vector<16x16xf32>
    %684 = arith.addf %660, %683 : vector<16x16xf32>
    %c11_138 = arith.constant 11 : index
    %685 = memref.load %arg6[%c11_138] : memref<32xf32, #tpu.memory_space<smem>>
    %686 = vector.broadcast %685 : f32 to vector<16x16xf32>
    %687 = arith.mulf %676, %686 : vector<16x16xf32>
    %688 = arith.addf %664, %687 : vector<16x16xf32>
    %c15_139 = arith.constant 15 : index
    %689 = memref.load %arg6[%c15_139] : memref<32xf32, #tpu.memory_space<smem>>
    %690 = vector.broadcast %689 : f32 to vector<16x16xf32>
    %691 = arith.mulf %676, %690 : vector<16x16xf32>
    %692 = arith.addf %668, %691 : vector<16x16xf32>
    %c2_140 = arith.constant 2 : index
    %c2_141 = arith.constant 2 : index
    %693 = vector.load %arg11[%c2_140, %c2_141] : memref<20x20xf32, #tpu.memory_space<vmem>>, vector<16x16xf32>
    tpu.vector_store %arg11[%c2_140, %c2_141], %590 {strides = array<i32>} : memref<20x20xf32, #tpu.memory_space<vmem>>, vector<16x16xf32>,
    %c0_142 = arith.constant 0 : index
    %c0_143 = arith.constant 0 : index
    %694 = vector.load %arg11[%c0_142, %c0_143] : memref<20x20xf32, #tpu.memory_space<vmem>>, vector<20x20xf32>
    %c0_i32_144 = arith.constant 0 : i32
    %695 = vector.broadcast %c0_i32_144 : i32 to vector<16x16xi32>
    %696 = arith.cmpi eq, %9, %695 : vector<16x16xi32>
    %c0_i32_145 = arith.constant 0 : i32
    %697 = vector.broadcast %c0_i32_145 : i32 to vector<16x16xi32>
    %698 = arith.cmpi eq, %11, %697 : vector<16x16xi32>
    %699 = arith.andi %696, %698 : vector<16x16xi1>
    %700 = vector.extract_strided_slice %694 {offsets = [2, 2], sizes = [16, 16], strides = [1, 1]} : vector<20x20xf32> to vector<16x16xf32>
    %cst_146 = arith.constant 0.000000e+00 : f32
    %701 = vector.broadcast %cst_146 : f32 to vector<16x16xf32>
    %702 = arith.select %699, %700, %701 : vector<16x16xi1>, vector<16x16xf32>
    %c16_147 = arith.constant 16 : index
    %703 = memref.load %arg6[%c16_147] : memref<32xf32, #tpu.memory_space<smem>>
    %704 = vector.broadcast %703 : f32 to vector<16x16xf32>
    %705 = arith.mulf %702, %704 : vector<16x16xf32>
    %706 = arith.addf %680, %705 : vector<16x16xf32>
    %c20_148 = arith.constant 20 : index
    %707 = memref.load %arg6[%c20_148] : memref<32xf32, #tpu.memory_space<smem>>
    %708 = vector.broadcast %707 : f32 to vector<16x16xf32>
    %709 = arith.mulf %702, %708 : vector<16x16xf32>
    %710 = arith.addf %684, %709 : vector<16x16xf32>
    %c24_149 = arith.constant 24 : index
    %711 = memref.load %arg6[%c24_149] : memref<32xf32, #tpu.memory_space<smem>>
    %712 = vector.broadcast %711 : f32 to vector<16x16xf32>
    %713 = arith.mulf %702, %712 : vector<16x16xf32>
    %714 = arith.addf %688, %713 : vector<16x16xf32>
    %c28_150 = arith.constant 28 : index
    %715 = memref.load %arg6[%c28_150] : memref<32xf32, #tpu.memory_space<smem>>
    %716 = vector.broadcast %715 : f32 to vector<16x16xf32>
    %717 = arith.mulf %702, %716 : vector<16x16xf32>
    %718 = arith.addf %692, %717 : vector<16x16xf32>
    %c0_i32_151 = arith.constant 0 : i32
    %719 = vector.broadcast %c0_i32_151 : i32 to vector<16x16xi32>
    %720 = arith.cmpi eq, %9, %719 : vector<16x16xi32>
    %c2_i32_152 = arith.constant 2 : i32
    %721 = vector.broadcast %c2_i32_152 : i32 to vector<16x16xi32>
    %722 = arith.cmpi eq, %11, %721 : vector<16x16xi32>
    %723 = arith.andi %720, %722 : vector<16x16xi1>
    %724 = vector.extract_strided_slice %694 {offsets = [2, 0], sizes = [16, 16], strides = [1, 1]} : vector<20x20xf32> to vector<16x16xf32>
    %cst_153 = arith.constant 0.000000e+00 : f32
    %725 = vector.broadcast %cst_153 : f32 to vector<16x16xf32>
    %726 = arith.select %723, %724, %725 : vector<16x16xi1>, vector<16x16xf32>
    %c17_154 = arith.constant 17 : index
    %727 = memref.load %arg6[%c17_154] : memref<32xf32, #tpu.memory_space<smem>>
    %728 = vector.broadcast %727 : f32 to vector<16x16xf32>
    %729 = arith.mulf %726, %728 : vector<16x16xf32>
    %730 = arith.addf %706, %729 : vector<16x16xf32>
    %c21_155 = arith.constant 21 : index
    %731 = memref.load %arg6[%c21_155] : memref<32xf32, #tpu.memory_space<smem>>
    %732 = vector.broadcast %731 : f32 to vector<16x16xf32>
    %733 = arith.mulf %726, %732 : vector<16x16xf32>
    %734 = arith.addf %710, %733 : vector<16x16xf32>
    %c25_156 = arith.constant 25 : index
    %735 = memref.load %arg6[%c25_156] : memref<32xf32, #tpu.memory_space<smem>>
    %736 = vector.broadcast %735 : f32 to vector<16x16xf32>
    %737 = arith.mulf %726, %736 : vector<16x16xf32>
    %738 = arith.addf %714, %737 : vector<16x16xf32>
    %c29_157 = arith.constant 29 : index
    %739 = memref.load %arg6[%c29_157] : memref<32xf32, #tpu.memory_space<smem>>
    %740 = vector.broadcast %739 : f32 to vector<16x16xf32>
    %741 = arith.mulf %726, %740 : vector<16x16xf32>
    %742 = arith.addf %718, %741 : vector<16x16xf32>
    %c2_i32_158 = arith.constant 2 : i32
    %743 = vector.broadcast %c2_i32_158 : i32 to vector<16x16xi32>
    %744 = arith.cmpi eq, %9, %743 : vector<16x16xi32>
    %c0_i32_159 = arith.constant 0 : i32
    %745 = vector.broadcast %c0_i32_159 : i32 to vector<16x16xi32>
    %746 = arith.cmpi eq, %11, %745 : vector<16x16xi32>
    %747 = arith.andi %744, %746 : vector<16x16xi1>
    %748 = vector.extract_strided_slice %694 {offsets = [0, 2], sizes = [16, 16], strides = [1, 1]} : vector<20x20xf32> to vector<16x16xf32>
    %cst_160 = arith.constant 0.000000e+00 : f32
    %749 = vector.broadcast %cst_160 : f32 to vector<16x16xf32>
    %750 = arith.select %747, %748, %749 : vector<16x16xi1>, vector<16x16xf32>
    %c18_161 = arith.constant 18 : index
    %751 = memref.load %arg6[%c18_161] : memref<32xf32, #tpu.memory_space<smem>>
    %752 = vector.broadcast %751 : f32 to vector<16x16xf32>
    %753 = arith.mulf %750, %752 : vector<16x16xf32>
    %754 = arith.addf %730, %753 : vector<16x16xf32>
    %c22_162 = arith.constant 22 : index
    %755 = memref.load %arg6[%c22_162] : memref<32xf32, #tpu.memory_space<smem>>
    %756 = vector.broadcast %755 : f32 to vector<16x16xf32>
    %757 = arith.mulf %750, %756 : vector<16x16xf32>
    %758 = arith.addf %734, %757 : vector<16x16xf32>
    %c26_163 = arith.constant 26 : index
    %759 = memref.load %arg6[%c26_163] : memref<32xf32, #tpu.memory_space<smem>>
    %760 = vector.broadcast %759 : f32 to vector<16x16xf32>
    %761 = arith.mulf %750, %760 : vector<16x16xf32>
    %762 = arith.addf %738, %761 : vector<16x16xf32>
    %c30_164 = arith.constant 30 : index
    %763 = memref.load %arg6[%c30_164] : memref<32xf32, #tpu.memory_space<smem>>
    %764 = vector.broadcast %763 : f32 to vector<16x16xf32>
    %765 = arith.mulf %750, %764 : vector<16x16xf32>
    %766 = arith.addf %742, %765 : vector<16x16xf32>
    %c2_i32_165 = arith.constant 2 : i32
    %767 = vector.broadcast %c2_i32_165 : i32 to vector<16x16xi32>
    %768 = arith.cmpi eq, %9, %767 : vector<16x16xi32>
    %c2_i32_166 = arith.constant 2 : i32
    %769 = vector.broadcast %c2_i32_166 : i32 to vector<16x16xi32>
    %770 = arith.cmpi eq, %11, %769 : vector<16x16xi32>
    %771 = arith.andi %768, %770 : vector<16x16xi1>
    %772 = vector.extract_strided_slice %694 {offsets = [0, 0], sizes = [16, 16], strides = [1, 1]} : vector<20x20xf32> to vector<16x16xf32>
    %cst_167 = arith.constant 0.000000e+00 : f32
    %773 = vector.broadcast %cst_167 : f32 to vector<16x16xf32>
    %774 = arith.select %771, %772, %773 : vector<16x16xi1>, vector<16x16xf32>
    %c19_168 = arith.constant 19 : index
    %775 = memref.load %arg6[%c19_168] : memref<32xf32, #tpu.memory_space<smem>>
    %776 = vector.broadcast %775 : f32 to vector<16x16xf32>
    %777 = arith.mulf %774, %776 : vector<16x16xf32>
    %778 = arith.addf %754, %777 : vector<16x16xf32>
    %c23_169 = arith.constant 23 : index
    %779 = memref.load %arg6[%c23_169] : memref<32xf32, #tpu.memory_space<smem>>
    %780 = vector.broadcast %779 : f32 to vector<16x16xf32>
    %781 = arith.mulf %774, %780 : vector<16x16xf32>
    %782 = arith.addf %758, %781 : vector<16x16xf32>
    %c27_170 = arith.constant 27 : index
    %783 = memref.load %arg6[%c27_170] : memref<32xf32, #tpu.memory_space<smem>>
    %784 = vector.broadcast %783 : f32 to vector<16x16xf32>
    %785 = arith.mulf %774, %784 : vector<16x16xf32>
    %786 = arith.addf %762, %785 : vector<16x16xf32>
    %c31_171 = arith.constant 31 : index
    %787 = memref.load %arg6[%c31_171] : memref<32xf32, #tpu.memory_space<smem>>
    %788 = vector.broadcast %787 : f32 to vector<16x16xf32>
    %789 = arith.mulf %774, %788 : vector<16x16xf32>
    %790 = arith.addf %766, %789 : vector<16x16xf32>
    %c0_172 = arith.constant 0 : index
    %791 = memref.load %arg7[%c0_172] : memref<4xf32, #tpu.memory_space<smem>>
    %792 = vector.broadcast %791 : f32 to vector<16x16xf32>
    %793 = arith.addf %778, %792 : vector<16x16xf32>
    %cst_173 = arith.constant 0.000000e+00 : f32
    %794 = vector.broadcast %cst_173 : f32 to vector<16x16xf32>
    %795 = arith.maximumf %793, %794 : vector<16x16xf32>
    %c1_174 = arith.constant 1 : index
    %796 = memref.load %arg7[%c1_174] : memref<4xf32, #tpu.memory_space<smem>>
    %797 = vector.broadcast %796 : f32 to vector<16x16xf32>
    %798 = arith.addf %782, %797 : vector<16x16xf32>
    %cst_175 = arith.constant 0.000000e+00 : f32
    %799 = vector.broadcast %cst_175 : f32 to vector<16x16xf32>
    %800 = arith.maximumf %798, %799 : vector<16x16xf32>
    %c2_176 = arith.constant 2 : index
    %801 = memref.load %arg7[%c2_176] : memref<4xf32, #tpu.memory_space<smem>>
    %802 = vector.broadcast %801 : f32 to vector<16x16xf32>
    %803 = arith.addf %786, %802 : vector<16x16xf32>
    %cst_177 = arith.constant 0.000000e+00 : f32
    %804 = vector.broadcast %cst_177 : f32 to vector<16x16xf32>
    %805 = arith.maximumf %803, %804 : vector<16x16xf32>
    %c3_178 = arith.constant 3 : index
    %806 = memref.load %arg7[%c3_178] : memref<4xf32, #tpu.memory_space<smem>>
    %807 = vector.broadcast %806 : f32 to vector<16x16xf32>
    %808 = arith.addf %790, %807 : vector<16x16xf32>
    %cst_179 = arith.constant 0.000000e+00 : f32
    %809 = vector.broadcast %cst_179 : f32 to vector<16x16xf32>
    %810 = arith.maximumf %808, %809 : vector<16x16xf32>
    %cst_180 = arith.constant 0.000000e+00 : f32
    %811 = vector.broadcast %cst_180 : f32 to vector<16x16xf32>
    %c2_181 = arith.constant 2 : index
    %c2_182 = arith.constant 2 : index
    %812 = vector.load %arg11[%c2_181, %c2_182] : memref<20x20xf32, #tpu.memory_space<vmem>>, vector<16x16xf32>
    tpu.vector_store %arg11[%c2_181, %c2_182], %795 {strides = array<i32>} : memref<20x20xf32, #tpu.memory_space<vmem>>, vector<16x16xf32>,
    %c0_183 = arith.constant 0 : index
    %c0_184 = arith.constant 0 : index
    %813 = vector.load %arg11[%c0_183, %c0_184] : memref<20x20xf32, #tpu.memory_space<vmem>>, vector<20x20xf32>
    %c0_i32_185 = arith.constant 0 : i32
    %814 = vector.broadcast %c0_i32_185 : i32 to vector<16x16xi32>
    %815 = arith.cmpi eq, %5, %814 : vector<16x16xi32>
    %c0_i32_186 = arith.constant 0 : i32
    %816 = vector.broadcast %c0_i32_186 : i32 to vector<16x16xi32>
    %817 = arith.cmpi eq, %7, %816 : vector<16x16xi32>
    %818 = arith.andi %815, %817 : vector<16x16xi1>
    %819 = vector.extract_strided_slice %813 {offsets = [2, 2], sizes = [16, 16], strides = [1, 1]} : vector<20x20xf32> to vector<16x16xf32>
    %cst_187 = arith.constant 0.000000e+00 : f32
    %820 = vector.broadcast %cst_187 : f32 to vector<16x16xf32>
    %821 = arith.select %818, %819, %820 : vector<16x16xi1>, vector<16x16xf32>
    %c0_188 = arith.constant 0 : index
    %822 = memref.load %arg8[%c0_188] : memref<16xf32, #tpu.memory_space<smem>>
    %823 = vector.broadcast %822 : f32 to vector<16x16xf32>
    %824 = arith.mulf %821, %823 : vector<16x16xf32>
    %825 = arith.addf %811, %824 : vector<16x16xf32>
    %c0_i32_189 = arith.constant 0 : i32
    %826 = vector.broadcast %c0_i32_189 : i32 to vector<16x16xi32>
    %827 = arith.cmpi eq, %5, %826 : vector<16x16xi32>
    %c1_i32_190 = arith.constant 1 : i32
    %828 = vector.broadcast %c1_i32_190 : i32 to vector<16x16xi32>
    %829 = arith.cmpi eq, %7, %828 : vector<16x16xi32>
    %830 = arith.andi %827, %829 : vector<16x16xi1>
    %831 = vector.extract_strided_slice %813 {offsets = [2, 1], sizes = [16, 16], strides = [1, 1]} : vector<20x20xf32> to vector<16x16xf32>
    %cst_191 = arith.constant 0.000000e+00 : f32
    %832 = vector.broadcast %cst_191 : f32 to vector<16x16xf32>
    %833 = arith.select %830, %831, %832 : vector<16x16xi1>, vector<16x16xf32>
    %c1_192 = arith.constant 1 : index
    %834 = memref.load %arg8[%c1_192] : memref<16xf32, #tpu.memory_space<smem>>
    %835 = vector.broadcast %834 : f32 to vector<16x16xf32>
    %836 = arith.mulf %833, %835 : vector<16x16xf32>
    %837 = arith.addf %825, %836 : vector<16x16xf32>
    %c1_i32_193 = arith.constant 1 : i32
    %838 = vector.broadcast %c1_i32_193 : i32 to vector<16x16xi32>
    %839 = arith.cmpi eq, %5, %838 : vector<16x16xi32>
    %c0_i32_194 = arith.constant 0 : i32
    %840 = vector.broadcast %c0_i32_194 : i32 to vector<16x16xi32>
    %841 = arith.cmpi eq, %7, %840 : vector<16x16xi32>
    %842 = arith.andi %839, %841 : vector<16x16xi1>
    %843 = vector.extract_strided_slice %813 {offsets = [1, 2], sizes = [16, 16], strides = [1, 1]} : vector<20x20xf32> to vector<16x16xf32>
    %cst_195 = arith.constant 0.000000e+00 : f32
    %844 = vector.broadcast %cst_195 : f32 to vector<16x16xf32>
    %845 = arith.select %842, %843, %844 : vector<16x16xi1>, vector<16x16xf32>
    %c2_196 = arith.constant 2 : index
    %846 = memref.load %arg8[%c2_196] : memref<16xf32, #tpu.memory_space<smem>>
    %847 = vector.broadcast %846 : f32 to vector<16x16xf32>
    %848 = arith.mulf %845, %847 : vector<16x16xf32>
    %849 = arith.addf %837, %848 : vector<16x16xf32>
    %c1_i32_197 = arith.constant 1 : i32
    %850 = vector.broadcast %c1_i32_197 : i32 to vector<16x16xi32>
    %851 = arith.cmpi eq, %5, %850 : vector<16x16xi32>
    %c1_i32_198 = arith.constant 1 : i32
    %852 = vector.broadcast %c1_i32_198 : i32 to vector<16x16xi32>
    %853 = arith.cmpi eq, %7, %852 : vector<16x16xi32>
    %854 = arith.andi %851, %853 : vector<16x16xi1>
    %855 = vector.extract_strided_slice %813 {offsets = [1, 1], sizes = [16, 16], strides = [1, 1]} : vector<20x20xf32> to vector<16x16xf32>
    %cst_199 = arith.constant 0.000000e+00 : f32
    %856 = vector.broadcast %cst_199 : f32 to vector<16x16xf32>
    %857 = arith.select %854, %855, %856 : vector<16x16xi1>, vector<16x16xf32>
    %c3_200 = arith.constant 3 : index
    %858 = memref.load %arg8[%c3_200] : memref<16xf32, #tpu.memory_space<smem>>
    %859 = vector.broadcast %858 : f32 to vector<16x16xf32>
    %860 = arith.mulf %857, %859 : vector<16x16xf32>
    %861 = arith.addf %849, %860 : vector<16x16xf32>
    %c2_201 = arith.constant 2 : index
    %c2_202 = arith.constant 2 : index
    %862 = vector.load %arg11[%c2_201, %c2_202] : memref<20x20xf32, #tpu.memory_space<vmem>>, vector<16x16xf32>
    tpu.vector_store %arg11[%c2_201, %c2_202], %800 {strides = array<i32>} : memref<20x20xf32, #tpu.memory_space<vmem>>, vector<16x16xf32>,
    %c0_203 = arith.constant 0 : index
    %c0_204 = arith.constant 0 : index
    %863 = vector.load %arg11[%c0_203, %c0_204] : memref<20x20xf32, #tpu.memory_space<vmem>>, vector<20x20xf32>
    %c0_i32_205 = arith.constant 0 : i32
    %864 = vector.broadcast %c0_i32_205 : i32 to vector<16x16xi32>
    %865 = arith.cmpi eq, %5, %864 : vector<16x16xi32>
    %c0_i32_206 = arith.constant 0 : i32
    %866 = vector.broadcast %c0_i32_206 : i32 to vector<16x16xi32>
    %867 = arith.cmpi eq, %7, %866 : vector<16x16xi32>
    %868 = arith.andi %865, %867 : vector<16x16xi1>
    %869 = vector.extract_strided_slice %863 {offsets = [2, 2], sizes = [16, 16], strides = [1, 1]} : vector<20x20xf32> to vector<16x16xf32>
    %cst_207 = arith.constant 0.000000e+00 : f32
    %870 = vector.broadcast %cst_207 : f32 to vector<16x16xf32>
    %871 = arith.select %868, %869, %870 : vector<16x16xi1>, vector<16x16xf32>
    %c4_208 = arith.constant 4 : index
    %872 = memref.load %arg8[%c4_208] : memref<16xf32, #tpu.memory_space<smem>>
    %873 = vector.broadcast %872 : f32 to vector<16x16xf32>
    %874 = arith.mulf %871, %873 : vector<16x16xf32>
    %875 = arith.addf %861, %874 : vector<16x16xf32>
    %c0_i32_209 = arith.constant 0 : i32
    %876 = vector.broadcast %c0_i32_209 : i32 to vector<16x16xi32>
    %877 = arith.cmpi eq, %5, %876 : vector<16x16xi32>
    %c1_i32_210 = arith.constant 1 : i32
    %878 = vector.broadcast %c1_i32_210 : i32 to vector<16x16xi32>
    %879 = arith.cmpi eq, %7, %878 : vector<16x16xi32>
    %880 = arith.andi %877, %879 : vector<16x16xi1>
    %881 = vector.extract_strided_slice %863 {offsets = [2, 1], sizes = [16, 16], strides = [1, 1]} : vector<20x20xf32> to vector<16x16xf32>
    %cst_211 = arith.constant 0.000000e+00 : f32
    %882 = vector.broadcast %cst_211 : f32 to vector<16x16xf32>
    %883 = arith.select %880, %881, %882 : vector<16x16xi1>, vector<16x16xf32>
    %c5_212 = arith.constant 5 : index
    %884 = memref.load %arg8[%c5_212] : memref<16xf32, #tpu.memory_space<smem>>
    %885 = vector.broadcast %884 : f32 to vector<16x16xf32>
    %886 = arith.mulf %883, %885 : vector<16x16xf32>
    %887 = arith.addf %875, %886 : vector<16x16xf32>
    %c1_i32_213 = arith.constant 1 : i32
    %888 = vector.broadcast %c1_i32_213 : i32 to vector<16x16xi32>
    %889 = arith.cmpi eq, %5, %888 : vector<16x16xi32>
    %c0_i32_214 = arith.constant 0 : i32
    %890 = vector.broadcast %c0_i32_214 : i32 to vector<16x16xi32>
    %891 = arith.cmpi eq, %7, %890 : vector<16x16xi32>
    %892 = arith.andi %889, %891 : vector<16x16xi1>
    %893 = vector.extract_strided_slice %863 {offsets = [1, 2], sizes = [16, 16], strides = [1, 1]} : vector<20x20xf32> to vector<16x16xf32>
    %cst_215 = arith.constant 0.000000e+00 : f32
    %894 = vector.broadcast %cst_215 : f32 to vector<16x16xf32>
    %895 = arith.select %892, %893, %894 : vector<16x16xi1>, vector<16x16xf32>
    %c6_216 = arith.constant 6 : index
    %896 = memref.load %arg8[%c6_216] : memref<16xf32, #tpu.memory_space<smem>>
    %897 = vector.broadcast %896 : f32 to vector<16x16xf32>
    %898 = arith.mulf %895, %897 : vector<16x16xf32>
    %899 = arith.addf %887, %898 : vector<16x16xf32>
    %c1_i32_217 = arith.constant 1 : i32
    %900 = vector.broadcast %c1_i32_217 : i32 to vector<16x16xi32>
    %901 = arith.cmpi eq, %5, %900 : vector<16x16xi32>
    %c1_i32_218 = arith.constant 1 : i32
    %902 = vector.broadcast %c1_i32_218 : i32 to vector<16x16xi32>
    %903 = arith.cmpi eq, %7, %902 : vector<16x16xi32>
    %904 = arith.andi %901, %903 : vector<16x16xi1>
    %905 = vector.extract_strided_slice %863 {offsets = [1, 1], sizes = [16, 16], strides = [1, 1]} : vector<20x20xf32> to vector<16x16xf32>
    %cst_219 = arith.constant 0.000000e+00 : f32
    %906 = vector.broadcast %cst_219 : f32 to vector<16x16xf32>
    %907 = arith.select %904, %905, %906 : vector<16x16xi1>, vector<16x16xf32>
    %c7_220 = arith.constant 7 : index
    %908 = memref.load %arg8[%c7_220] : memref<16xf32, #tpu.memory_space<smem>>
    %909 = vector.broadcast %908 : f32 to vector<16x16xf32>
    %910 = arith.mulf %907, %909 : vector<16x16xf32>
    %911 = arith.addf %899, %910 : vector<16x16xf32>
    %c2_221 = arith.constant 2 : index
    %c2_222 = arith.constant 2 : index
    %912 = vector.load %arg11[%c2_221, %c2_222] : memref<20x20xf32, #tpu.memory_space<vmem>>, vector<16x16xf32>
    tpu.vector_store %arg11[%c2_221, %c2_222], %805 {strides = array<i32>} : memref<20x20xf32, #tpu.memory_space<vmem>>, vector<16x16xf32>,
    %c0_223 = arith.constant 0 : index
    %c0_224 = arith.constant 0 : index
    %913 = vector.load %arg11[%c0_223, %c0_224] : memref<20x20xf32, #tpu.memory_space<vmem>>, vector<20x20xf32>
    %c0_i32_225 = arith.constant 0 : i32
    %914 = vector.broadcast %c0_i32_225 : i32 to vector<16x16xi32>
    %915 = arith.cmpi eq, %5, %914 : vector<16x16xi32>
    %c0_i32_226 = arith.constant 0 : i32
    %916 = vector.broadcast %c0_i32_226 : i32 to vector<16x16xi32>
    %917 = arith.cmpi eq, %7, %916 : vector<16x16xi32>
    %918 = arith.andi %915, %917 : vector<16x16xi1>
    %919 = vector.extract_strided_slice %913 {offsets = [2, 2], sizes = [16, 16], strides = [1, 1]} : vector<20x20xf32> to vector<16x16xf32>
    %cst_227 = arith.constant 0.000000e+00 : f32
    %920 = vector.broadcast %cst_227 : f32 to vector<16x16xf32>
    %921 = arith.select %918, %919, %920 : vector<16x16xi1>, vector<16x16xf32>
    %c8_228 = arith.constant 8 : index
    %922 = memref.load %arg8[%c8_228] : memref<16xf32, #tpu.memory_space<smem>>
    %923 = vector.broadcast %922 : f32 to vector<16x16xf32>
    %924 = arith.mulf %921, %923 : vector<16x16xf32>
    %925 = arith.addf %911, %924 : vector<16x16xf32>
    %c0_i32_229 = arith.constant 0 : i32
    %926 = vector.broadcast %c0_i32_229 : i32 to vector<16x16xi32>
    %927 = arith.cmpi eq, %5, %926 : vector<16x16xi32>
    %c1_i32_230 = arith.constant 1 : i32
    %928 = vector.broadcast %c1_i32_230 : i32 to vector<16x16xi32>
    %929 = arith.cmpi eq, %7, %928 : vector<16x16xi32>
    %930 = arith.andi %927, %929 : vector<16x16xi1>
    %931 = vector.extract_strided_slice %913 {offsets = [2, 1], sizes = [16, 16], strides = [1, 1]} : vector<20x20xf32> to vector<16x16xf32>
    %cst_231 = arith.constant 0.000000e+00 : f32
    %932 = vector.broadcast %cst_231 : f32 to vector<16x16xf32>
    %933 = arith.select %930, %931, %932 : vector<16x16xi1>, vector<16x16xf32>
    %c9_232 = arith.constant 9 : index
    %934 = memref.load %arg8[%c9_232] : memref<16xf32, #tpu.memory_space<smem>>
    %935 = vector.broadcast %934 : f32 to vector<16x16xf32>
    %936 = arith.mulf %933, %935 : vector<16x16xf32>
    %937 = arith.addf %925, %936 : vector<16x16xf32>
    %c1_i32_233 = arith.constant 1 : i32
    %938 = vector.broadcast %c1_i32_233 : i32 to vector<16x16xi32>
    %939 = arith.cmpi eq, %5, %938 : vector<16x16xi32>
    %c0_i32_234 = arith.constant 0 : i32
    %940 = vector.broadcast %c0_i32_234 : i32 to vector<16x16xi32>
    %941 = arith.cmpi eq, %7, %940 : vector<16x16xi32>
    %942 = arith.andi %939, %941 : vector<16x16xi1>
    %943 = vector.extract_strided_slice %913 {offsets = [1, 2], sizes = [16, 16], strides = [1, 1]} : vector<20x20xf32> to vector<16x16xf32>
    %cst_235 = arith.constant 0.000000e+00 : f32
    %944 = vector.broadcast %cst_235 : f32 to vector<16x16xf32>
    %945 = arith.select %942, %943, %944 : vector<16x16xi1>, vector<16x16xf32>
    %c10_236 = arith.constant 10 : index
    %946 = memref.load %arg8[%c10_236] : memref<16xf32, #tpu.memory_space<smem>>
    %947 = vector.broadcast %946 : f32 to vector<16x16xf32>
    %948 = arith.mulf %945, %947 : vector<16x16xf32>
    %949 = arith.addf %937, %948 : vector<16x16xf32>
    %c1_i32_237 = arith.constant 1 : i32
    %950 = vector.broadcast %c1_i32_237 : i32 to vector<16x16xi32>
    %951 = arith.cmpi eq, %5, %950 : vector<16x16xi32>
    %c1_i32_238 = arith.constant 1 : i32
    %952 = vector.broadcast %c1_i32_238 : i32 to vector<16x16xi32>
    %953 = arith.cmpi eq, %7, %952 : vector<16x16xi32>
    %954 = arith.andi %951, %953 : vector<16x16xi1>
    %955 = vector.extract_strided_slice %913 {offsets = [1, 1], sizes = [16, 16], strides = [1, 1]} : vector<20x20xf32> to vector<16x16xf32>
    %cst_239 = arith.constant 0.000000e+00 : f32
    %956 = vector.broadcast %cst_239 : f32 to vector<16x16xf32>
    %957 = arith.select %954, %955, %956 : vector<16x16xi1>, vector<16x16xf32>
    %c11_240 = arith.constant 11 : index
    %958 = memref.load %arg8[%c11_240] : memref<16xf32, #tpu.memory_space<smem>>
    %959 = vector.broadcast %958 : f32 to vector<16x16xf32>
    %960 = arith.mulf %957, %959 : vector<16x16xf32>
    %961 = arith.addf %949, %960 : vector<16x16xf32>
    %c2_241 = arith.constant 2 : index
    %c2_242 = arith.constant 2 : index
    %962 = vector.load %arg11[%c2_241, %c2_242] : memref<20x20xf32, #tpu.memory_space<vmem>>, vector<16x16xf32>
    tpu.vector_store %arg11[%c2_241, %c2_242], %810 {strides = array<i32>} : memref<20x20xf32, #tpu.memory_space<vmem>>, vector<16x16xf32>,
    %c0_243 = arith.constant 0 : index
    %c0_244 = arith.constant 0 : index
    %963 = vector.load %arg11[%c0_243, %c0_244] : memref<20x20xf32, #tpu.memory_space<vmem>>, vector<20x20xf32>
    %c0_i32_245 = arith.constant 0 : i32
    %964 = vector.broadcast %c0_i32_245 : i32 to vector<16x16xi32>
    %965 = arith.cmpi eq, %5, %964 : vector<16x16xi32>
    %c0_i32_246 = arith.constant 0 : i32
    %966 = vector.broadcast %c0_i32_246 : i32 to vector<16x16xi32>
    %967 = arith.cmpi eq, %7, %966 : vector<16x16xi32>
    %968 = arith.andi %965, %967 : vector<16x16xi1>
    %969 = vector.extract_strided_slice %963 {offsets = [2, 2], sizes = [16, 16], strides = [1, 1]} : vector<20x20xf32> to vector<16x16xf32>
    %cst_247 = arith.constant 0.000000e+00 : f32
    %970 = vector.broadcast %cst_247 : f32 to vector<16x16xf32>
    %971 = arith.select %968, %969, %970 : vector<16x16xi1>, vector<16x16xf32>
    %c12_248 = arith.constant 12 : index
    %972 = memref.load %arg8[%c12_248] : memref<16xf32, #tpu.memory_space<smem>>
    %973 = vector.broadcast %972 : f32 to vector<16x16xf32>
    %974 = arith.mulf %971, %973 : vector<16x16xf32>
    %975 = arith.addf %961, %974 : vector<16x16xf32>
    %c0_i32_249 = arith.constant 0 : i32
    %976 = vector.broadcast %c0_i32_249 : i32 to vector<16x16xi32>
    %977 = arith.cmpi eq, %5, %976 : vector<16x16xi32>
    %c1_i32_250 = arith.constant 1 : i32
    %978 = vector.broadcast %c1_i32_250 : i32 to vector<16x16xi32>
    %979 = arith.cmpi eq, %7, %978 : vector<16x16xi32>
    %980 = arith.andi %977, %979 : vector<16x16xi1>
    %981 = vector.extract_strided_slice %963 {offsets = [2, 1], sizes = [16, 16], strides = [1, 1]} : vector<20x20xf32> to vector<16x16xf32>
    %cst_251 = arith.constant 0.000000e+00 : f32
    %982 = vector.broadcast %cst_251 : f32 to vector<16x16xf32>
    %983 = arith.select %980, %981, %982 : vector<16x16xi1>, vector<16x16xf32>
    %c13_252 = arith.constant 13 : index
    %984 = memref.load %arg8[%c13_252] : memref<16xf32, #tpu.memory_space<smem>>
    %985 = vector.broadcast %984 : f32 to vector<16x16xf32>
    %986 = arith.mulf %983, %985 : vector<16x16xf32>
    %987 = arith.addf %975, %986 : vector<16x16xf32>
    %c1_i32_253 = arith.constant 1 : i32
    %988 = vector.broadcast %c1_i32_253 : i32 to vector<16x16xi32>
    %989 = arith.cmpi eq, %5, %988 : vector<16x16xi32>
    %c0_i32_254 = arith.constant 0 : i32
    %990 = vector.broadcast %c0_i32_254 : i32 to vector<16x16xi32>
    %991 = arith.cmpi eq, %7, %990 : vector<16x16xi32>
    %992 = arith.andi %989, %991 : vector<16x16xi1>
    %993 = vector.extract_strided_slice %963 {offsets = [1, 2], sizes = [16, 16], strides = [1, 1]} : vector<20x20xf32> to vector<16x16xf32>
    %cst_255 = arith.constant 0.000000e+00 : f32
    %994 = vector.broadcast %cst_255 : f32 to vector<16x16xf32>
    %995 = arith.select %992, %993, %994 : vector<16x16xi1>, vector<16x16xf32>
    %c14_256 = arith.constant 14 : index
    %996 = memref.load %arg8[%c14_256] : memref<16xf32, #tpu.memory_space<smem>>
    %997 = vector.broadcast %996 : f32 to vector<16x16xf32>
    %998 = arith.mulf %995, %997 : vector<16x16xf32>
    %999 = arith.addf %987, %998 : vector<16x16xf32>
    %c1_i32_257 = arith.constant 1 : i32
    %1000 = vector.broadcast %c1_i32_257 : i32 to vector<16x16xi32>
    %1001 = arith.cmpi eq, %5, %1000 : vector<16x16xi32>
    %c1_i32_258 = arith.constant 1 : i32
    %1002 = vector.broadcast %c1_i32_258 : i32 to vector<16x16xi32>
    %1003 = arith.cmpi eq, %7, %1002 : vector<16x16xi32>
    %1004 = arith.andi %1001, %1003 : vector<16x16xi1>
    %1005 = vector.extract_strided_slice %963 {offsets = [1, 1], sizes = [16, 16], strides = [1, 1]} : vector<20x20xf32> to vector<16x16xf32>
    %cst_259 = arith.constant 0.000000e+00 : f32
    %1006 = vector.broadcast %cst_259 : f32 to vector<16x16xf32>
    %1007 = arith.select %1004, %1005, %1006 : vector<16x16xi1>, vector<16x16xf32>
    %c15_260 = arith.constant 15 : index
    %1008 = memref.load %arg8[%c15_260] : memref<16xf32, #tpu.memory_space<smem>>
    %1009 = vector.broadcast %1008 : f32 to vector<16x16xf32>
    %1010 = arith.mulf %1007, %1009 : vector<16x16xf32>
    %1011 = arith.addf %999, %1010 : vector<16x16xf32>
    %c0_261 = arith.constant 0 : index
    %1012 = memref.load %arg9[%c0_261] : memref<1xf32, #tpu.memory_space<smem>>
    %1013 = vector.broadcast %1012 : f32 to vector<16x16xf32>
    %1014 = arith.addf %1011, %1013 : vector<16x16xf32>
    %1015 = arith.negf %1014 : vector<16x16xf32>
    %1016 = math.exp %1015 : vector<16x16xf32>
    %cst_262 = arith.constant 1.000000e+00 : f32
    %1017 = vector.broadcast %cst_262 : f32 to vector<16x16xf32>
    %1018 = arith.addf %1017, %1016 : vector<16x16xf32>
    %1019 = arith.divf %1017, %1018 : vector<16x16xf32>
    %c0_263 = arith.constant 0 : index
    %c0_264 = arith.constant 0 : index
    %c0_265 = arith.constant 0 : index
    %c0_266 = arith.constant 0 : index
    %1020 = vector.load %arg10[%c0_263, %c0_264, %c0_265, %c0_266] : memref<1x1x16x16xf32, #tpu.memory_space<vmem>>, vector<1x1x16x16xf32>
    %1021 = vector.shape_cast %1020 : vector<1x1x16x16xf32> to vector<16x16xf32>
    %1022 = vector.shape_cast %1019 : vector<16x16xf32> to vector<1x1x16x16xf32>
    tpu.vector_store %arg10[%c0_263, %c0_264, %c0_265, %c0_266], %1022 {strides = array<i32>} : memref<1x1x16x16xf32, #tpu.memory_space<vmem>>, vector<1x1x16x16xf32>,
    return
  }
  func.func @transform_0(%arg0: i32) -> (i32, i32, i32, i32) {
    %c0_i32 = arith.constant 0 : i32
    %c0_i32_0 = arith.constant 0 : i32
    %c0_i32_1 = arith.constant 0 : i32
    %c0_i32_2 = arith.constant 0 : i32
    return %arg0, %c0_i32, %c0_i32_0, %c0_i32_1 : i32, i32, i32, i32
  }
  func.func @transform_1(%arg0: i32) -> i32 {
    %c0_i32 = arith.constant 0 : i32
    %c0_i32_0 = arith.constant 0 : i32
    return %c0_i32 : i32
  }
  func.func @transform_2(%arg0: i32) -> i32 {
    %c0_i32 = arith.constant 0 : i32
    %c0_i32_0 = arith.constant 0 : i32
    return %c0_i32 : i32
  }
  func.func @transform_3(%arg0: i32) -> i32 {
    %c0_i32 = arith.constant 0 : i32
    %c0_i32_0 = arith.constant 0 : i32
    return %c0_i32 : i32
  }
  func.func @transform_4(%arg0: i32) -> i32 {
    %c0_i32 = arith.constant 0 : i32
    %c0_i32_0 = arith.constant 0 : i32
    return %c0_i32 : i32
  }
  func.func @transform_5(%arg0: i32) -> i32 {
    %c0_i32 = arith.constant 0 : i32
    %c0_i32_0 = arith.constant 0 : i32
    return %c0_i32 : i32
  }
  func.func @transform_6(%arg0: i32) -> i32 {
    %c0_i32 = arith.constant 0 : i32
    %c0_i32_0 = arith.constant 0 : i32
    return %c0_i32 : i32
  }
  func.func @transform_7(%arg0: i32) -> i32 {
    %c0_i32 = arith.constant 0 : i32
    %c0_i32_0 = arith.constant 0 : i32
    return %c0_i32 : i32
  }
  func.func @transform_8(%arg0: i32) -> i32 {
    %c0_i32 = arith.constant 0 : i32
    %c0_i32_0 = arith.constant 0 : i32
    return %c0_i32 : i32
  }
  func.func @transform_9(%arg0: i32) -> (i32, i32, i32, i32) {
    %c0_i32 = arith.constant 0 : i32
    %c0_i32_0 = arith.constant 0 : i32
    %c0_i32_1 = arith.constant 0 : i32
    %c0_i32_2 = arith.constant 0 : i32
    return %arg0, %c0_i32, %c0_i32_0, %c0_i32_1 : i32, i32, i32, i32
  }
}

</mosaic_0001>

<llo_original>
// kernel: tpu_custom_call.1
$region0: #{tpu_custom_call.1}
  #allocation0 [shape = 'u32[]', space=smem, size = 0x4, offset = 0x4, fixed_abs, tag = 'smem constant byte address 0x4 - core index']
  #allocation1 [shape = 'u32[144,128]{1,0:T(1,128)}', space=vmem, size = 0x12000, scoped, tag = 'internal scratch']
  #allocation2 [shape = 'f32[20,20]{1,0:T(8,128)}', space=vmem, size = 0x3000, scoped, tag = 'scratch operand']
  #allocation3 [shape = 'f32[1]{0:T(128)S(6)}', space=smem, size = 0x200, scoped, tag = 'scoped memory for tpu_custom_call.1']
  %s0 = inlined_call_operand.hbm [shape: f32[2,1,16,16], index: 0, kind: input, shape index: {}]
  %s1 = inlined_call_operand.vmem [shape: f32[36], index: 1, kind: input, shape index: {}]
  %s2 = inlined_call_operand.vmem [shape: f32[4], index: 2, kind: input, shape index: {}]
  %s3 = inlined_call_operand.vmem [shape: f32[72], index: 3, kind: input, shape index: {}]
  %s4 = inlined_call_operand.vmem [shape: f32[2], index: 4, kind: input, shape index: {}]
  %s5 = inlined_call_operand.vmem [shape: f32[32], index: 5, kind: input, shape index: {}]
  %s6 = inlined_call_operand.vmem [shape: f32[4], index: 6, kind: input, shape index: {}]
  %s7 = inlined_call_operand.vmem [shape: f32[16], index: 7, kind: input, shape index: {}]
  %s8 = inlined_call_operand.<no memory space> [shape: f32[1], index: 8, kind: input, shape index: {}]
  %s9 = inlined_call_operand.hbm [shape: f32[2,1,16,16], index: 9, kind: output, shape index: {}]
  %s10 = sld [smem:[#allocation0]]
  $region101: #{tpu_custom_call.1} parent=0
    _
  %s12 = ssub.s32 1, %s10
  %s13 = scalar_select 0, %s12, %s10
  %14 = sst [smem:[#allocation3]] %s8
  $region1: #{tpu_custom_call.1} parent=0
    #allocation4 [shape = 'u8[16384]{0}', space=vmem, size = 0x4000, scoped, tag = 'input window, operand 0']
    #allocation5 [shape = 's32[2]{0}', space=sflag, size = 0x8, scoped, tag = 'scoped memory for tpu_custom_call.1']
    #allocation6 [shape = 's32[2]{0}', space=sflag, size = 0x8, scoped, tag = 'scoped memory for tpu_custom_call.1']
    #allocation7 [shape = 's32[2]{0}', space=sflag, size = 0x8, scoped, tag = 'scoped memory for tpu_custom_call.1']
    #allocation8 [shape = 'u8[512]{0}', space=smem, size = 0x200, scoped, tag = 'input window, operand 1, single buffered']
    #allocation9 [shape = 'u8[512]{0}', space=smem, size = 0x200, scoped, tag = 'input window, operand 2, single buffered']
    #allocation10 [shape = 's32[1]{0}', space=sflag, size = 0x4, scoped, tag = 'scoped memory for tpu_custom_call.1']
    #allocation11 [shape = 'u8[512]{0}', space=smem, size = 0x200, scoped, tag = 'input window, operand 3, single buffered']
    #allocation12 [shape = 'u8[512]{0}', space=smem, size = 0x200, scoped, tag = 'input window, operand 4, single buffered']
    #allocation13 [shape = 's32[1]{0}', space=sflag, size = 0x4, scoped, tag = 'scoped memory for tpu_custom_call.1']
    #allocation14 [shape = 'u8[512]{0}', space=smem, size = 0x200, scoped, tag = 'input window, operand 5, single buffered']
    #allocation15 [shape = 'u8[512]{0}', space=smem, size = 0x200, scoped, tag = 'input window, operand 6, single buffered']
    #allocation16 [shape = 's32[1]{0}', space=sflag, size = 0x4, scoped, tag = 'scoped memory for tpu_custom_call.1']
    #allocation17 [shape = 'u8[512]{0}', space=smem, size = 0x200, scoped, tag = 'input window, operand 7, single buffered']
    #allocation18 [shape = 'u8[16384]{0}', space=vmem, size = 0x4000, scoped, tag = 'output window, operand 0']
    %15 = vsyncpa [#allocation5], 0
    %s16 = scalar_lea.sflag [#allocation5], 1
    %17 = vsyncpa %s16, 0
    %18 = vsyncpa [#allocation7], 0
    %19 = vsyncpa [#allocation10], 0
    %20 = vsyncpa [#allocation13], 0
    %21 = vsyncpa [#allocation16], 0
    %22 = vsyncpa [#allocation6], 0
    %s23 = scalar_lea.sflag [#allocation6], 1
    %24 = vsyncpa %s23, 0
    loop: start=0, step=1, limit=4
    $region2: #{tpu_custom_call.1} parent=1 // loop_pre_header
      _
    $region3: #{tpu_custom_call.1} parent=1 // loop_header
      %s26 = sphi 0, %s30
      %p27 = scmp.ge.s32.totalorder %s26, 4
      %s36 = sphi 0, %s38
      %s39 = sphi 0, %s36
      %s40 = sphi 0, %s39
      %s56 = sphi 0, %s40
      %s60 = sphi 0, %s60
      %s62 = sphi 0, %s60
      %s63 = sphi 0, %s62
      %s77 = sphi 0, %s63
      %s81 = sphi 0, %s81
      %s83 = sphi 0, %s81
      %s84 = sphi 0, %s83
      %s98 = sphi 0, %s84
      %s102 = sphi 0, %s102
      %s104 = sphi 0, %s102
      %s105 = sphi 0, %s104
      %s119 = sphi 0, %s105
      %s123 = sphi 0, %s123
      %s125 = sphi 0, %s123
      %s126 = sphi 0, %s125
      %s140 = sphi 0, %s126
      %s144 = sphi 0, %s144
      %s146 = sphi 0, %s144
      %s147 = sphi 0, %s146
      %s161 = sphi 0, %s147
      %s165 = sphi 0, %s165
      %s167 = sphi 0, %s165
      %s168 = sphi 0, %s167
      %s182 = sphi 0, %s168
      %s186 = sphi 0, %s186
      %s188 = sphi 0, %s186
      %s189 = sphi 0, %s188
      %s203 = sphi 0, %s189
      %s207 = sphi 0, %s207
      %s209 = sphi 0, %s207
      %s210 = sphi 0, %s209
      %s224 = sphi 0, %s210
      %s230 = sphi 0, %s232
      %s233 = sphi 0, %s230
      %s234 = sphi 0, %s233
      %s250 = sphi 0, %s234
    $region4: #{tpu_custom_call.1} parent=1 // loop_header_branch
      %29 = sbr.rel (%p27) target = $region8
    $region5: #{tpu_custom_call.1} parent=1 // loop_body
      %s31 = ssub.s32 %s26, 1
      %s32 = ssub.s32 %s26, 2
      %s33 = sadd.s32 %s26, 1
      %s34 = ssub.s32 %s26, %s33
      %p35 = scmp.eq.s32.totalorder %s34, 0
      %s37 = sadd.s32 %s36, 1
      %s38 = scalar_select %p35, %s36, %s37
      %p41 = pneg %p35
      %p42 = scmp.eq.s32.totalorder %s26, 1
      %p43 = por %p41, %p42
      %p44 = scmp.ne.s32.totalorder %s36, %s39
      %p45 = scmp.eq.s32.totalorder %s26, 0
      %p46 = por %p44, %p45
      %p47 = scmp.ne.s32.totalorder %s36, %s39
      %p48 = scmp.eq.s32.totalorder %s31, 1
      %p49 = por %p47, %p48
      %p50 = scmp.ne.s32.totalorder %s39, %s40
      %p51 = scmp.eq.s32.totalorder %s31, 0
      %p52 = por %p50, %p51
      %p53 = scmp.ne.s32.totalorder %s39, %s40
      %p54 = scmp.eq.s32.totalorder %s32, 1
      %p55 = por %p53, %p54
      %p57 = scmp.ne.s32.totalorder %s40, %s56
      %p58 = scmp.eq.s32.totalorder %s32, 0
      %p59 = por %p57, %p58
      %s61 = sadd.s32 %s60, 1
      %p64 = scmp.eq.s32.totalorder %s26, 1
      %p65 = scmp.ne.s32.totalorder %s60, %s62
      %p66 = scmp.eq.s32.totalorder %s26, 0
      %p67 = por %p65, %p66
      %p68 = scmp.ne.s32.totalorder %s60, %s62
      %p69 = scmp.eq.s32.totalorder %s31, 1
      %p70 = por %p68, %p69
      %p71 = scmp.ne.s32.totalorder %s62, %s63
      %p72 = scmp.eq.s32.totalorder %s31, 0
      %p73 = por %p71, %p72
      %p74 = scmp.ne.s32.totalorder %s62, %s63
      %p75 = scmp.eq.s32.totalorder %s32, 1
      %p76 = por %p74, %p75
      %p78 = scmp.ne.s32.totalorder %s63, %s77
      %p79 = scmp.eq.s32.totalorder %s32, 0
      %p80 = por %p78, %p79
      %s82 = sadd.s32 %s81, 1
      %p85 = scmp.eq.s32.totalorder %s26, 1
      %p86 = scmp.ne.s32.totalorder %s81, %s83
      %p87 = scmp.eq.s32.totalorder %s26, 0
      %p88 = por %p86, %p87
      %p89 = scmp.ne.s32.totalorder %s81, %s83
      %p90 = scmp.eq.s32.totalorder %s31, 1
      %p91 = por %p89, %p90
      %p92 = scmp.ne.s32.totalorder %s83, %s84
      %p93 = scmp.eq.s32.totalorder %s31, 0
      %p94 = por %p92, %p93
      %p95 = scmp.ne.s32.totalorder %s83, %s84
      %p96 = scmp.eq.s32.totalorder %s32, 1
      %p97 = por %p95, %p96
      %p99 = scmp.ne.s32.totalorder %s84, %s98
      %p100 = scmp.eq.s32.totalorder %s32, 0
      %p101 = por %p99, %p100
      %s103 = sadd.s32 %s102, 1
      %p106 = scmp.eq.s32.totalorder %s26, 1
      %p107 = scmp.ne.s32.totalorder %s102, %s104
      %p108 = scmp.eq.s32.totalorder %s26, 0
      %p109 = por %p107, %p108
      %p110 = scmp.ne.s32.totalorder %s102, %s104
      %p111 = scmp.eq.s32.totalorder %s31, 1
      %p112 = por %p110, %p111
      %p113 = scmp.ne.s32.totalorder %s104, %s105
      %p114 = scmp.eq.s32.totalorder %s31, 0
      %p115 = por %p113, %p114
      %p116 = scmp.ne.s32.totalorder %s104, %s105
      %p117 = scmp.eq.s32.totalorder %s32, 1
      %p118 = por %p116, %p117
      %p120 = scmp.ne.s32.totalorder %s105, %s119
      %p121 = scmp.eq.s32.totalorder %s32, 0
      %p122 = por %p120, %p121
      %s124 = sadd.s32 %s123, 1
      %p127 = scmp.eq.s32.totalorder %s26, 1
      %p128 = scmp.ne.s32.totalorder %s123, %s125
      %p129 = scmp.eq.s32.totalorder %s26, 0
      %p130 = por %p128, %p129
      %p131 = scmp.ne.s32.totalorder %s123, %s125
      %p132 = scmp.eq.s32.totalorder %s31, 1
      %p133 = por %p131, %p132
      %p134 = scmp.ne.s32.totalorder %s125, %s126
      %p135 = scmp.eq.s32.totalorder %s31, 0
      %p136 = por %p134, %p135
      %p137 = scmp.ne.s32.totalorder %s125, %s126
      %p138 = scmp.eq.s32.totalorder %s32, 1
      %p139 = por %p137, %p138
      %p141 = scmp.ne.s32.totalorder %s126, %s140
      %p142 = scmp.eq.s32.totalorder %s32, 0
      %p143 = por %p141, %p142
      %s145 = sadd.s32 %s144, 1
      %p148 = scmp.eq.s32.totalorder %s26, 1
      %p149 = scmp.ne.s32.totalorder %s144, %s146
      %p150 = scmp.eq.s32.totalorder %s26, 0
      %p151 = por %p149, %p150
      %p152 = scmp.ne.s32.totalorder %s144, %s146
      %p153 = scmp.eq.s32.totalorder %s31, 1
      %p154 = por %p152, %p153
      %p155 = scmp.ne.s32.totalorder %s146, %s147
      %p156 = scmp.eq.s32.totalorder %s31, 0
      %p157 = por %p155, %p156
      %p158 = scmp.ne.s32.totalorder %s146, %s147
      %p159 = scmp.eq.s32.totalorder %s32, 1
      %p160 = por %p158, %p159
      %p162 = scmp.ne.s32.totalorder %s147, %s161
      %p163 = scmp.eq.s32.totalorder %s32, 0
      %p164 = por %p162, %p163
      %s166 = sadd.s32 %s165, 1
      %p169 = scmp.eq.s32.totalorder %s26, 1
      %p170 = scmp.ne.s32.totalorder %s165, %s167
      %p171 = scmp.eq.s32.totalorder %s26, 0
      %p172 = por %p170, %p171
      %p173 = scmp.ne.s32.totalorder %s165, %s167
      %p174 = scmp.eq.s32.totalorder %s31, 1
      %p175 = por %p173, %p174
      %p176 = scmp.ne.s32.totalorder %s167, %s168
      %p177 = scmp.eq.s32.totalorder %s31, 0
      %p178 = por %p176, %p177
      %p179 = scmp.ne.s32.totalorder %s167, %s168
      %p180 = scmp.eq.s32.totalorder %s32, 1
      %p181 = por %p179, %p180
      %p183 = scmp.ne.s32.totalorder %s168, %s182
      %p184 = scmp.eq.s32.totalorder %s32, 0
      %p185 = por %p183, %p184
      %s187 = sadd.s32 %s186, 1
      %p190 = scmp.eq.s32.totalorder %s26, 1
      %p191 = scmp.ne.s32.totalorder %s186, %s188
      %p192 = scmp.eq.s32.totalorder %s26, 0
      %p193 = por %p191, %p192
      %p194 = scmp.ne.s32.totalorder %s186, %s188
      %p195 = scmp.eq.s32.totalorder %s31, 1
      %p196 = por %p194, %p195
      %p197 = scmp.ne.s32.totalorder %s188, %s189
      %p198 = scmp.eq.s32.totalorder %s31, 0
      %p199 = por %p197, %p198
      %p200 = scmp.ne.s32.totalorder %s188, %s189
      %p201 = scmp.eq.s32.totalorder %s32, 1
      %p202 = por %p200, %p201
      %p204 = scmp.ne.s32.totalorder %s189, %s203
      %p205 = scmp.eq.s32.totalorder %s32, 0
      %p206 = por %p204, %p205
      %s208 = sadd.s32 %s207, 1
      %p211 = scmp.eq.s32.totalorder %s26, 1
      %p212 = scmp.ne.s32.totalorder %s207, %s209
      %p213 = scmp.eq.s32.totalorder %s26, 0
      %p214 = por %p212, %p213
      %p215 = scmp.ne.s32.totalorder %s207, %s209
      %p216 = scmp.eq.s32.totalorder %s31, 1
      %p217 = por %p215, %p216
      %p218 = scmp.ne.s32.totalorder %s209, %s210
      %p219 = scmp.eq.s32.totalorder %s31, 0
      %p220 = por %p218, %p219
      %p221 = scmp.ne.s32.totalorder %s209, %s210
      %p222 = scmp.eq.s32.totalorder %s32, 1
      %p223 = por %p221, %p222
      %p225 = scmp.ne.s32.totalorder %s210, %s224
      %p226 = scmp.eq.s32.totalorder %s32, 0
      %p227 = por %p225, %p226
      %s228 = ssub.s32 %s26, %s33
      %p229 = scmp.eq.s32.totalorder %s228, 0
      %s231 = sadd.s32 %s230, 1
      %s232 = scalar_select %p229, %s230, %s231
      %p235 = pneg %p229
      %p236 = scmp.eq.s32.totalorder %s26, 1
      %p237 = por %p235, %p236
      %p238 = scmp.ne.s32.totalorder %s230, %s233
      %p239 = scmp.eq.s32.totalorder %s26, 0
      %p240 = por %p238, %p239
      %p241 = scmp.ne.s32.totalorder %s230, %s233
      %p242 = scmp.eq.s32.totalorder %s31, 1
      %p243 = por %p241, %p242
      %p244 = scmp.ne.s32.totalorder %s233, %s234
      %p245 = scmp.eq.s32.totalorder %s31, 0
      %p246 = por %p244, %p245
      %p247 = scmp.ne.s32.totalorder %s233, %s234
      %p248 = scmp.eq.s32.totalorder %s32, 1
      %p249 = por %p247, %p248
      %p251 = scmp.ne.s32.totalorder %s234, %s250
      %p252 = scmp.eq.s32.totalorder %s32, 0
      %p253 = por %p251, %p252
      %p254 = scmp.le.s32.totalorder 1, %s26
      %p255 = scmp.lt.s32.totalorder %s26, 3
      %p256 = pnand %p254, %p255
      %p257 = pneg %p256
      // Predicated region
      $region9: #{tpu_custom_call.1} parent=5 // pred_check
        _
      $region10: #{tpu_custom_call.1} parent=5 // pred_check_branch
        %259 = sbr.rel (%p256) target = $region12
      $region11: #{tpu_custom_call.1} parent=5 // pred_region
        %s260 = ssub.s32 %s26, 1
        // Predicated region
        $region13: #{tpu_custom_call.1} parent=11 // pred_check
          %p261 = pneg %p73
        $region14: #{tpu_custom_call.1} parent=11 // pred_check_branch
          %263 = sbr.rel (%p261) target = $region16
        $region15: #{tpu_custom_call.1} parent=11 // pred_region
          %s265 = ssub.s32 16, 16
          %266 = vsyncadd [#allocation7], %s265
          %s268 = sshll.u32 %s1, 4
          %s269 = int_to_ptr.vmem [resolvable:$true] %s268
          %271 = dma.vmem_to_smem %s269, 16, [#allocation8], [#allocation7]
        $region16: #{tpu_custom_call.1} parent=11 // pred_fallthru
          _
        // Predicated region
        $region17: #{tpu_custom_call.1} parent=11 // pred_check
          %p272 = pneg %p94
        $region18: #{tpu_custom_call.1} parent=11 // pred_check_branch
          %274 = sbr.rel (%p272) target = $region20
        $region19: #{tpu_custom_call.1} parent=11 // pred_region
          %s276 = ssub.s32 16, 16
          %277 = vsyncadd [#allocation10], %s276
          %s279 = sshll.u32 %s2, 4
          %s280 = int_to_ptr.vmem [resolvable:$true] %s279
          %282 = dma.vmem_to_smem %s280, 16, [#allocation9], [#allocation10]
        $region20: #{tpu_custom_call.1} parent=11 // pred_fallthru
          _
        // Predicated region
        $region21: #{tpu_custom_call.1} parent=11 // pred_check
          %p283 = pneg %p115
        $region22: #{tpu_custom_call.1} parent=11 // pred_check_branch
          %285 = sbr.rel (%p283) target = $region24
        $region23: #{tpu_custom_call.1} parent=11 // pred_region
          %s287 = ssub.s32 16, 16
          %288 = vsyncadd [#allocation10], %s287
          %s290 = sshll.u32 %s3, 4
          %s291 = int_to_ptr.vmem [resolvable:$true] %s290
          %293 = dma.vmem_to_smem %s291, 16, [#allocation11], [#allocation10]
        $region24: #{tpu_custom_call.1} parent=11 // pred_fallthru
          _
        // Predicated region
        $region25: #{tpu_custom_call.1} parent=11 // pred_check
          %p294 = pneg %p136
        $region26: #{tpu_custom_call.1} parent=11 // pred_check_branch
          %296 = sbr.rel (%p294) target = $region28
        $region27: #{tpu_custom_call.1} parent=11 // pred_region
          %s298 = ssub.s32 16, 16
          %299 = vsyncadd [#allocation13], %s298
          %s301 = sshll.u32 %s4, 4
          %s302 = int_to_ptr.vmem [resolvable:$true] %s301
          %304 = dma.vmem_to_smem %s302, 16, [#allocation12], [#allocation13]
        $region28: #{tpu_custom_call.1} parent=11 // pred_fallthru
          _
        // Predicated region
        $region29: #{tpu_custom_call.1} parent=11 // pred_check
          %p305 = pneg %p157
        $region30: #{tpu_custom_call.1} parent=11 // pred_check_branch
          %307 = sbr.rel (%p305) target = $region32
        $region31: #{tpu_custom_call.1} parent=11 // pred_region
          %s309 = ssub.s32 16, 16
          %310 = vsyncadd [#allocation13], %s309
          %s312 = sshll.u32 %s5, 4
          %s313 = int_to_ptr.vmem [resolvable:$true] %s312
          %315 = dma.vmem_to_smem %s313, 16, [#allocation14], [#allocation13]
        $region32: #{tpu_custom_call.1} parent=11 // pred_fallthru
          _
        // Predicated region
        $region33: #{tpu_custom_call.1} parent=11 // pred_check
          %p316 = pneg %p178
        $region34: #{tpu_custom_call.1} parent=11 // pred_check_branch
          %318 = sbr.rel (%p316) target = $region36
        $region35: #{tpu_custom_call.1} parent=11 // pred_region
          %s320 = ssub.s32 16, 16
          %321 = vsyncadd [#allocation16], %s320
          %s323 = sshll.u32 %s6, 4
          %s324 = int_to_ptr.vmem [resolvable:$true] %s323
          %326 = dma.vmem_to_smem %s324, 16, [#allocation15], [#allocation16]
        $region36: #{tpu_custom_call.1} parent=11 // pred_fallthru
          _
        // Predicated region
        $region37: #{tpu_custom_call.1} parent=11 // pred_check
          %p327 = pneg %p199
        $region38: #{tpu_custom_call.1} parent=11 // pred_check_branch
          %329 = sbr.rel (%p327) target = $region40
        $region39: #{tpu_custom_call.1} parent=11 // pred_region
          %s331 = ssub.s32 16, 16
          %332 = vsyncadd [#allocation16], %s331
          %s334 = sshll.u32 %s7, 4
          %s335 = int_to_ptr.vmem [resolvable:$true] %s334
          %337 = dma.vmem_to_smem %s335, 16, [#allocation17], [#allocation16]
        $region40: #{tpu_custom_call.1} parent=11 // pred_fallthru
          _
        // Predicated region
        $region41: #{tpu_custom_call.1} parent=11 // pred_check
          %p338 = pneg %p220
        $region42: #{tpu_custom_call.1} parent=11 // pred_check_branch
          %340 = sbr.rel (%p338) target = $region44
        $region43: #{tpu_custom_call.1} parent=11 // pred_region
          _
        $region44: #{tpu_custom_call.1} parent=11 // pred_fallthru
          _
      $region12: #{tpu_custom_call.1} parent=5 // pred_fallthru
        _
      %p341 = scmp.lt.s32.totalorder %s26, 2
      // Predicated region
      $region45: #{tpu_custom_call.1} parent=5 // pred_check
        %p342 = pneg %p341
      $region46: #{tpu_custom_call.1} parent=5 // pred_check_branch
        %344 = sbr.rel (%p342) target = $region48
      $region47: #{tpu_custom_call.1} parent=5 // pred_region
        // Predicated region
        $region49: #{tpu_custom_call.1} parent=47 // pred_check
          %p345 = pneg %p46
        $region50: #{tpu_custom_call.1} parent=47 // pred_check_branch
          %347 = sbr.rel (%p345) target = $region52
        $region51: #{tpu_custom_call.1} parent=47 // pred_region
          %s348 = sand.u32 %s36, 1
          %s349 = scalar_lea.sflag [#allocation5], %s348
          %s350 = sand.u32 %s36, 1
          %s351 = smul.addr %s350, 16
          %s352 = scalar_lea.vmem [#allocation4], %s351
          %s354 = ssub.s32 256, 256
          %355 = vsyncadd %s349, %s354
          %s356 = smul.addr %s26, 2
          %s357 = smul.addr %s356, 128
          %s358 = scalar_lea.hbm %s0, %s357
          %s359 = sshll.u32 %s352, 4
          %s360 = int_to_ptr.vmem [resolvable:$true] %s359
          %365 = dma.hbm_to_vmem [thread:$0]  %s358, 256, %s360, %s349, 128, 128, 8
        $region52: #{tpu_custom_call.1} parent=47 // pred_fallthru
          _
      $region48: #{tpu_custom_call.1} parent=5 // pred_fallthru
        _
      %p366 = scmp.le.s32.totalorder 1, %s26
      %p367 = scmp.lt.s32.totalorder %s26, 3
      %p368 = pnand %p366, %p367
      %p369 = pneg %p368
      // Predicated region
      $region53: #{tpu_custom_call.1} parent=5 // pred_check
        _
      $region54: #{tpu_custom_call.1} parent=5 // pred_check_branch
        %371 = sbr.rel (%p368) target = $region56
      $region55: #{tpu_custom_call.1} parent=5 // pred_region
        %s372 = ssub.s32 %s26, 1
        %s373 = sand.u32 %s39, 1
        %s374 = scalar_lea.sflag [#allocation5], %s373
        %s375 = sand.u32 %s39, 1
        %s376 = smul.addr %s375, 16
        %s377 = scalar_lea.vmem [#allocation4], %s376
        // Predicated region
        $region57: #{tpu_custom_call.1} parent=55 // pred_check
          %p378 = pneg %p52
        $region58: #{tpu_custom_call.1} parent=55 // pred_check_branch
          %380 = sbr.rel (%p378) target = $region60
        $region59: #{tpu_custom_call.1} parent=55 // pred_region
          %381 = dma.done %s374, 256
        $region60: #{tpu_custom_call.1} parent=55 // pred_fallthru
          _
        // Predicated region
        $region61: #{tpu_custom_call.1} parent=55 // pred_check
          %p382 = pneg %p73
        $region62: #{tpu_custom_call.1} parent=55 // pred_check_branch
          %384 = sbr.rel (%p382) target = $region64
        $region63: #{tpu_custom_call.1} parent=55 // pred_region
          %385 = dma.done [#allocation7], 16
        $region64: #{tpu_custom_call.1} parent=55 // pred_fallthru
          _
        // Predicated region
        $region65: #{tpu_custom_call.1} parent=55 // pred_check
          %p386 = pneg %p94
        $region66: #{tpu_custom_call.1} parent=55 // pred_check_branch
          %388 = sbr.rel (%p386) target = $region68
        $region67: #{tpu_custom_call.1} parent=55 // pred_region
          %389 = dma.done [#allocation10], 16
        $region68: #{tpu_custom_call.1} parent=55 // pred_fallthru
          _
        // Predicated region
        $region69: #{tpu_custom_call.1} parent=55 // pred_check
          %p390 = pneg %p115
        $region70: #{tpu_custom_call.1} parent=55 // pred_check_branch
          %392 = sbr.rel (%p390) target = $region72
        $region71: #{tpu_custom_call.1} parent=55 // pred_region
          %393 = dma.done [#allocation10], 16
        $region72: #{tpu_custom_call.1} parent=55 // pred_fallthru
          _
        // Predicated region
        $region73: #{tpu_custom_call.1} parent=55 // pred_check
          %p394 = pneg %p136
        $region74: #{tpu_custom_call.1} parent=55 // pred_check_branch
          %396 = sbr.rel (%p394) target = $region76
        $region75: #{tpu_custom_call.1} parent=55 // pred_region
          %397 = dma.done [#allocation13], 16
        $region76: #{tpu_custom_call.1} parent=55 // pred_fallthru
          _
        // Predicated region
        $region77: #{tpu_custom_call.1} parent=55 // pred_check
          %p398 = pneg %p157
        $region78: #{tpu_custom_call.1} parent=55 // pred_check_branch
          %400 = sbr.rel (%p398) target = $region80
        $region79: #{tpu_custom_call.1} parent=55 // pred_region
          %401 = dma.done [#allocation13], 16
        $region80: #{tpu_custom_call.1} parent=55 // pred_fallthru
          _
        // Predicated region
        $region81: #{tpu_custom_call.1} parent=55 // pred_check
          %p402 = pneg %p178
        $region82: #{tpu_custom_call.1} parent=55 // pred_check_branch
          %404 = sbr.rel (%p402) target = $region84
        $region83: #{tpu_custom_call.1} parent=55 // pred_region
          %405 = dma.done [#allocation16], 16
        $region84: #{tpu_custom_call.1} parent=55 // pred_fallthru
          _
        // Predicated region
        $region85: #{tpu_custom_call.1} parent=55 // pred_check
          %p406 = pneg %p199
        $region86: #{tpu_custom_call.1} parent=55 // pred_check_branch
          %408 = sbr.rel (%p406) target = $region88
        $region87: #{tpu_custom_call.1} parent=55 // pred_region
          %409 = dma.done [#allocation16], 16
        $region88: #{tpu_custom_call.1} parent=55 // pred_fallthru
          _
        %410 = sfence
        %s411 = sand.u32 %s39, 1
        %s412 = scalar_lea.sflag [#allocation5], %s411
        %s413 = sand.u32 %s39, 1
        %s414 = smul.addr %s413, 16
        %s415 = scalar_lea.vmem [#allocation4], %s414
        %p416 = pneg %p52
        %p417 = pneg %p49
        %p418 = pneg %p73
        %p419 = pneg %p70
        %p420 = pneg %p94
        %p421 = pneg %p91
        %p422 = pneg %p115
        %p423 = pneg %p112
        %p424 = pneg %p136
        %p425 = pneg %p133
        %p426 = pneg %p157
        %p427 = pneg %p154
        %p428 = pneg %p178
        %p429 = pneg %p175
        %p430 = pneg %p199
        %p431 = pneg %p196
        %p432 = pneg %p220
        %p433 = pneg %p217
        %p434 = pneg %p246
        %p435 = pneg %p243
        %s436 = sand.u32 %s233, 1
        %s437 = scalar_lea.sflag [#allocation6], %s436
        %s438 = sand.u32 %s233, 1
        %s439 = smul.addr %s438, 16
        %s440 = scalar_lea.vmem [#allocation18], %s439
        %vm441 = vcmask 162816
        %442 = vst.msk [vmem:[#allocation2] sm:$0xff] %vm441, 0.0
        %443 = vst.msk [vmem:[#allocation2 + $0x8] sm:$0xff] %vm441, 0.0
        %vm444 = vcmask 158720
        %445 = vst.msk [vmem:[#allocation2 + $0x10] sm:$0xf] %vm444, 0.0
        %v446 = vlaneseq
        %v447 = vshrl.u32 %v446, 7
        %v448 = vadd.s32 %v447, 8
        %v449 = vlaneseq
        %v450 = vand.u32 %v449, 127
        %v451 = vand.u32 %v447, 1
        %v452 = vand.u32 %v448, 1
        %v453 = vand.u32 %v450, 1
        %v454 = vand.u32 %v447, 3
        %v455 = vand.u32 %v448, 3
        %v456 = vand.u32 %v450, 3
        %v457 = vld [vmem:[%s377] sm:$0xff]
        %v458 = vld [vmem:[%s377 + $0x8] sm:$0xff]
        %461 = vrot.lane.b32.xlu0 %v457, 2
        %v462 = vpop.permute.xlu0 %461
        %463 = vrot.lane.b32.xlu0 %v458, 2
        %v464 = vpop.permute.xlu0 %463
        %vm467 = vcmask 146448
        %468 = vst.msk [vmem:[#allocation2 + $0x2] sm:$0xff] %vm467, %v462
        %469 = vst.msk [vmem:[#allocation2 + $0xa] sm:$0xff] %vm467, %v464
        %v470 = vld [vmem:[#allocation2] sm:$0xff]
        %v471 = vld [vmem:[#allocation2 + $0x8] sm:$0xff]
        %v472 = vld [vmem:[#allocation2 + $0x10] sm:$0xf]
        %s473 = sld [smem:[#allocation8]]
        %v474 = vstv %s473
        %v475 = vmul.f32 %v470, %v474
        %v476 = vmul.f32 %v471, %v474
        %v477 = vmul.f32 %v472, %v474
        %v478 = vadd.f32 %v475, 0.0
        %v479 = vadd.f32 %v476, 0.0
        %v480 = vadd.f32 %v477, 0.0
        %s481 = sld [smem:[#allocation8 + $0x1]]
        %v482 = vstv %s481
        %v483 = vmul.f32 %v470, %v482
        %v484 = vmul.f32 %v471, %v482
        %v485 = vmul.f32 %v472, %v482
        %489 = vrot.lane.b32.xlu0 %v483, 127
        %v490 = vpop.permute.xlu0 %489
        %491 = vrot.lane.b32.xlu0 %v484, 127
        %v492 = vpop.permute.xlu0 %491
        %493 = vrot.lane.b32.xlu0 %v485, 127
        %v494 = vpop.permute.xlu0 %493
        %v498 = vadd.f32 %v478, %v490
        %v499 = vadd.f32 %v479, %v492
        %v500 = vadd.f32 %v480, %v494
        %s501 = sld [smem:[#allocation8 + $0x2]]
        %v502 = vstv %s501
        %v503 = vmul.f32 %v470, %v502
        %v504 = vmul.f32 %v471, %v502
        %v505 = vmul.f32 %v472, %v502
        %509 = vrot.lane.b32.xlu0 %v503, 126
        %v510 = vpop.permute.xlu0 %509
        %511 = vrot.lane.b32.xlu0 %v504, 126
        %v512 = vpop.permute.xlu0 %511
        %513 = vrot.lane.b32.xlu0 %v505, 126
        %v514 = vpop.permute.xlu0 %513
        %v518 = vadd.f32 %v498, %v510
        %v519 = vadd.f32 %v499, %v512
        %v520 = vadd.f32 %v500, %v514
        %s521 = sld [smem:[#allocation8 + $0x3]]
        %v522 = vstv %s521
        %v523 = vmul.f32 %v470, %v522
        %v524 = vmul.f32 %v471, %v522
        %v525 = vmul.f32 %v472, %v522
        %vm529 = vcmask 1046528
        %v530 = vrot.slane %v523, 1
        %v531 = vrot.slane %v524, 1
        %v532 = vsel %vm529, %v530, %v531
        %v533 = vrot.slane %v525, 1
        %v534 = vsel %vm529, %v531, %v533
        %v538 = vadd.f32 %v518, %v532
        %v539 = vadd.f32 %v519, %v534
        %v540 = vadd.f32 %v520, %v533
        %s541 = sld [smem:[#allocation8 + $0x4]]
        %v542 = vstv %s541
        %v543 = vmul.f32 %v470, %v542
        %v544 = vmul.f32 %v471, %v542
        %v545 = vmul.f32 %v472, %v542
        %v549 = vrot.slane %v543, 1
        %v550 = vrot.slane %v544, 1
        %v551 = vsel %vm529, %v549, %v550
        %v552 = vrot.slane %v545, 1
        %v553 = vsel %vm529, %v550, %v552
        %554 = vrot.lane.b32.xlu0 %v551, 127
        %v555 = vpop.permute.xlu0 %554
        %556 = vrot.lane.b32.xlu0 %v553, 127
        %v557 = vpop.permute.xlu0 %556
        %558 = vrot.lane.b32.xlu0 %v552, 127
        %v559 = vpop.permute.xlu0 %558
        %v563 = vadd.f32 %v538, %v555
        %v564 = vadd.f32 %v539, %v557
        %v565 = vadd.f32 %v540, %v559
        %s566 = sld [smem:[#allocation8 + $0x5]]
        %v567 = vstv %s566
        %v568 = vmul.f32 %v470, %v567
        %v569 = vmul.f32 %v471, %v567
        %v570 = vmul.f32 %v472, %v567
        %v574 = vrot.slane %v568, 1
        %v575 = vrot.slane %v569, 1
        %v576 = vsel %vm529, %v574, %v575
        %v577 = vrot.slane %v570, 1
        %v578 = vsel %vm529, %v575, %v577
        %579 = vrot.lane.b32.xlu0 %v576, 126
        %v580 = vpop.permute.xlu0 %579
        %581 = vrot.lane.b32.xlu0 %v578, 126
        %v582 = vpop.permute.xlu0 %581
        %583 = vrot.lane.b32.xlu0 %v577, 126
        %v584 = vpop.permute.xlu0 %583
        %v588 = vadd.f32 %v563, %v580
        %v589 = vadd.f32 %v564, %v582
        %v590 = vadd.f32 %v565, %v584
        %s591 = sld [smem:[#allocation8 + $0x6]]
        %v592 = vstv %s591
        %v593 = vmul.f32 %v470, %v592
        %v594 = vmul.f32 %v471, %v592
        %v595 = vmul.f32 %v472, %v592
        %vm599 = vcmask 1045504
        %v600 = vrot.slane %v593, 2
        %v601 = vrot.slane %v594, 2
        %v602 = vsel %vm599, %v600, %v601
        %v603 = vrot.slane %v595, 2
        %v604 = vsel %vm599, %v601, %v603
        %v608 = vadd.f32 %v588, %v602
        %v609 = vadd.f32 %v589, %v604
        %v610 = vadd.f32 %v590, %v603
        %s611 = sld [smem:[#allocation8 + $0x7]]
        %v612 = vstv %s611
        %v613 = vmul.f32 %v470, %v612
        %v614 = vmul.f32 %v471, %v612
        %v615 = vmul.f32 %v472, %v612
        %v619 = vrot.slane %v613, 2
        %v620 = vrot.slane %v614, 2
        %v621 = vsel %vm599, %v619, %v620
        %v622 = vrot.slane %v615, 2
        %v623 = vsel %vm599, %v620, %v622
        %624 = vrot.lane.b32.xlu0 %v621, 127
        %v625 = vpop.permute.xlu0 %624
        %626 = vrot.lane.b32.xlu0 %v623, 127
        %v627 = vpop.permute.xlu0 %626
        %628 = vrot.lane.b32.xlu0 %v622, 127
        %v629 = vpop.permute.xlu0 %628
        %v633 = vadd.f32 %v608, %v625
        %v634 = vadd.f32 %v609, %v627
        %v635 = vadd.f32 %v610, %v629
        %s636 = sld [smem:[#allocation8 + $0x8]]
        %v637 = vstv %s636
        %v638 = vmul.f32 %v470, %v637
        %v639 = vmul.f32 %v471, %v637
        %v640 = vmul.f32 %v472, %v637
        %v644 = vrot.slane %v638, 2
        %v645 = vrot.slane %v639, 2
        %v646 = vsel %vm599, %v644, %v645
        %v647 = vrot.slane %v640, 2
        %v648 = vsel %vm599, %v645, %v647
        %649 = vrot.lane.b32.xlu0 %v646, 126
        %v650 = vpop.permute.xlu0 %649
        %651 = vrot.lane.b32.xlu0 %v648, 126
        %v652 = vpop.permute.xlu0 %651
        %653 = vrot.lane.b32.xlu0 %v647, 126
        %v654 = vpop.permute.xlu0 %653
        %v658 = vadd.f32 %v633, %v650
        %v659 = vadd.f32 %v634, %v652
        %v660 = vadd.f32 %v635, %v654
        %s661 = sld [smem:[#allocation9]]
        %v662 = vstv %s661
        %v663 = vadd.f32 %v658, %v662
        %v664 = vadd.f32 %v659, %v662
        %v665 = vadd.f32 %v660, %v662
        %v666 = vmax.f32 %v663, 0.0
        %v667 = vmax.f32 %v664, 0.0
        %v668 = vmax.f32 %v665, 0.0
        %s669 = sld [smem:[#allocation8 + $0x9]]
        %v670 = vstv %s669
        %v671 = vmul.f32 %v470, %v670
        %v672 = vmul.f32 %v471, %v670
        %v673 = vmul.f32 %v472, %v670
        %v674 = vadd.f32 %v671, 0.0
        %v675 = vadd.f32 %v672, 0.0
        %v676 = vadd.f32 %v673, 0.0
        %s677 = sld [smem:[#allocation8 + $0xa]]
        %v678 = vstv %s677
        %v679 = vmul.f32 %v470, %v678
        %v680 = vmul.f32 %v471, %v678
        %v681 = vmul.f32 %v472, %v678
        %685 = vrot.lane.b32.xlu0 %v679, 127
        %v686 = vpop.permute.xlu0 %685
        %687 = vrot.lane.b32.xlu0 %v680, 127
        %v688 = vpop.permute.xlu0 %687
        %689 = vrot.lane.b32.xlu0 %v681, 127
        %v690 = vpop.permute.xlu0 %689
        %v694 = vadd.f32 %v674, %v686
        %v695 = vadd.f32 %v675, %v688
        %v696 = vadd.f32 %v676, %v690
        %s697 = sld [smem:[#allocation8 + $0xb]]
        %v698 = vstv %s697
        %v699 = vmul.f32 %v470, %v698
        %v700 = vmul.f32 %v471, %v698
        %v701 = vmul.f32 %v472, %v698
        %705 = vrot.lane.b32.xlu0 %v699, 126
        %v706 = vpop.permute.xlu0 %705
        %707 = vrot.lane.b32.xlu0 %v700, 126
        %v708 = vpop.permute.xlu0 %707
        %709 = vrot.lane.b32.xlu0 %v701, 126
        %v710 = vpop.permute.xlu0 %709
        %v714 = vadd.f32 %v694, %v706
        %v715 = vadd.f32 %v695, %v708
        %v716 = vadd.f32 %v696, %v710
        %s717 = sld [smem:[#allocation8 + $0xc]]
        %v718 = vstv %s717
        %v719 = vmul.f32 %v470, %v718
        %v720 = vmul.f32 %v471, %v718
        %v721 = vmul.f32 %v472, %v718
        %v725 = vrot.slane %v719, 1
        %v726 = vrot.slane %v720, 1
        %v727 = vsel %vm529, %v725, %v726
        %v728 = vrot.slane %v721, 1
        %v729 = vsel %vm529, %v726, %v728
        %v733 = vadd.f32 %v714, %v727
        %v734 = vadd.f32 %v715, %v729
        %v735 = vadd.f32 %v716, %v728
        %s736 = sld [smem:[#allocation8 + $0xd]]
        %v737 = vstv %s736
        %v738 = vmul.f32 %v470, %v737
        %v739 = vmul.f32 %v471, %v737
        %v740 = vmul.f32 %v472, %v737
        %v744 = vrot.slane %v738, 1
        %v745 = vrot.slane %v739, 1
        %v746 = vsel %vm529, %v744, %v745
        %v747 = vrot.slane %v740, 1
        %v748 = vsel %vm529, %v745, %v747
        %749 = vrot.lane.b32.xlu0 %v746, 127
        %v750 = vpop.permute.xlu0 %749
        %751 = vrot.lane.b32.xlu0 %v748, 127
        %v752 = vpop.permute.xlu0 %751
        %753 = vrot.lane.b32.xlu0 %v747, 127
        %v754 = vpop.permute.xlu0 %753
        %v758 = vadd.f32 %v733, %v750
        %v759 = vadd.f32 %v734, %v752
        %v760 = vadd.f32 %v735, %v754
        %s761 = sld [smem:[#allocation8 + $0xe]]
        %v762 = vstv %s761
        %v763 = vmul.f32 %v470, %v762
        %v764 = vmul.f32 %v471, %v762
        %v765 = vmul.f32 %v472, %v762
        %v769 = vrot.slane %v763, 1
        %v770 = vrot.slane %v764, 1
        %v771 = vsel %vm529, %v769, %v770
        %v772 = vrot.slane %v765, 1
        %v773 = vsel %vm529, %v770, %v772
        %774 = vrot.lane.b32.xlu0 %v771, 126
        %v775 = vpop.permute.xlu0 %774
        %776 = vrot.lane.b32.xlu0 %v773, 126
        %v777 = vpop.permute.xlu0 %776
        %778 = vrot.lane.b32.xlu0 %v772, 126
        %v779 = vpop.permute.xlu0 %778
        %v783 = vadd.f32 %v758, %v775
        %v784 = vadd.f32 %v759, %v777
        %v785 = vadd.f32 %v760, %v779
        %s786 = sld [smem:[#allocation8 + $0xf]]
        %v787 = vstv %s786
        %v788 = vmul.f32 %v470, %v787
        %v789 = vmul.f32 %v471, %v787
        %v790 = vmul.f32 %v472, %v787
        %v794 = vrot.slane %v788, 2
        %v795 = vrot.slane %v789, 2
        %v796 = vsel %vm599, %v794, %v795
        %v797 = vrot.slane %v790, 2
        %v798 = vsel %vm599, %v795, %v797
        %v802 = vadd.f32 %v783, %v796
        %v803 = vadd.f32 %v784, %v798
        %v804 = vadd.f32 %v785, %v797
        %s805 = sld [smem:[#allocation8 + $0x10]]
        %v806 = vstv %s805
        %v807 = vmul.f32 %v470, %v806
        %v808 = vmul.f32 %v471, %v806
        %v809 = vmul.f32 %v472, %v806
        %v813 = vrot.slane %v807, 2
        %v814 = vrot.slane %v808, 2
        %v815 = vsel %vm599, %v813, %v814
        %v816 = vrot.slane %v809, 2
        %v817 = vsel %vm599, %v814, %v816
        %818 = vrot.lane.b32.xlu0 %v815, 127
        %v819 = vpop.permute.xlu0 %818
        %820 = vrot.lane.b32.xlu0 %v817, 127
        %v821 = vpop.permute.xlu0 %820
        %822 = vrot.lane.b32.xlu0 %v816, 127
        %v823 = vpop.permute.xlu0 %822
        %v827 = vadd.f32 %v802, %v819
        %v828 = vadd.f32 %v803, %v821
        %v829 = vadd.f32 %v804, %v823
        %s830 = sld [smem:[#allocation8 + $0x11]]
        %v831 = vstv %s830
        %v832 = vmul.f32 %v470, %v831
        %v833 = vmul.f32 %v471, %v831
        %v834 = vmul.f32 %v472, %v831
        %v838 = vrot.slane %v832, 2
        %v839 = vrot.slane %v833, 2
        %v840 = vsel %vm599, %v838, %v839
        %v841 = vrot.slane %v834, 2
        %v842 = vsel %vm599, %v839, %v841
        %843 = vrot.lane.b32.xlu0 %v840, 126
        %v844 = vpop.permute.xlu0 %843
        %845 = vrot.lane.b32.xlu0 %v842, 126
        %v846 = vpop.permute.xlu0 %845
        %847 = vrot.lane.b32.xlu0 %v841, 126
        %v848 = vpop.permute.xlu0 %847
        %v852 = vadd.f32 %v827, %v844
        %v853 = vadd.f32 %v828, %v846
        %v854 = vadd.f32 %v829, %v848
        %s855 = sld [smem:[#allocation9 + $0x1]]
        %v856 = vstv %s855
        %v857 = vadd.f32 %v852, %v856
        %v858 = vadd.f32 %v853, %v856
        %v859 = vadd.f32 %v854, %v856
        %v860 = vmax.f32 %v857, 0.0
        %v861 = vmax.f32 %v858, 0.0
        %v862 = vmax.f32 %v859, 0.0
        %s863 = sld [smem:[#allocation8 + $0x12]]
        %v864 = vstv %s863
        %v865 = vmul.f32 %v470, %v864
        %v866 = vmul.f32 %v471, %v864
        %v867 = vmul.f32 %v472, %v864
        %v868 = vadd.f32 %v865, 0.0
        %v869 = vadd.f32 %v866, 0.0
        %v870 = vadd.f32 %v867, 0.0
        %s871 = sld [smem:[#allocation8 + $0x13]]
        %v872 = vstv %s871
        %v873 = vmul.f32 %v470, %v872
        %v874 = vmul.f32 %v471, %v872
        %v875 = vmul.f32 %v472, %v872
        %879 = vrot.lane.b32.xlu0 %v873, 127
        %v880 = vpop.permute.xlu0 %879
        %881 = vrot.lane.b32.xlu0 %v874, 127
        %v882 = vpop.permute.xlu0 %881
        %883 = vrot.lane.b32.xlu0 %v875, 127
        %v884 = vpop.permute.xlu0 %883
        %v888 = vadd.f32 %v868, %v880
        %v889 = vadd.f32 %v869, %v882
        %v890 = vadd.f32 %v870, %v884
        %s891 = sld [smem:[#allocation8 + $0x14]]
        %v892 = vstv %s891
        %v893 = vmul.f32 %v470, %v892
        %v894 = vmul.f32 %v471, %v892
        %v895 = vmul.f32 %v472, %v892
        %899 = vrot.lane.b32.xlu0 %v893, 126
        %v900 = vpop.permute.xlu0 %899
        %901 = vrot.lane.b32.xlu0 %v894, 126
        %v902 = vpop.permute.xlu0 %901
        %903 = vrot.lane.b32.xlu0 %v895, 126
        %v904 = vpop.permute.xlu0 %903
        %v908 = vadd.f32 %v888, %v900
        %v909 = vadd.f32 %v889, %v902
        %v910 = vadd.f32 %v890, %v904
        %s911 = sld [smem:[#allocation8 + $0x15]]
        %v912 = vstv %s911
        %v913 = vmul.f32 %v470, %v912
        %v914 = vmul.f32 %v471, %v912
        %v915 = vmul.f32 %v472, %v912
        %v919 = vrot.slane %v913, 1
        %v920 = vrot.slane %v914, 1
        %v921 = vsel %vm529, %v919, %v920
        %v922 = vrot.slane %v915, 1
        %v923 = vsel %vm529, %v920, %v922
        %v927 = vadd.f32 %v908, %v921
        %v928 = vadd.f32 %v909, %v923
        %v929 = vadd.f32 %v910, %v922
        %s930 = sld [smem:[#allocation8 + $0x16]]
        %v931 = vstv %s930
        %v932 = vmul.f32 %v470, %v931
        %v933 = vmul.f32 %v471, %v931
        %v934 = vmul.f32 %v472, %v931
        %v938 = vrot.slane %v932, 1
        %v939 = vrot.slane %v933, 1
        %v940 = vsel %vm529, %v938, %v939
        %v941 = vrot.slane %v934, 1
        %v942 = vsel %vm529, %v939, %v941
        %943 = vrot.lane.b32.xlu0 %v940, 127
        %v944 = vpop.permute.xlu0 %943
        %945 = vrot.lane.b32.xlu0 %v942, 127
        %v946 = vpop.permute.xlu0 %945
        %947 = vrot.lane.b32.xlu0 %v941, 127
        %v948 = vpop.permute.xlu0 %947
        %v952 = vadd.f32 %v927, %v944
        %v953 = vadd.f32 %v928, %v946
        %v954 = vadd.f32 %v929, %v948
        %s955 = sld [smem:[#allocation8 + $0x17]]
        %v956 = vstv %s955
        %v957 = vmul.f32 %v470, %v956
        %v958 = vmul.f32 %v471, %v956
        %v959 = vmul.f32 %v472, %v956
        %v963 = vrot.slane %v957, 1
        %v964 = vrot.slane %v958, 1
        %v965 = vsel %vm529, %v963, %v964
        %v966 = vrot.slane %v959, 1
        %v967 = vsel %vm529, %v964, %v966
        %968 = vrot.lane.b32.xlu0 %v965, 126
        %v969 = vpop.permute.xlu0 %968
        %970 = vrot.lane.b32.xlu0 %v967, 126
        %v971 = vpop.permute.xlu0 %970
        %972 = vrot.lane.b32.xlu0 %v966, 126
        %v973 = vpop.permute.xlu0 %972
        %v977 = vadd.f32 %v952, %v969
        %v978 = vadd.f32 %v953, %v971
        %v979 = vadd.f32 %v954, %v973
        %s980 = sld [smem:[#allocation8 + $0x18]]
        %v981 = vstv %s980
        %v982 = vmul.f32 %v470, %v981
        %v983 = vmul.f32 %v471, %v981
        %v984 = vmul.f32 %v472, %v981
        %v988 = vrot.slane %v982, 2
        %v989 = vrot.slane %v983, 2
        %v990 = vsel %vm599, %v988, %v989
        %v991 = vrot.slane %v984, 2
        %v992 = vsel %vm599, %v989, %v991
        %v996 = vadd.f32 %v977, %v990
        %v997 = vadd.f32 %v978, %v992
        %v998 = vadd.f32 %v979, %v991
        %s999 = sld [smem:[#allocation8 + $0x19]]
        %v1000 = vstv %s999
        %v1001 = vmul.f32 %v470, %v1000
        %v1002 = vmul.f32 %v471, %v1000
        %v1003 = vmul.f32 %v472, %v1000
        %v1007 = vrot.slane %v1001, 2
        %v1008 = vrot.slane %v1002, 2
        %v1009 = vsel %vm599, %v1007, %v1008
        %v1010 = vrot.slane %v1003, 2
        %v1011 = vsel %vm599, %v1008, %v1010
        %1012 = vrot.lane.b32.xlu0 %v1009, 127
        %v1013 = vpop.permute.xlu0 %1012
        %1014 = vrot.lane.b32.xlu0 %v1011, 127
        %v1015 = vpop.permute.xlu0 %1014
        %1016 = vrot.lane.b32.xlu0 %v1010, 127
        %v1017 = vpop.permute.xlu0 %1016
        %v1021 = vadd.f32 %v996, %v1013
        %v1022 = vadd.f32 %v997, %v1015
        %v1023 = vadd.f32 %v998, %v1017
        %s1024 = sld [smem:[#allocation8 + $0x1a]]
        %v1025 = vstv %s1024
        %v1026 = vmul.f32 %v470, %v1025
        %v1027 = vmul.f32 %v471, %v1025
        %v1028 = vmul.f32 %v472, %v1025
        %v1032 = vrot.slane %v1026, 2
        %v1033 = vrot.slane %v1027, 2
        %v1034 = vsel %vm599, %v1032, %v1033
        %v1035 = vrot.slane %v1028, 2
        %v1036 = vsel %vm599, %v1033, %v1035
        %1037 = vrot.lane.b32.xlu0 %v1034, 126
        %v1038 = vpop.permute.xlu0 %1037
        %1039 = vrot.lane.b32.xlu0 %v1036, 126
        %v1040 = vpop.permute.xlu0 %1039
        %1041 = vrot.lane.b32.xlu0 %v1035, 126
        %v1042 = vpop.permute.xlu0 %1041
        %v1046 = vadd.f32 %v1021, %v1038
        %v1047 = vadd.f32 %v1022, %v1040
        %v1048 = vadd.f32 %v1023, %v1042
        %s1049 = sld [smem:[#allocation9 + $0x2]]
        %v1050 = vstv %s1049
        %v1051 = vadd.f32 %v1046, %v1050
        %v1052 = vadd.f32 %v1047, %v1050
        %v1053 = vadd.f32 %v1048, %v1050
        %v1054 = vmax.f32 %v1051, 0.0
        %v1055 = vmax.f32 %v1052, 0.0
        %v1056 = vmax.f32 %v1053, 0.0
        %s1057 = sld [smem:[#allocation8 + $0x1b]]
        %v1058 = vstv %s1057
        %v1059 = vmul.f32 %v470, %v1058
        %v1060 = vmul.f32 %v471, %v1058
        %v1061 = vmul.f32 %v472, %v1058
        %v1062 = vadd.f32 %v1059, 0.0
        %v1063 = vadd.f32 %v1060, 0.0
        %v1064 = vadd.f32 %v1061, 0.0
        %s1065 = sld [smem:[#allocation8 + $0x1c]]
        %v1066 = vstv %s1065
        %v1067 = vmul.f32 %v470, %v1066
        %v1068 = vmul.f32 %v471, %v1066
        %v1069 = vmul.f32 %v472, %v1066
        %1073 = vrot.lane.b32.xlu0 %v1067, 127
        %v1074 = vpop.permute.xlu0 %1073
        %1075 = vrot.lane.b32.xlu0 %v1068, 127
        %v1076 = vpop.permute.xlu0 %1075
        %1077 = vrot.lane.b32.xlu0 %v1069, 127
        %v1078 = vpop.permute.xlu0 %1077
        %v1082 = vadd.f32 %v1062, %v1074
        %v1083 = vadd.f32 %v1063, %v1076
        %v1084 = vadd.f32 %v1064, %v1078
        %s1085 = sld [smem:[#allocation8 + $0x1d]]
        %v1086 = vstv %s1085
        %v1087 = vmul.f32 %v470, %v1086
        %v1088 = vmul.f32 %v471, %v1086
        %v1089 = vmul.f32 %v472, %v1086
        %1093 = vrot.lane.b32.xlu0 %v1087, 126
        %v1094 = vpop.permute.xlu0 %1093
        %1095 = vrot.lane.b32.xlu0 %v1088, 126
        %v1096 = vpop.permute.xlu0 %1095
        %1097 = vrot.lane.b32.xlu0 %v1089, 126
        %v1098 = vpop.permute.xlu0 %1097
        %v1102 = vadd.f32 %v1082, %v1094
        %v1103 = vadd.f32 %v1083, %v1096
        %v1104 = vadd.f32 %v1084, %v1098
        %s1105 = sld [smem:[#allocation8 + $0x1e]]
        %v1106 = vstv %s1105
        %v1107 = vmul.f32 %v470, %v1106
        %v1108 = vmul.f32 %v471, %v1106
        %v1109 = vmul.f32 %v472, %v1106
        %v1113 = vrot.slane %v1107, 1
        %v1114 = vrot.slane %v1108, 1
        %v1115 = vsel %vm529, %v1113, %v1114
        %v1116 = vrot.slane %v1109, 1
        %v1117 = vsel %vm529, %v1114, %v1116
        %v1121 = vadd.f32 %v1102, %v1115
        %v1122 = vadd.f32 %v1103, %v1117
        %v1123 = vadd.f32 %v1104, %v1116
        %s1124 = sld [smem:[#allocation8 + $0x1f]]
        %v1125 = vstv %s1124
        %v1126 = vmul.f32 %v470, %v1125
        %v1127 = vmul.f32 %v471, %v1125
        %v1128 = vmul.f32 %v472, %v1125
        %v1132 = vrot.slane %v1126, 1
        %v1133 = vrot.slane %v1127, 1
        %v1134 = vsel %vm529, %v1132, %v1133
        %v1135 = vrot.slane %v1128, 1
        %v1136 = vsel %vm529, %v1133, %v1135
        %1137 = vrot.lane.b32.xlu0 %v1134, 127
        %v1138 = vpop.permute.xlu0 %1137
        %1139 = vrot.lane.b32.xlu0 %v1136, 127
        %v1140 = vpop.permute.xlu0 %1139
        %1141 = vrot.lane.b32.xlu0 %v1135, 127
        %v1142 = vpop.permute.xlu0 %1141
        %v1146 = vadd.f32 %v1121, %v1138
        %v1147 = vadd.f32 %v1122, %v1140
        %v1148 = vadd.f32 %v1123, %v1142
        %s1149 = sld [smem:[#allocation8 + $0x20]]
        %v1150 = vstv %s1149
        %v1151 = vmul.f32 %v470, %v1150
        %v1152 = vmul.f32 %v471, %v1150
        %v1153 = vmul.f32 %v472, %v1150
        %v1157 = vrot.slane %v1151, 1
        %v1158 = vrot.slane %v1152, 1
        %v1159 = vsel %vm529, %v1157, %v1158
        %v1160 = vrot.slane %v1153, 1
        %v1161 = vsel %vm529, %v1158, %v1160
        %1162 = vrot.lane.b32.xlu0 %v1159, 126
        %v1163 = vpop.permute.xlu0 %1162
        %1164 = vrot.lane.b32.xlu0 %v1161, 126
        %v1165 = vpop.permute.xlu0 %1164
        %1166 = vrot.lane.b32.xlu0 %v1160, 126
        %v1167 = vpop.permute.xlu0 %1166
        %v1171 = vadd.f32 %v1146, %v1163
        %v1172 = vadd.f32 %v1147, %v1165
        %v1173 = vadd.f32 %v1148, %v1167
        %s1174 = sld [smem:[#allocation8 + $0x21]]
        %v1175 = vstv %s1174
        %v1176 = vmul.f32 %v470, %v1175
        %v1177 = vmul.f32 %v471, %v1175
        %v1178 = vmul.f32 %v472, %v1175
        %v1182 = vrot.slane %v1176, 2
        %v1183 = vrot.slane %v1177, 2
        %v1184 = vsel %vm599, %v1182, %v1183
        %v1185 = vrot.slane %v1178, 2
        %v1186 = vsel %vm599, %v1183, %v1185
        %v1190 = vadd.f32 %v1171, %v1184
        %v1191 = vadd.f32 %v1172, %v1186
        %v1192 = vadd.f32 %v1173, %v1185
        %s1193 = sld [smem:[#allocation8 + $0x22]]
        %v1194 = vstv %s1193
        %v1195 = vmul.f32 %v470, %v1194
        %v1196 = vmul.f32 %v471, %v1194
        %v1197 = vmul.f32 %v472, %v1194
        %v1201 = vrot.slane %v1195, 2
        %v1202 = vrot.slane %v1196, 2
        %v1203 = vsel %vm599, %v1201, %v1202
        %v1204 = vrot.slane %v1197, 2
        %v1205 = vsel %vm599, %v1202, %v1204
        %1206 = vrot.lane.b32.xlu0 %v1203, 127
        %v1207 = vpop.permute.xlu0 %1206
        %1208 = vrot.lane.b32.xlu0 %v1205, 127
        %v1209 = vpop.permute.xlu0 %1208
        %1210 = vrot.lane.b32.xlu0 %v1204, 127
        %v1211 = vpop.permute.xlu0 %1210
        %v1215 = vadd.f32 %v1190, %v1207
        %v1216 = vadd.f32 %v1191, %v1209
        %v1217 = vadd.f32 %v1192, %v1211
        %s1218 = sld [smem:[#allocation8 + $0x23]]
        %v1219 = vstv %s1218
        %v1220 = vmul.f32 %v470, %v1219
        %v1221 = vmul.f32 %v471, %v1219
        %v1222 = vmul.f32 %v472, %v1219
        %v1226 = vrot.slane %v1220, 2
        %v1227 = vrot.slane %v1221, 2
        %v1228 = vsel %vm599, %v1226, %v1227
        %v1229 = vrot.slane %v1222, 2
        %v1230 = vsel %vm599, %v1227, %v1229
        %1231 = vrot.lane.b32.xlu0 %v1228, 126
        %v1232 = vpop.permute.xlu0 %1231
        %1233 = vrot.lane.b32.xlu0 %v1230, 126
        %v1234 = vpop.permute.xlu0 %1233
        %1235 = vrot.lane.b32.xlu0 %v1229, 126
        %v1236 = vpop.permute.xlu0 %1235
        %v1240 = vadd.f32 %v1215, %v1232
        %v1241 = vadd.f32 %v1216, %v1234
        %v1242 = vadd.f32 %v1217, %v1236
        %s1243 = sld [smem:[#allocation9 + $0x3]]
        %v1244 = vstv %s1243
        %v1245 = vadd.f32 %v1240, %v1244
        %v1246 = vadd.f32 %v1241, %v1244
        %v1247 = vadd.f32 %v1242, %v1244
        %v1248 = vmax.f32 %v1245, 0.0
        %v1249 = vmax.f32 %v1246, 0.0
        %v1250 = vmax.f32 %v1247, 0.0
        %1254 = vrot.lane.b32.xlu0 %v666, 1
        %v1255 = vpop.permute.xlu0 %1254
        %1256 = vrot.lane.b32.xlu0 %v667, 1
        %v1257 = vpop.permute.xlu0 %1256
        %1258 = vrot.lane.b32.xlu0 %v668, 1
        %v1259 = vpop.permute.xlu0 %1258
        %vm1263 = vcmask 146449
        %1264 = vst.msk [vmem:[#allocation2 + $0x1] sm:$0xfe] %vm1263, %v1255
        %1265 = vst.msk [vmem:[#allocation2 + $0x9] sm:$0xff] %vm467, %v1257
        %vm1266 = vcmask 139280
        %1267 = vst.msk [vmem:[#allocation2 + $0x11] sm:$0x1] %vm1266, %v1259
        %v1268 = vld [vmem:[#allocation2] sm:$0xff]
        %v1269 = vld [vmem:[#allocation2 + $0x8] sm:$0xff]
        %v1270 = vld [vmem:[#allocation2 + $0x10] sm:$0xf]
        %1274 = vrot.lane.b32.xlu0 %v1268, 127
        %v1275 = vpop.permute.xlu0 %1274
        %1276 = vrot.lane.b32.xlu0 %v1269, 127
        %v1277 = vpop.permute.xlu0 %1276
        %1278 = vrot.lane.b32.xlu0 %v1270, 127
        %v1279 = vpop.permute.xlu0 %1278
        %v1283 = vmax.f32 %v1268, %v1275
        %v1284 = vmax.f32 %v1269, %v1277
        %v1285 = vmax.f32 %v1270, %v1279
        %v1286 = vrot.slane %v1268, 1
        %v1287 = vrot.slane %v1269, 1
        %v1288 = vsel %vm529, %v1286, %v1287
        %v1289 = vrot.slane %v1270, 1
        %v1290 = vsel %vm529, %v1287, %v1289
        %v1294 = vmax.f32 %v1283, %v1288
        %v1295 = vmax.f32 %v1284, %v1290
        %v1296 = vmax.f32 %v1285, %v1289
        %1297 = vrot.lane.b32.xlu0 %v1288, 127
        %v1298 = vpop.permute.xlu0 %1297
        %1299 = vrot.lane.b32.xlu0 %v1290, 127
        %v1300 = vpop.permute.xlu0 %1299
        %1301 = vrot.lane.b32.xlu0 %v1289, 127
        %v1302 = vpop.permute.xlu0 %1301
        %v1306 = vmax.f32 %v1294, %v1298
        %v1307 = vmax.f32 %v1295, %v1300
        %v1308 = vmax.f32 %v1296, %v1302
        %1312 = vrot.lane.b32.xlu0 %v860, 1
        %v1313 = vpop.permute.xlu0 %1312
        %1314 = vrot.lane.b32.xlu0 %v861, 1
        %v1315 = vpop.permute.xlu0 %1314
        %1316 = vrot.lane.b32.xlu0 %v862, 1
        %v1317 = vpop.permute.xlu0 %1316
        %1321 = vst.msk [vmem:[#allocation2 + $0x1] sm:$0xfe] %vm1263, %v1313
        %1322 = vst.msk [vmem:[#allocation2 + $0x9] sm:$0xff] %vm467, %v1315
        %1323 = vst.msk [vmem:[#allocation2 + $0x11] sm:$0x1] %vm1266, %v1317
        %v1324 = vld [vmem:[#allocation2] sm:$0xff]
        %v1325 = vld [vmem:[#allocation2 + $0x8] sm:$0xff]
        %v1326 = vld [vmem:[#allocation2 + $0x10] sm:$0xf]
        %1330 = vrot.lane.b32.xlu0 %v1324, 127
        %v1331 = vpop.permute.xlu0 %1330
        %1332 = vrot.lane.b32.xlu0 %v1325, 127
        %v1333 = vpop.permute.xlu0 %1332
        %1334 = vrot.lane.b32.xlu0 %v1326, 127
        %v1335 = vpop.permute.xlu0 %1334
        %v1339 = vmax.f32 %v1324, %v1331
        %v1340 = vmax.f32 %v1325, %v1333
        %v1341 = vmax.f32 %v1326, %v1335
        %v1342 = vrot.slane %v1324, 1
        %v1343 = vrot.slane %v1325, 1
        %v1344 = vsel %vm529, %v1342, %v1343
        %v1345 = vrot.slane %v1326, 1
        %v1346 = vsel %vm529, %v1343, %v1345
        %v1350 = vmax.f32 %v1339, %v1344
        %v1351 = vmax.f32 %v1340, %v1346
        %v1352 = vmax.f32 %v1341, %v1345
        %1353 = vrot.lane.b32.xlu0 %v1344, 127
        %v1354 = vpop.permute.xlu0 %1353
        %1355 = vrot.lane.b32.xlu0 %v1346, 127
        %v1356 = vpop.permute.xlu0 %1355
        %1357 = vrot.lane.b32.xlu0 %v1345, 127
        %v1358 = vpop.permute.xlu0 %1357
        %v1362 = vmax.f32 %v1350, %v1354
        %v1363 = vmax.f32 %v1351, %v1356
        %v1364 = vmax.f32 %v1352, %v1358
        %1368 = vrot.lane.b32.xlu0 %v1054, 1
        %v1369 = vpop.permute.xlu0 %1368
        %1370 = vrot.lane.b32.xlu0 %v1055, 1
        %v1371 = vpop.permute.xlu0 %1370
        %1372 = vrot.lane.b32.xlu0 %v1056, 1
        %v1373 = vpop.permute.xlu0 %1372
        %1377 = vst.msk [vmem:[#allocation2 + $0x1] sm:$0xfe] %vm1263, %v1369
        %1378 = vst.msk [vmem:[#allocation2 + $0x9] sm:$0xff] %vm467, %v1371
        %1379 = vst.msk [vmem:[#allocation2 + $0x11] sm:$0x1] %vm1266, %v1373
        %v1380 = vld [vmem:[#allocation2] sm:$0xff]
        %v1381 = vld [vmem:[#allocation2 + $0x8] sm:$0xff]
        %v1382 = vld [vmem:[#allocation2 + $0x10] sm:$0xf]
        %1386 = vrot.lane.b32.xlu0 %v1380, 127
        %v1387 = vpop.permute.xlu0 %1386
        %1388 = vrot.lane.b32.xlu0 %v1381, 127
        %v1389 = vpop.permute.xlu0 %1388
        %1390 = vrot.lane.b32.xlu0 %v1382, 127
        %v1391 = vpop.permute.xlu0 %1390
        %v1395 = vmax.f32 %v1380, %v1387
        %v1396 = vmax.f32 %v1381, %v1389
        %v1397 = vmax.f32 %v1382, %v1391
        %v1398 = vrot.slane %v1380, 1
        %v1399 = vrot.slane %v1381, 1
        %v1400 = vsel %vm529, %v1398, %v1399
        %v1401 = vrot.slane %v1382, 1
        %v1402 = vsel %vm529, %v1399, %v1401
        %v1406 = vmax.f32 %v1395, %v1400
        %v1407 = vmax.f32 %v1396, %v1402
        %v1408 = vmax.f32 %v1397, %v1401
        %1409 = vrot.lane.b32.xlu0 %v1400, 127
        %v1410 = vpop.permute.xlu0 %1409
        %1411 = vrot.lane.b32.xlu0 %v1402, 127
        %v1412 = vpop.permute.xlu0 %1411
        %1413 = vrot.lane.b32.xlu0 %v1401, 127
        %v1414 = vpop.permute.xlu0 %1413
        %v1418 = vmax.f32 %v1406, %v1410
        %v1419 = vmax.f32 %v1407, %v1412
        %v1420 = vmax.f32 %v1408, %v1414
        %1424 = vrot.lane.b32.xlu0 %v1248, 1
        %v1425 = vpop.permute.xlu0 %1424
        %1426 = vrot.lane.b32.xlu0 %v1249, 1
        %v1427 = vpop.permute.xlu0 %1426
        %1428 = vrot.lane.b32.xlu0 %v1250, 1
        %v1429 = vpop.permute.xlu0 %1428
        %1433 = vst.msk [vmem:[#allocation2 + $0x1] sm:$0xfe] %vm1263, %v1425
        %1434 = vst.msk [vmem:[#allocation2 + $0x9] sm:$0xff] %vm467, %v1427
        %1435 = vst.msk [vmem:[#allocation2 + $0x11] sm:$0x1] %vm1266, %v1429
        %v1436 = vld [vmem:[#allocation2] sm:$0xff]
        %v1437 = vld [vmem:[#allocation2 + $0x8] sm:$0xff]
        %v1438 = vld [vmem:[#allocation2 + $0x10] sm:$0xf]
        %1442 = vrot.lane.b32.xlu0 %v1436, 127
        %v1443 = vpop.permute.xlu0 %1442
        %1444 = vrot.lane.b32.xlu0 %v1437, 127
        %v1445 = vpop.permute.xlu0 %1444
        %1446 = vrot.lane.b32.xlu0 %v1438, 127
        %v1447 = vpop.permute.xlu0 %1446
        %v1451 = vmax.f32 %v1436, %v1443
        %v1452 = vmax.f32 %v1437, %v1445
        %v1453 = vmax.f32 %v1438, %v1447
        %v1454 = vrot.slane %v1436, 1
        %v1455 = vrot.slane %v1437, 1
        %v1456 = vsel %vm529, %v1454, %v1455
        %v1457 = vrot.slane %v1438, 1
        %v1458 = vsel %vm529, %v1455, %v1457
        %v1462 = vmax.f32 %v1451, %v1456
        %v1463 = vmax.f32 %v1452, %v1458
        %v1464 = vmax.f32 %v1453, %v1457
        %1465 = vrot.lane.b32.xlu0 %v1456, 127
        %v1466 = vpop.permute.xlu0 %1465
        %1467 = vrot.lane.b32.xlu0 %v1458, 127
        %v1468 = vpop.permute.xlu0 %1467
        %1469 = vrot.lane.b32.xlu0 %v1457, 127
        %v1470 = vpop.permute.xlu0 %1469
        %v1474 = vmax.f32 %v1462, %v1466
        %v1475 = vmax.f32 %v1463, %v1468
        %v1476 = vmax.f32 %v1464, %v1470
        %vm1477 = vcmask 146450
        %1478 = vst.msk [vmem:[#allocation2] sm:$0xfc] %vm1477, %v1306
        %1479 = vst.msk [vmem:[#allocation2 + $0x8] sm:$0xff] %vm467, %v1307
        %vm1480 = vcmask 140304
        %1481 = vst.msk [vmem:[#allocation2 + $0x10] sm:$0x3] %vm1480, %v1308
        %v1482 = vld [vmem:[#allocation2] sm:$0xff]
        %v1483 = vld [vmem:[#allocation2 + $0x8] sm:$0xff]
        %v1484 = vld [vmem:[#allocation2 + $0x10] sm:$0xf]
        %s1485 = sld [smem:[#allocation11]]
        %v1486 = vstv %s1485
        %v1487 = vmul.f32 %v1482, %v1486
        %v1488 = vmul.f32 %v1483, %v1486
        %v1489 = vadd.f32 %v1487, 0.0
        %v1490 = vadd.f32 %v1488, 0.0
        %s1491 = sld [smem:[#allocation11 + $0x24]]
        %v1492 = vstv %s1491
        %v1493 = vmul.f32 %v1482, %v1492
        %v1494 = vmul.f32 %v1483, %v1492
        %v1495 = vadd.f32 %v1493, 0.0
        %v1496 = vadd.f32 %v1494, 0.0
        %s1497 = sld [smem:[#allocation11 + $0x1]]
        %v1498 = vstv %s1497
        %v1499 = vmul.f32 %v1482, %v1498
        %v1500 = vmul.f32 %v1483, %v1498
        %1503 = vrot.lane.b32.xlu0 %v1499, 126
        %v1504 = vpop.permute.xlu0 %1503
        %1505 = vrot.lane.b32.xlu0 %v1500, 126
        %v1506 = vpop.permute.xlu0 %1505
        %v1509 = vadd.f32 %v1489, %v1504
        %v1510 = vadd.f32 %v1490, %v1506
        %s1511 = sld [smem:[#allocation11 + $0x25]]
        %v1512 = vstv %s1511
        %v1513 = vmul.f32 %v1482, %v1512
        %v1514 = vmul.f32 %v1483, %v1512
        %1517 = vrot.lane.b32.xlu0 %v1513, 126
        %v1518 = vpop.permute.xlu0 %1517
        %1519 = vrot.lane.b32.xlu0 %v1514, 126
        %v1520 = vpop.permute.xlu0 %1519
        %v1523 = vadd.f32 %v1495, %v1518
        %v1524 = vadd.f32 %v1496, %v1520
        %s1525 = sld [smem:[#allocation11 + $0x2]]
        %v1526 = vstv %s1525
        %v1527 = vmul.f32 %v1482, %v1526
        %v1528 = vmul.f32 %v1483, %v1526
        %1531 = vrot.lane.b32.xlu0 %v1527, 124
        %v1532 = vpop.permute.xlu0 %1531
        %1533 = vrot.lane.b32.xlu0 %v1528, 124
        %v1534 = vpop.permute.xlu0 %1533
        %v1537 = vadd.f32 %v1509, %v1532
        %v1538 = vadd.f32 %v1510, %v1534
        %s1539 = sld [smem:[#allocation11 + $0x26]]
        %v1540 = vstv %s1539
        %v1541 = vmul.f32 %v1482, %v1540
        %v1542 = vmul.f32 %v1483, %v1540
        %1545 = vrot.lane.b32.xlu0 %v1541, 124
        %v1546 = vpop.permute.xlu0 %1545
        %1547 = vrot.lane.b32.xlu0 %v1542, 124
        %v1548 = vpop.permute.xlu0 %1547
        %v1551 = vadd.f32 %v1523, %v1546
        %v1552 = vadd.f32 %v1524, %v1548
        %s1553 = sld [smem:[#allocation11 + $0x3]]
        %v1554 = vstv %s1553
        %v1555 = vmul.f32 %v1482, %v1554
        %v1556 = vmul.f32 %v1483, %v1554
        %v1557 = vmul.f32 %v1484, %v1554
        %v1561 = vrot.slane %v1555, 2
        %v1562 = vrot.slane %v1556, 2
        %v1563 = vsel %vm599, %v1561, %v1562
        %v1564 = vrot.slane %v1557, 2
        %v1565 = vsel %vm599, %v1562, %v1564
        %v1568 = vadd.f32 %v1537, %v1563
        %v1569 = vadd.f32 %v1538, %v1565
        %s1570 = sld [smem:[#allocation11 + $0x27]]
        %v1571 = vstv %s1570
        %v1572 = vmul.f32 %v1482, %v1571
        %v1573 = vmul.f32 %v1483, %v1571
        %v1574 = vmul.f32 %v1484, %v1571
        %v1578 = vrot.slane %v1572, 2
        %v1579 = vrot.slane %v1573, 2
        %v1580 = vsel %vm599, %v1578, %v1579
        %v1581 = vrot.slane %v1574, 2
        %v1582 = vsel %vm599, %v1579, %v1581
        %v1585 = vadd.f32 %v1551, %v1580
        %v1586 = vadd.f32 %v1552, %v1582
        %s1587 = sld [smem:[#allocation11 + $0x4]]
        %v1588 = vstv %s1587
        %v1589 = vmul.f32 %v1482, %v1588
        %v1590 = vmul.f32 %v1483, %v1588
        %v1591 = vmul.f32 %v1484, %v1588
        %v1595 = vrot.slane %v1589, 2
        %v1596 = vrot.slane %v1590, 2
        %v1597 = vsel %vm599, %v1595, %v1596
        %v1598 = vrot.slane %v1591, 2
        %v1599 = vsel %vm599, %v1596, %v1598
        %1600 = vrot.lane.b32.xlu0 %v1597, 126
        %v1601 = vpop.permute.xlu0 %1600
        %1602 = vrot.lane.b32.xlu0 %v1599, 126
        %v1603 = vpop.permute.xlu0 %1602
        %v1606 = vadd.f32 %v1568, %v1601
        %v1607 = vadd.f32 %v1569, %v1603
        %s1608 = sld [smem:[#allocation11 + $0x28]]
        %v1609 = vstv %s1608
        %v1610 = vmul.f32 %v1482, %v1609
        %v1611 = vmul.f32 %v1483, %v1609
        %v1612 = vmul.f32 %v1484, %v1609
        %v1616 = vrot.slane %v1610, 2
        %v1617 = vrot.slane %v1611, 2
        %v1618 = vsel %vm599, %v1616, %v1617
        %v1619 = vrot.slane %v1612, 2
        %v1620 = vsel %vm599, %v1617, %v1619
        %1621 = vrot.lane.b32.xlu0 %v1618, 126
        %v1622 = vpop.permute.xlu0 %1621
        %1623 = vrot.lane.b32.xlu0 %v1620, 126
        %v1624 = vpop.permute.xlu0 %1623
        %v1627 = vadd.f32 %v1585, %v1622
        %v1628 = vadd.f32 %v1586, %v1624
        %s1629 = sld [smem:[#allocation11 + $0x5]]
        %v1630 = vstv %s1629
        %v1631 = vmul.f32 %v1482, %v1630
        %v1632 = vmul.f32 %v1483, %v1630
        %v1633 = vmul.f32 %v1484, %v1630
        %v1637 = vrot.slane %v1631, 2
        %v1638 = vrot.slane %v1632, 2
        %v1639 = vsel %vm599, %v1637, %v1638
        %v1640 = vrot.slane %v1633, 2
        %v1641 = vsel %vm599, %v1638, %v1640
        %1642 = vrot.lane.b32.xlu0 %v1639, 124
        %v1643 = vpop.permute.xlu0 %1642
        %1644 = vrot.lane.b32.xlu0 %v1641, 124
        %v1645 = vpop.permute.xlu0 %1644
        %v1648 = vadd.f32 %v1606, %v1643
        %v1649 = vadd.f32 %v1607, %v1645
        %s1650 = sld [smem:[#allocation11 + $0x29]]
        %v1651 = vstv %s1650
        %v1652 = vmul.f32 %v1482, %v1651
        %v1653 = vmul.f32 %v1483, %v1651
        %v1654 = vmul.f32 %v1484, %v1651
        %v1658 = vrot.slane %v1652, 2
        %v1659 = vrot.slane %v1653, 2
        %v1660 = vsel %vm599, %v1658, %v1659
        %v1661 = vrot.slane %v1654, 2
        %v1662 = vsel %vm599, %v1659, %v1661
        %1663 = vrot.lane.b32.xlu0 %v1660, 124
        %v1664 = vpop.permute.xlu0 %1663
        %1665 = vrot.lane.b32.xlu0 %v1662, 124
        %v1666 = vpop.permute.xlu0 %1665
        %v1669 = vadd.f32 %v1627, %v1664
        %v1670 = vadd.f32 %v1628, %v1666
        %s1671 = sld [smem:[#allocation11 + $0x6]]
        %v1672 = vstv %s1671
        %v1673 = vmul.f32 %v1482, %v1672
        %v1674 = vmul.f32 %v1483, %v1672
        %v1675 = vmul.f32 %v1484, %v1672
        %vm1679 = vcmask 1043456
        %v1680 = vrot.slane %v1673, 4
        %v1681 = vrot.slane %v1674, 4
        %v1682 = vsel %vm1679, %v1680, %v1681
        %v1683 = vrot.slane %v1675, 4
        %v1684 = vsel %vm1679, %v1681, %v1683
        %v1687 = vadd.f32 %v1648, %v1682
        %v1688 = vadd.f32 %v1649, %v1684
        %s1689 = sld [smem:[#allocation11 + $0x2a]]
        %v1690 = vstv %s1689
        %v1691 = vmul.f32 %v1482, %v1690
        %v1692 = vmul.f32 %v1483, %v1690
        %v1693 = vmul.f32 %v1484, %v1690
        %v1697 = vrot.slane %v1691, 4
        %v1698 = vrot.slane %v1692, 4
        %v1699 = vsel %vm1679, %v1697, %v1698
        %v1700 = vrot.slane %v1693, 4
        %v1701 = vsel %vm1679, %v1698, %v1700
        %v1704 = vadd.f32 %v1669, %v1699
        %v1705 = vadd.f32 %v1670, %v1701
        %s1706 = sld [smem:[#allocation11 + $0x7]]
        %v1707 = vstv %s1706
        %v1708 = vmul.f32 %v1482, %v1707
        %v1709 = vmul.f32 %v1483, %v1707
        %v1710 = vmul.f32 %v1484, %v1707
        %v1714 = vrot.slane %v1708, 4
        %v1715 = vrot.slane %v1709, 4
        %v1716 = vsel %vm1679, %v1714, %v1715
        %v1717 = vrot.slane %v1710, 4
        %v1718 = vsel %vm1679, %v1715, %v1717
        %1719 = vrot.lane.b32.xlu0 %v1716, 126
        %v1720 = vpop.permute.xlu0 %1719
        %1721 = vrot.lane.b32.xlu0 %v1718, 126
        %v1722 = vpop.permute.xlu0 %1721
        %v1725 = vadd.f32 %v1687, %v1720
        %v1726 = vadd.f32 %v1688, %v1722
        %s1727 = sld [smem:[#allocation11 + $0x2b]]
        %v1728 = vstv %s1727
        %v1729 = vmul.f32 %v1482, %v1728
        %v1730 = vmul.f32 %v1483, %v1728
        %v1731 = vmul.f32 %v1484, %v1728
        %v1735 = vrot.slane %v1729, 4
        %v1736 = vrot.slane %v1730, 4
        %v1737 = vsel %vm1679, %v1735, %v1736
        %v1738 = vrot.slane %v1731, 4
        %v1739 = vsel %vm1679, %v1736, %v1738
        %1740 = vrot.lane.b32.xlu0 %v1737, 126
        %v1741 = vpop.permute.xlu0 %1740
        %1742 = vrot.lane.b32.xlu0 %v1739, 126
        %v1743 = vpop.permute.xlu0 %1742
        %v1746 = vadd.f32 %v1704, %v1741
        %v1747 = vadd.f32 %v1705, %v1743
        %s1748 = sld [smem:[#allocation11 + $0x8]]
        %v1749 = vstv %s1748
        %v1750 = vmul.f32 %v1482, %v1749
        %v1751 = vmul.f32 %v1483, %v1749
        %v1752 = vmul.f32 %v1484, %v1749
        %v1756 = vrot.slane %v1750, 4
        %v1757 = vrot.slane %v1751, 4
        %v1758 = vsel %vm1679, %v1756, %v1757
        %v1759 = vrot.slane %v1752, 4
        %v1760 = vsel %vm1679, %v1757, %v1759
        %1761 = vrot.lane.b32.xlu0 %v1758, 124
        %v1762 = vpop.permute.xlu0 %1761
        %1763 = vrot.lane.b32.xlu0 %v1760, 124
        %v1764 = vpop.permute.xlu0 %1763
        %v1767 = vadd.f32 %v1725, %v1762
        %v1768 = vadd.f32 %v1726, %v1764
        %s1769 = sld [smem:[#allocation11 + $0x2c]]
        %v1770 = vstv %s1769
        %v1771 = vmul.f32 %v1482, %v1770
        %v1772 = vmul.f32 %v1483, %v1770
        %v1773 = vmul.f32 %v1484, %v1770
        %v1777 = vrot.slane %v1771, 4
        %v1778 = vrot.slane %v1772, 4
        %v1779 = vsel %vm1679, %v1777, %v1778
        %v1780 = vrot.slane %v1773, 4
        %v1781 = vsel %vm1679, %v1778, %v1780
        %1782 = vrot.lane.b32.xlu0 %v1779, 124
        %v1783 = vpop.permute.xlu0 %1782
        %1784 = vrot.lane.b32.xlu0 %v1781, 124
        %v1785 = vpop.permute.xlu0 %1784
        %v1788 = vadd.f32 %v1746, %v1783
        %v1789 = vadd.f32 %v1747, %v1785
        %1790 = vst.msk [vmem:[#allocation2] sm:$0xfc] %vm1477, %v1362
        %1791 = vst.msk [vmem:[#allocation2 + $0x8] sm:$0xff] %vm467, %v1363
        %1792 = vst.msk [vmem:[#allocation2 + $0x10] sm:$0x3] %vm1480, %v1364
        %v1793 = vld [vmem:[#allocation2] sm:$0xff]
        %v1794 = vld [vmem:[#allocation2 + $0x8] sm:$0xff]
        %v1795 = vld [vmem:[#allocation2 + $0x10] sm:$0xf]
        %s1796 = sld [smem:[#allocation11 + $0x9]]
        %v1797 = vstv %s1796
        %v1798 = vmul.f32 %v1793, %v1797
        %v1799 = vmul.f32 %v1794, %v1797
        %v1800 = vadd.f32 %v1767, %v1798
        %v1801 = vadd.f32 %v1768, %v1799
        %s1802 = sld [smem:[#allocation11 + $0x2d]]
        %v1803 = vstv %s1802
        %v1804 = vmul.f32 %v1793, %v1803
        %v1805 = vmul.f32 %v1794, %v1803
        %v1806 = vadd.f32 %v1788, %v1804
        %v1807 = vadd.f32 %v1789, %v1805
        %s1808 = sld [smem:[#allocation11 + $0xa]]
        %v1809 = vstv %s1808
        %v1810 = vmul.f32 %v1793, %v1809
        %v1811 = vmul.f32 %v1794, %v1809
        %1814 = vrot.lane.b32.xlu0 %v1810, 126
        %v1815 = vpop.permute.xlu0 %1814
        %1816 = vrot.lane.b32.xlu0 %v1811, 126
        %v1817 = vpop.permute.xlu0 %1816
        %v1820 = vadd.f32 %v1800, %v1815
        %v1821 = vadd.f32 %v1801, %v1817
        %s1822 = sld [smem:[#allocation11 + $0x2e]]
        %v1823 = vstv %s1822
        %v1824 = vmul.f32 %v1793, %v1823
        %v1825 = vmul.f32 %v1794, %v1823
        %1828 = vrot.lane.b32.xlu0 %v1824, 126
        %v1829 = vpop.permute.xlu0 %1828
        %1830 = vrot.lane.b32.xlu0 %v1825, 126
        %v1831 = vpop.permute.xlu0 %1830
        %v1834 = vadd.f32 %v1806, %v1829
        %v1835 = vadd.f32 %v1807, %v1831
        %s1836 = sld [smem:[#allocation11 + $0xb]]
        %v1837 = vstv %s1836
        %v1838 = vmul.f32 %v1793, %v1837
        %v1839 = vmul.f32 %v1794, %v1837
        %1842 = vrot.lane.b32.xlu0 %v1838, 124
        %v1843 = vpop.permute.xlu0 %1842
        %1844 = vrot.lane.b32.xlu0 %v1839, 124
        %v1845 = vpop.permute.xlu0 %1844
        %v1848 = vadd.f32 %v1820, %v1843
        %v1849 = vadd.f32 %v1821, %v1845
        %s1850 = sld [smem:[#allocation11 + $0x2f]]
        %v1851 = vstv %s1850
        %v1852 = vmul.f32 %v1793, %v1851
        %v1853 = vmul.f32 %v1794, %v1851
        %1856 = vrot.lane.b32.xlu0 %v1852, 124
        %v1857 = vpop.permute.xlu0 %1856
        %1858 = vrot.lane.b32.xlu0 %v1853, 124
        %v1859 = vpop.permute.xlu0 %1858
        %v1862 = vadd.f32 %v1834, %v1857
        %v1863 = vadd.f32 %v1835, %v1859
        %s1864 = sld [smem:[#allocation11 + $0xc]]
        %v1865 = vstv %s1864
        %v1866 = vmul.f32 %v1793, %v1865
        %v1867 = vmul.f32 %v1794, %v1865
        %v1868 = vmul.f32 %v1795, %v1865
        %v1872 = vrot.slane %v1866, 2
        %v1873 = vrot.slane %v1867, 2
        %v1874 = vsel %vm599, %v1872, %v1873
        %v1875 = vrot.slane %v1868, 2
        %v1876 = vsel %vm599, %v1873, %v1875
        %v1879 = vadd.f32 %v1848, %v1874
        %v1880 = vadd.f32 %v1849, %v1876
        %s1881 = sld [smem:[#allocation11 + $0x30]]
        %v1882 = vstv %s1881
        %v1883 = vmul.f32 %v1793, %v1882
        %v1884 = vmul.f32 %v1794, %v1882
        %v1885 = vmul.f32 %v1795, %v1882
        %v1889 = vrot.slane %v1883, 2
        %v1890 = vrot.slane %v1884, 2
        %v1891 = vsel %vm599, %v1889, %v1890
        %v1892 = vrot.slane %v1885, 2
        %v1893 = vsel %vm599, %v1890, %v1892
        %v1896 = vadd.f32 %v1862, %v1891
        %v1897 = vadd.f32 %v1863, %v1893
        %s1898 = sld [smem:[#allocation11 + $0xd]]
        %v1899 = vstv %s1898
        %v1900 = vmul.f32 %v1793, %v1899
        %v1901 = vmul.f32 %v1794, %v1899
        %v1902 = vmul.f32 %v1795, %v1899
        %v1906 = vrot.slane %v1900, 2
        %v1907 = vrot.slane %v1901, 2
        %v1908 = vsel %vm599, %v1906, %v1907
        %v1909 = vrot.slane %v1902, 2
        %v1910 = vsel %vm599, %v1907, %v1909
        %1911 = vrot.lane.b32.xlu0 %v1908, 126
        %v1912 = vpop.permute.xlu0 %1911
        %1913 = vrot.lane.b32.xlu0 %v1910, 126
        %v1914 = vpop.permute.xlu0 %1913
        %v1917 = vadd.f32 %v1879, %v1912
        %v1918 = vadd.f32 %v1880, %v1914
        %s1919 = sld [smem:[#allocation11 + $0x31]]
        %v1920 = vstv %s1919
        %v1921 = vmul.f32 %v1793, %v1920
        %v1922 = vmul.f32 %v1794, %v1920
        %v1923 = vmul.f32 %v1795, %v1920
        %v1927 = vrot.slane %v1921, 2
        %v1928 = vrot.slane %v1922, 2
        %v1929 = vsel %vm599, %v1927, %v1928
        %v1930 = vrot.slane %v1923, 2
        %v1931 = vsel %vm599, %v1928, %v1930
        %1932 = vrot.lane.b32.xlu0 %v1929, 126
        %v1933 = vpop.permute.xlu0 %1932
        %1934 = vrot.lane.b32.xlu0 %v1931, 126
        %v1935 = vpop.permute.xlu0 %1934
        %v1938 = vadd.f32 %v1896, %v1933
        %v1939 = vadd.f32 %v1897, %v1935
        %s1940 = sld [smem:[#allocation11 + $0xe]]
        %v1941 = vstv %s1940
        %v1942 = vmul.f32 %v1793, %v1941
        %v1943 = vmul.f32 %v1794, %v1941
        %v1944 = vmul.f32 %v1795, %v1941
        %v1948 = vrot.slane %v1942, 2
        %v1949 = vrot.slane %v1943, 2
        %v1950 = vsel %vm599, %v1948, %v1949
        %v1951 = vrot.slane %v1944, 2
        %v1952 = vsel %vm599, %v1949, %v1951
        %1953 = vrot.lane.b32.xlu0 %v1950, 124
        %v1954 = vpop.permute.xlu0 %1953
        %1955 = vrot.lane.b32.xlu0 %v1952, 124
        %v1956 = vpop.permute.xlu0 %1955
        %v1959 = vadd.f32 %v1917, %v1954
        %v1960 = vadd.f32 %v1918, %v1956
        %s1961 = sld [smem:[#allocation11 + $0x32]]
        %v1962 = vstv %s1961
        %v1963 = vmul.f32 %v1793, %v1962
        %v1964 = vmul.f32 %v1794, %v1962
        %v1965 = vmul.f32 %v1795, %v1962
        %v1969 = vrot.slane %v1963, 2
        %v1970 = vrot.slane %v1964, 2
        %v1971 = vsel %vm599, %v1969, %v1970
        %v1972 = vrot.slane %v1965, 2
        %v1973 = vsel %vm599, %v1970, %v1972
        %1974 = vrot.lane.b32.xlu0 %v1971, 124
        %v1975 = vpop.permute.xlu0 %1974
        %1976 = vrot.lane.b32.xlu0 %v1973, 124
        %v1977 = vpop.permute.xlu0 %1976
        %v1980 = vadd.f32 %v1938, %v1975
        %v1981 = vadd.f32 %v1939, %v1977
        %s1982 = sld [smem:[#allocation11 + $0xf]]
        %v1983 = vstv %s1982
        %v1984 = vmul.f32 %v1793, %v1983
        %v1985 = vmul.f32 %v1794, %v1983
        %v1986 = vmul.f32 %v1795, %v1983
        %v1990 = vrot.slane %v1984, 4
        %v1991 = vrot.slane %v1985, 4
        %v1992 = vsel %vm1679, %v1990, %v1991
        %v1993 = vrot.slane %v1986, 4
        %v1994 = vsel %vm1679, %v1991, %v1993
        %v1997 = vadd.f32 %v1959, %v1992
        %v1998 = vadd.f32 %v1960, %v1994
        %s1999 = sld [smem:[#allocation11 + $0x33]]
        %v2000 = vstv %s1999
        %v2001 = vmul.f32 %v1793, %v2000
        %v2002 = vmul.f32 %v1794, %v2000
        %v2003 = vmul.f32 %v1795, %v2000
        %v2007 = vrot.slane %v2001, 4
        %v2008 = vrot.slane %v2002, 4
        %v2009 = vsel %vm1679, %v2007, %v2008
        %v2010 = vrot.slane %v2003, 4
        %v2011 = vsel %vm1679, %v2008, %v2010
        %v2014 = vadd.f32 %v1980, %v2009
        %v2015 = vadd.f32 %v1981, %v2011
        %s2016 = sld [smem:[#allocation11 + $0x10]]
        %v2017 = vstv %s2016
        %v2018 = vmul.f32 %v1793, %v2017
        %v2019 = vmul.f32 %v1794, %v2017
        %v2020 = vmul.f32 %v1795, %v2017
        %v2024 = vrot.slane %v2018, 4
        %v2025 = vrot.slane %v2019, 4
        %v2026 = vsel %vm1679, %v2024, %v2025
        %v2027 = vrot.slane %v2020, 4
        %v2028 = vsel %vm1679, %v2025, %v2027
        %2029 = vrot.lane.b32.xlu0 %v2026, 126
        %v2030 = vpop.permute.xlu0 %2029
        %2031 = vrot.lane.b32.xlu0 %v2028, 126
        %v2032 = vpop.permute.xlu0 %2031
        %v2035 = vadd.f32 %v1997, %v2030
        %v2036 = vadd.f32 %v1998, %v2032
        %s2037 = sld [smem:[#allocation11 + $0x34]]
        %v2038 = vstv %s2037
        %v2039 = vmul.f32 %v1793, %v2038
        %v2040 = vmul.f32 %v1794, %v2038
        %v2041 = vmul.f32 %v1795, %v2038
        %v2045 = vrot.slane %v2039, 4
        %v2046 = vrot.slane %v2040, 4
        %v2047 = vsel %vm1679, %v2045, %v2046
        %v2048 = vrot.slane %v2041, 4
        %v2049 = vsel %vm1679, %v2046, %v2048
        %2050 = vrot.lane.b32.xlu0 %v2047, 126
        %v2051 = vpop.permute.xlu0 %2050
        %2052 = vrot.lane.b32.xlu0 %v2049, 126
        %v2053 = vpop.permute.xlu0 %2052
        %v2056 = vadd.f32 %v2014, %v2051
        %v2057 = vadd.f32 %v2015, %v2053
        %s2058 = sld [smem:[#allocation11 + $0x11]]
        %v2059 = vstv %s2058
        %v2060 = vmul.f32 %v1793, %v2059
        %v2061 = vmul.f32 %v1794, %v2059
        %v2062 = vmul.f32 %v1795, %v2059
        %v2066 = vrot.slane %v2060, 4
        %v2067 = vrot.slane %v2061, 4
        %v2068 = vsel %vm1679, %v2066, %v2067
        %v2069 = vrot.slane %v2062, 4
        %v2070 = vsel %vm1679, %v2067, %v2069
        %2071 = vrot.lane.b32.xlu0 %v2068, 124
        %v2072 = vpop.permute.xlu0 %2071
        %2073 = vrot.lane.b32.xlu0 %v2070, 124
        %v2074 = vpop.permute.xlu0 %2073
        %v2077 = vadd.f32 %v2035, %v2072
        %v2078 = vadd.f32 %v2036, %v2074
        %s2079 = sld [smem:[#allocation11 + $0x35]]
        %v2080 = vstv %s2079
        %v2081 = vmul.f32 %v1793, %v2080
        %v2082 = vmul.f32 %v1794, %v2080
        %v2083 = vmul.f32 %v1795, %v2080
        %v2087 = vrot.slane %v2081, 4
        %v2088 = vrot.slane %v2082, 4
        %v2089 = vsel %vm1679, %v2087, %v2088
        %v2090 = vrot.slane %v2083, 4
        %v2091 = vsel %vm1679, %v2088, %v2090
        %2092 = vrot.lane.b32.xlu0 %v2089, 124
        %v2093 = vpop.permute.xlu0 %2092
        %2094 = vrot.lane.b32.xlu0 %v2091, 124
        %v2095 = vpop.permute.xlu0 %2094
        %v2098 = vadd.f32 %v2056, %v2093
        %v2099 = vadd.f32 %v2057, %v2095
        %2100 = vst.msk [vmem:[#allocation2] sm:$0xfc] %vm1477, %v1418
        %2101 = vst.msk [vmem:[#allocation2 + $0x8] sm:$0xff] %vm467, %v1419
        %2102 = vst.msk [vmem:[#allocation2 + $0x10] sm:$0x3] %vm1480, %v1420
        %v2103 = vld [vmem:[#allocation2] sm:$0xff]
        %v2104 = vld [vmem:[#allocation2 + $0x8] sm:$0xff]
        %v2105 = vld [vmem:[#allocation2 + $0x10] sm:$0xf]
        %s2106 = sld [smem:[#allocation11 + $0x12]]
        %v2107 = vstv %s2106
        %v2108 = vmul.f32 %v2103, %v2107
        %v2109 = vmul.f32 %v2104, %v2107
        %v2110 = vadd.f32 %v2077, %v2108
        %v2111 = vadd.f32 %v2078, %v2109
        %s2112 = sld [smem:[#allocation11 + $0x36]]
        %v2113 = vstv %s2112
        %v2114 = vmul.f32 %v2103, %v2113
        %v2115 = vmul.f32 %v2104, %v2113
        %v2116 = vadd.f32 %v2098, %v2114
        %v2117 = vadd.f32 %v2099, %v2115
        %s2118 = sld [smem:[#allocation11 + $0x13]]
        %v2119 = vstv %s2118
        %v2120 = vmul.f32 %v2103, %v2119
        %v2121 = vmul.f32 %v2104, %v2119
        %2124 = vrot.lane.b32.xlu0 %v2120, 126
        %v2125 = vpop.permute.xlu0 %2124
        %2126 = vrot.lane.b32.xlu0 %v2121, 126
        %v2127 = vpop.permute.xlu0 %2126
        %v2130 = vadd.f32 %v2110, %v2125
        %v2131 = vadd.f32 %v2111, %v2127
        %s2132 = sld [smem:[#allocation11 + $0x37]]
        %v2133 = vstv %s2132
        %v2134 = vmul.f32 %v2103, %v2133
        %v2135 = vmul.f32 %v2104, %v2133
        %2138 = vrot.lane.b32.xlu0 %v2134, 126
        %v2139 = vpop.permute.xlu0 %2138
        %2140 = vrot.lane.b32.xlu0 %v2135, 126
        %v2141 = vpop.permute.xlu0 %2140
        %v2144 = vadd.f32 %v2116, %v2139
        %v2145 = vadd.f32 %v2117, %v2141
        %s2146 = sld [smem:[#allocation11 + $0x14]]
        %v2147 = vstv %s2146
        %v2148 = vmul.f32 %v2103, %v2147
        %v2149 = vmul.f32 %v2104, %v2147
        %2152 = vrot.lane.b32.xlu0 %v2148, 124
        %v2153 = vpop.permute.xlu0 %2152
        %2154 = vrot.lane.b32.xlu0 %v2149, 124
        %v2155 = vpop.permute.xlu0 %2154
        %v2158 = vadd.f32 %v2130, %v2153
        %v2159 = vadd.f32 %v2131, %v2155
        %s2160 = sld [smem:[#allocation11 + $0x38]]
        %v2161 = vstv %s2160
        %v2162 = vmul.f32 %v2103, %v2161
        %v2163 = vmul.f32 %v2104, %v2161
        %2166 = vrot.lane.b32.xlu0 %v2162, 124
        %v2167 = vpop.permute.xlu0 %2166
        %2168 = vrot.lane.b32.xlu0 %v2163, 124
        %v2169 = vpop.permute.xlu0 %2168
        %v2172 = vadd.f32 %v2144, %v2167
        %v2173 = vadd.f32 %v2145, %v2169
        %s2174 = sld [smem:[#allocation11 + $0x15]]
        %v2175 = vstv %s2174
        %v2176 = vmul.f32 %v2103, %v2175
        %v2177 = vmul.f32 %v2104, %v2175
        %v2178 = vmul.f32 %v2105, %v2175
        %v2182 = vrot.slane %v2176, 2
        %v2183 = vrot.slane %v2177, 2
        %v2184 = vsel %vm599, %v2182, %v2183
        %v2185 = vrot.slane %v2178, 2
        %v2186 = vsel %vm599, %v2183, %v2185
        %v2189 = vadd.f32 %v2158, %v2184
        %v2190 = vadd.f32 %v2159, %v2186
        %s2191 = sld [smem:[#allocation11 + $0x39]]
        %v2192 = vstv %s2191
        %v2193 = vmul.f32 %v2103, %v2192
        %v2194 = vmul.f32 %v2104, %v2192
        %v2195 = vmul.f32 %v2105, %v2192
        %v2199 = vrot.slane %v2193, 2
        %v2200 = vrot.slane %v2194, 2
        %v2201 = vsel %vm599, %v2199, %v2200
        %v2202 = vrot.slane %v2195, 2
        %v2203 = vsel %vm599, %v2200, %v2202
        %v2206 = vadd.f32 %v2172, %v2201
        %v2207 = vadd.f32 %v2173, %v2203
        %s2208 = sld [smem:[#allocation11 + $0x16]]
        %v2209 = vstv %s2208
        %v2210 = vmul.f32 %v2103, %v2209
        %v2211 = vmul.f32 %v2104, %v2209
        %v2212 = vmul.f32 %v2105, %v2209
        %v2216 = vrot.slane %v2210, 2
        %v2217 = vrot.slane %v2211, 2
        %v2218 = vsel %vm599, %v2216, %v2217
        %v2219 = vrot.slane %v2212, 2
        %v2220 = vsel %vm599, %v2217, %v2219
        %2221 = vrot.lane.b32.xlu0 %v2218, 126
        %v2222 = vpop.permute.xlu0 %2221
        %2223 = vrot.lane.b32.xlu0 %v2220, 126
        %v2224 = vpop.permute.xlu0 %2223
        %v2227 = vadd.f32 %v2189, %v2222
        %v2228 = vadd.f32 %v2190, %v2224
        %s2229 = sld [smem:[#allocation11 + $0x3a]]
        %v2230 = vstv %s2229
        %v2231 = vmul.f32 %v2103, %v2230
        %v2232 = vmul.f32 %v2104, %v2230
        %v2233 = vmul.f32 %v2105, %v2230
        %v2237 = vrot.slane %v2231, 2
        %v2238 = vrot.slane %v2232, 2
        %v2239 = vsel %vm599, %v2237, %v2238
        %v2240 = vrot.slane %v2233, 2
        %v2241 = vsel %vm599, %v2238, %v2240
        %2242 = vrot.lane.b32.xlu0 %v2239, 126
        %v2243 = vpop.permute.xlu0 %2242
        %2244 = vrot.lane.b32.xlu0 %v2241, 126
        %v2245 = vpop.permute.xlu0 %2244
        %v2248 = vadd.f32 %v2206, %v2243
        %v2249 = vadd.f32 %v2207, %v2245
        %s2250 = sld [smem:[#allocation11 + $0x17]]
        %v2251 = vstv %s2250
        %v2252 = vmul.f32 %v2103, %v2251
        %v2253 = vmul.f32 %v2104, %v2251
        %v2254 = vmul.f32 %v2105, %v2251
        %v2258 = vrot.slane %v2252, 2
        %v2259 = vrot.slane %v2253, 2
        %v2260 = vsel %vm599, %v2258, %v2259
        %v2261 = vrot.slane %v2254, 2
        %v2262 = vsel %vm599, %v2259, %v2261
        %2263 = vrot.lane.b32.xlu0 %v2260, 124
        %v2264 = vpop.permute.xlu0 %2263
        %2265 = vrot.lane.b32.xlu0 %v2262, 124
        %v2266 = vpop.permute.xlu0 %2265
        %v2269 = vadd.f32 %v2227, %v2264
        %v2270 = vadd.f32 %v2228, %v2266
        %s2271 = sld [smem:[#allocation11 + $0x3b]]
        %v2272 = vstv %s2271
        %v2273 = vmul.f32 %v2103, %v2272
        %v2274 = vmul.f32 %v2104, %v2272
        %v2275 = vmul.f32 %v2105, %v2272
        %v2279 = vrot.slane %v2273, 2
        %v2280 = vrot.slane %v2274, 2
        %v2281 = vsel %vm599, %v2279, %v2280
        %v2282 = vrot.slane %v2275, 2
        %v2283 = vsel %vm599, %v2280, %v2282
        %2284 = vrot.lane.b32.xlu0 %v2281, 124
        %v2285 = vpop.permute.xlu0 %2284
        %2286 = vrot.lane.b32.xlu0 %v2283, 124
        %v2287 = vpop.permute.xlu0 %2286
        %v2290 = vadd.f32 %v2248, %v2285
        %v2291 = vadd.f32 %v2249, %v2287
        %s2292 = sld [smem:[#allocation11 + $0x18]]
        %v2293 = vstv %s2292
        %v2294 = vmul.f32 %v2103, %v2293
        %v2295 = vmul.f32 %v2104, %v2293
        %v2296 = vmul.f32 %v2105, %v2293
        %v2300 = vrot.slane %v2294, 4
        %v2301 = vrot.slane %v2295, 4
        %v2302 = vsel %vm1679, %v2300, %v2301
        %v2303 = vrot.slane %v2296, 4
        %v2304 = vsel %vm1679, %v2301, %v2303
        %v2307 = vadd.f32 %v2269, %v2302
        %v2308 = vadd.f32 %v2270, %v2304
        %s2309 = sld [smem:[#allocation11 + $0x3c]]
        %v2310 = vstv %s2309
        %v2311 = vmul.f32 %v2103, %v2310
        %v2312 = vmul.f32 %v2104, %v2310
        %v2313 = vmul.f32 %v2105, %v2310
        %v2317 = vrot.slane %v2311, 4
        %v2318 = vrot.slane %v2312, 4
        %v2319 = vsel %vm1679, %v2317, %v2318
        %v2320 = vrot.slane %v2313, 4
        %v2321 = vsel %vm1679, %v2318, %v2320
        %v2324 = vadd.f32 %v2290, %v2319
        %v2325 = vadd.f32 %v2291, %v2321
        %s2326 = sld [smem:[#allocation11 + $0x19]]
        %v2327 = vstv %s2326
        %v2328 = vmul.f32 %v2103, %v2327
        %v2329 = vmul.f32 %v2104, %v2327
        %v2330 = vmul.f32 %v2105, %v2327
        %v2334 = vrot.slane %v2328, 4
        %v2335 = vrot.slane %v2329, 4
        %v2336 = vsel %vm1679, %v2334, %v2335
        %v2337 = vrot.slane %v2330, 4
        %v2338 = vsel %vm1679, %v2335, %v2337
        %2339 = vrot.lane.b32.xlu0 %v2336, 126
        %v2340 = vpop.permute.xlu0 %2339
        %2341 = vrot.lane.b32.xlu0 %v2338, 126
        %v2342 = vpop.permute.xlu0 %2341
        %v2345 = vadd.f32 %v2307, %v2340
        %v2346 = vadd.f32 %v2308, %v2342
        %s2347 = sld [smem:[#allocation11 + $0x3d]]
        %v2348 = vstv %s2347
        %v2349 = vmul.f32 %v2103, %v2348
        %v2350 = vmul.f32 %v2104, %v2348
        %v2351 = vmul.f32 %v2105, %v2348
        %v2355 = vrot.slane %v2349, 4
        %v2356 = vrot.slane %v2350, 4
        %v2357 = vsel %vm1679, %v2355, %v2356
        %v2358 = vrot.slane %v2351, 4
        %v2359 = vsel %vm1679, %v2356, %v2358
        %2360 = vrot.lane.b32.xlu0 %v2357, 126
        %v2361 = vpop.permute.xlu0 %2360
        %2362 = vrot.lane.b32.xlu0 %v2359, 126
        %v2363 = vpop.permute.xlu0 %2362
        %v2366 = vadd.f32 %v2324, %v2361
        %v2367 = vadd.f32 %v2325, %v2363
        %s2368 = sld [smem:[#allocation11 + $0x1a]]
        %v2369 = vstv %s2368
        %v2370 = vmul.f32 %v2103, %v2369
        %v2371 = vmul.f32 %v2104, %v2369
        %v2372 = vmul.f32 %v2105, %v2369
        %v2376 = vrot.slane %v2370, 4
        %v2377 = vrot.slane %v2371, 4
        %v2378 = vsel %vm1679, %v2376, %v2377
        %v2379 = vrot.slane %v2372, 4
        %v2380 = vsel %vm1679, %v2377, %v2379
        %2381 = vrot.lane.b32.xlu0 %v2378, 124
        %v2382 = vpop.permute.xlu0 %2381
        %2383 = vrot.lane.b32.xlu0 %v2380, 124
        %v2384 = vpop.permute.xlu0 %2383
        %v2387 = vadd.f32 %v2345, %v2382
        %v2388 = vadd.f32 %v2346, %v2384
        %s2389 = sld [smem:[#allocation11 + $0x3e]]
        %v2390 = vstv %s2389
        %v2391 = vmul.f32 %v2103, %v2390
        %v2392 = vmul.f32 %v2104, %v2390
        %v2393 = vmul.f32 %v2105, %v2390
        %v2397 = vrot.slane %v2391, 4
        %v2398 = vrot.slane %v2392, 4
        %v2399 = vsel %vm1679, %v2397, %v2398
        %v2400 = vrot.slane %v2393, 4
        %v2401 = vsel %vm1679, %v2398, %v2400
        %2402 = vrot.lane.b32.xlu0 %v2399, 124
        %v2403 = vpop.permute.xlu0 %2402
        %2404 = vrot.lane.b32.xlu0 %v2401, 124
        %v2405 = vpop.permute.xlu0 %2404
        %v2408 = vadd.f32 %v2366, %v2403
        %v2409 = vadd.f32 %v2367, %v2405
        %2410 = vst.msk [vmem:[#allocation2] sm:$0xfc] %vm1477, %v1474
        %2411 = vst.msk [vmem:[#allocation2 + $0x8] sm:$0xff] %vm467, %v1475
        %2412 = vst.msk [vmem:[#allocation2 + $0x10] sm:$0x3] %vm1480, %v1476
        %v2413 = vld [vmem:[#allocation2] sm:$0xff]
        %v2414 = vld [vmem:[#allocation2 + $0x8] sm:$0xff]
        %v2415 = vld [vmem:[#allocation2 + $0x10] sm:$0xf]
        %s2416 = sld [smem:[#allocation11 + $0x1b]]
        %v2417 = vstv %s2416
        %v2418 = vmul.f32 %v2413, %v2417
        %v2419 = vmul.f32 %v2414, %v2417
        %v2420 = vadd.f32 %v2387, %v2418
        %v2421 = vadd.f32 %v2388, %v2419
        %s2422 = sld [smem:[#allocation11 + $0x3f]]
        %v2423 = vstv %s2422
        %v2424 = vmul.f32 %v2413, %v2423
        %v2425 = vmul.f32 %v2414, %v2423
        %v2426 = vadd.f32 %v2408, %v2424
        %v2427 = vadd.f32 %v2409, %v2425
        %s2428 = sld [smem:[#allocation11 + $0x1c]]
        %v2429 = vstv %s2428
        %v2430 = vmul.f32 %v2413, %v2429
        %v2431 = vmul.f32 %v2414, %v2429
        %2434 = vrot.lane.b32.xlu0 %v2430, 126
        %v2435 = vpop.permute.xlu0 %2434
        %2436 = vrot.lane.b32.xlu0 %v2431, 126
        %v2437 = vpop.permute.xlu0 %2436
        %v2440 = vadd.f32 %v2420, %v2435
        %v2441 = vadd.f32 %v2421, %v2437
        %s2442 = sld [smem:[#allocation11 + $0x40]]
        %v2443 = vstv %s2442
        %v2444 = vmul.f32 %v2413, %v2443
        %v2445 = vmul.f32 %v2414, %v2443
        %2448 = vrot.lane.b32.xlu0 %v2444, 126
        %v2449 = vpop.permute.xlu0 %2448
        %2450 = vrot.lane.b32.xlu0 %v2445, 126
        %v2451 = vpop.permute.xlu0 %2450
        %v2454 = vadd.f32 %v2426, %v2449
        %v2455 = vadd.f32 %v2427, %v2451
        %s2456 = sld [smem:[#allocation11 + $0x1d]]
        %v2457 = vstv %s2456
        %v2458 = vmul.f32 %v2413, %v2457
        %v2459 = vmul.f32 %v2414, %v2457
        %2462 = vrot.lane.b32.xlu0 %v2458, 124
        %v2463 = vpop.permute.xlu0 %2462
        %2464 = vrot.lane.b32.xlu0 %v2459, 124
        %v2465 = vpop.permute.xlu0 %2464
        %v2468 = vadd.f32 %v2440, %v2463
        %v2469 = vadd.f32 %v2441, %v2465
        %s2470 = sld [smem:[#allocation11 + $0x41]]
        %v2471 = vstv %s2470
        %v2472 = vmul.f32 %v2413, %v2471
        %v2473 = vmul.f32 %v2414, %v2471
        %2476 = vrot.lane.b32.xlu0 %v2472, 124
        %v2477 = vpop.permute.xlu0 %2476
        %2478 = vrot.lane.b32.xlu0 %v2473, 124
        %v2479 = vpop.permute.xlu0 %2478
        %v2482 = vadd.f32 %v2454, %v2477
        %v2483 = vadd.f32 %v2455, %v2479
        %s2484 = sld [smem:[#allocation11 + $0x1e]]
        %v2485 = vstv %s2484
        %v2486 = vmul.f32 %v2413, %v2485
        %v2487 = vmul.f32 %v2414, %v2485
        %v2488 = vmul.f32 %v2415, %v2485
        %v2492 = vrot.slane %v2486, 2
        %v2493 = vrot.slane %v2487, 2
        %v2494 = vsel %vm599, %v2492, %v2493
        %v2495 = vrot.slane %v2488, 2
        %v2496 = vsel %vm599, %v2493, %v2495
        %v2499 = vadd.f32 %v2468, %v2494
        %v2500 = vadd.f32 %v2469, %v2496
        %s2501 = sld [smem:[#allocation11 + $0x42]]
        %v2502 = vstv %s2501
        %v2503 = vmul.f32 %v2413, %v2502
        %v2504 = vmul.f32 %v2414, %v2502
        %v2505 = vmul.f32 %v2415, %v2502
        %v2509 = vrot.slane %v2503, 2
        %v2510 = vrot.slane %v2504, 2
        %v2511 = vsel %vm599, %v2509, %v2510
        %v2512 = vrot.slane %v2505, 2
        %v2513 = vsel %vm599, %v2510, %v2512
        %v2516 = vadd.f32 %v2482, %v2511
        %v2517 = vadd.f32 %v2483, %v2513
        %s2518 = sld [smem:[#allocation11 + $0x1f]]
        %v2519 = vstv %s2518
        %v2520 = vmul.f32 %v2413, %v2519
        %v2521 = vmul.f32 %v2414, %v2519
        %v2522 = vmul.f32 %v2415, %v2519
        %v2526 = vrot.slane %v2520, 2
        %v2527 = vrot.slane %v2521, 2
        %v2528 = vsel %vm599, %v2526, %v2527
        %v2529 = vrot.slane %v2522, 2
        %v2530 = vsel %vm599, %v2527, %v2529
        %2531 = vrot.lane.b32.xlu0 %v2528, 126
        %v2532 = vpop.permute.xlu0 %2531
        %2533 = vrot.lane.b32.xlu0 %v2530, 126
        %v2534 = vpop.permute.xlu0 %2533
        %v2537 = vadd.f32 %v2499, %v2532
        %v2538 = vadd.f32 %v2500, %v2534
        %s2539 = sld [smem:[#allocation11 + $0x43]]
        %v2540 = vstv %s2539
        %v2541 = vmul.f32 %v2413, %v2540
        %v2542 = vmul.f32 %v2414, %v2540
        %v2543 = vmul.f32 %v2415, %v2540
        %v2547 = vrot.slane %v2541, 2
        %v2548 = vrot.slane %v2542, 2
        %v2549 = vsel %vm599, %v2547, %v2548
        %v2550 = vrot.slane %v2543, 2
        %v2551 = vsel %vm599, %v2548, %v2550
        %2552 = vrot.lane.b32.xlu0 %v2549, 126
        %v2553 = vpop.permute.xlu0 %2552
        %2554 = vrot.lane.b32.xlu0 %v2551, 126
        %v2555 = vpop.permute.xlu0 %2554
        %v2558 = vadd.f32 %v2516, %v2553
        %v2559 = vadd.f32 %v2517, %v2555
        %s2560 = sld [smem:[#allocation11 + $0x20]]
        %v2561 = vstv %s2560
        %v2562 = vmul.f32 %v2413, %v2561
        %v2563 = vmul.f32 %v2414, %v2561
        %v2564 = vmul.f32 %v2415, %v2561
        %v2568 = vrot.slane %v2562, 2
        %v2569 = vrot.slane %v2563, 2
        %v2570 = vsel %vm599, %v2568, %v2569
        %v2571 = vrot.slane %v2564, 2
        %v2572 = vsel %vm599, %v2569, %v2571
        %2573 = vrot.lane.b32.xlu0 %v2570, 124
        %v2574 = vpop.permute.xlu0 %2573
        %2575 = vrot.lane.b32.xlu0 %v2572, 124
        %v2576 = vpop.permute.xlu0 %2575
        %v2579 = vadd.f32 %v2537, %v2574
        %v2580 = vadd.f32 %v2538, %v2576
        %s2581 = sld [smem:[#allocation11 + $0x44]]
        %v2582 = vstv %s2581
        %v2583 = vmul.f32 %v2413, %v2582
        %v2584 = vmul.f32 %v2414, %v2582
        %v2585 = vmul.f32 %v2415, %v2582
        %v2589 = vrot.slane %v2583, 2
        %v2590 = vrot.slane %v2584, 2
        %v2591 = vsel %vm599, %v2589, %v2590
        %v2592 = vrot.slane %v2585, 2
        %v2593 = vsel %vm599, %v2590, %v2592
        %2594 = vrot.lane.b32.xlu0 %v2591, 124
        %v2595 = vpop.permute.xlu0 %2594
        %2596 = vrot.lane.b32.xlu0 %v2593, 124
        %v2597 = vpop.permute.xlu0 %2596
        %v2600 = vadd.f32 %v2558, %v2595
        %v2601 = vadd.f32 %v2559, %v2597
        %s2602 = sld [smem:[#allocation11 + $0x21]]
        %v2603 = vstv %s2602
        %v2604 = vmul.f32 %v2413, %v2603
        %v2605 = vmul.f32 %v2414, %v2603
        %v2606 = vmul.f32 %v2415, %v2603
        %v2610 = vrot.slane %v2604, 4
        %v2611 = vrot.slane %v2605, 4
        %v2612 = vsel %vm1679, %v2610, %v2611
        %v2613 = vrot.slane %v2606, 4
        %v2614 = vsel %vm1679, %v2611, %v2613
        %v2617 = vadd.f32 %v2579, %v2612
        %v2618 = vadd.f32 %v2580, %v2614
        %s2619 = sld [smem:[#allocation11 + $0x45]]
        %v2620 = vstv %s2619
        %v2621 = vmul.f32 %v2413, %v2620
        %v2622 = vmul.f32 %v2414, %v2620
        %v2623 = vmul.f32 %v2415, %v2620
        %v2627 = vrot.slane %v2621, 4
        %v2628 = vrot.slane %v2622, 4
        %v2629 = vsel %vm1679, %v2627, %v2628
        %v2630 = vrot.slane %v2623, 4
        %v2631 = vsel %vm1679, %v2628, %v2630
        %v2634 = vadd.f32 %v2600, %v2629
        %v2635 = vadd.f32 %v2601, %v2631
        %s2636 = sld [smem:[#allocation11 + $0x22]]
        %v2637 = vstv %s2636
        %v2638 = vmul.f32 %v2413, %v2637
        %v2639 = vmul.f32 %v2414, %v2637
        %v2640 = vmul.f32 %v2415, %v2637
        %v2644 = vrot.slane %v2638, 4
        %v2645 = vrot.slane %v2639, 4
        %v2646 = vsel %vm1679, %v2644, %v2645
        %v2647 = vrot.slane %v2640, 4
        %v2648 = vsel %vm1679, %v2645, %v2647
        %2649 = vrot.lane.b32.xlu0 %v2646, 126
        %v2650 = vpop.permute.xlu0 %2649
        %2651 = vrot.lane.b32.xlu0 %v2648, 126
        %v2652 = vpop.permute.xlu0 %2651
        %v2655 = vadd.f32 %v2617, %v2650
        %v2656 = vadd.f32 %v2618, %v2652
        %s2657 = sld [smem:[#allocation11 + $0x46]]
        %v2658 = vstv %s2657
        %v2659 = vmul.f32 %v2413, %v2658
        %v2660 = vmul.f32 %v2414, %v2658
        %v2661 = vmul.f32 %v2415, %v2658
        %v2665 = vrot.slane %v2659, 4
        %v2666 = vrot.slane %v2660, 4
        %v2667 = vsel %vm1679, %v2665, %v2666
        %v2668 = vrot.slane %v2661, 4
        %v2669 = vsel %vm1679, %v2666, %v2668
        %2670 = vrot.lane.b32.xlu0 %v2667, 126
        %v2671 = vpop.permute.xlu0 %2670
        %2672 = vrot.lane.b32.xlu0 %v2669, 126
        %v2673 = vpop.permute.xlu0 %2672
        %v2676 = vadd.f32 %v2634, %v2671
        %v2677 = vadd.f32 %v2635, %v2673
        %s2678 = sld [smem:[#allocation11 + $0x23]]
        %v2679 = vstv %s2678
        %v2680 = vmul.f32 %v2413, %v2679
        %v2681 = vmul.f32 %v2414, %v2679
        %v2682 = vmul.f32 %v2415, %v2679
        %v2686 = vrot.slane %v2680, 4
        %v2687 = vrot.slane %v2681, 4
        %v2688 = vsel %vm1679, %v2686, %v2687
        %v2689 = vrot.slane %v2682, 4
        %v2690 = vsel %vm1679, %v2687, %v2689
        %2691 = vrot.lane.b32.xlu0 %v2688, 124
        %v2692 = vpop.permute.xlu0 %2691
        %2693 = vrot.lane.b32.xlu0 %v2690, 124
        %v2694 = vpop.permute.xlu0 %2693
        %v2697 = vadd.f32 %v2655, %v2692
        %v2698 = vadd.f32 %v2656, %v2694
        %s2699 = sld [smem:[#allocation11 + $0x47]]
        %v2700 = vstv %s2699
        %v2701 = vmul.f32 %v2413, %v2700
        %v2702 = vmul.f32 %v2414, %v2700
        %v2703 = vmul.f32 %v2415, %v2700
        %v2707 = vrot.slane %v2701, 4
        %v2708 = vrot.slane %v2702, 4
        %v2709 = vsel %vm1679, %v2707, %v2708
        %v2710 = vrot.slane %v2703, 4
        %v2711 = vsel %vm1679, %v2708, %v2710
        %2712 = vrot.lane.b32.xlu0 %v2709, 124
        %v2713 = vpop.permute.xlu0 %2712
        %2714 = vrot.lane.b32.xlu0 %v2711, 124
        %v2715 = vpop.permute.xlu0 %2714
        %v2718 = vadd.f32 %v2676, %v2713
        %v2719 = vadd.f32 %v2677, %v2715
        %s2720 = sld [smem:[#allocation12]]
        %v2721 = vstv %s2720
        %v2722 = vadd.f32 %v2697, %v2721
        %v2723 = vadd.f32 %v2698, %v2721
        %v2724 = vmax.f32 %v2722, 0.0
        %v2725 = vmax.f32 %v2723, 0.0
        %s2726 = sld [smem:[#allocation12 + $0x1]]
        %v2727 = vstv %s2726
        %v2728 = vadd.f32 %v2718, %v2727
        %v2729 = vadd.f32 %v2719, %v2727
        %v2730 = vmax.f32 %v2728, 0.0
        %v2731 = vmax.f32 %v2729, 0.0
        %2734 = vrot.lane.b32.xlu0 %v2724, 2
        %v2735 = vpop.permute.xlu0 %2734
        %2736 = vrot.lane.b32.xlu0 %v2725, 2
        %v2737 = vpop.permute.xlu0 %2736
        %2740 = vst.msk [vmem:[#allocation2 + $0x2] sm:$0xff] %vm467, %v2735
        %2741 = vst.msk [vmem:[#allocation2 + $0xa] sm:$0xff] %vm467, %v2737
        %v2742 = vld [vmem:[#allocation2] sm:$0xff]
        %v2743 = vld [vmem:[#allocation2 + $0x8] sm:$0xff]
        %v2744 = vld [vmem:[#allocation2 + $0x10] sm:$0xf]
        %2748 = vrot.lane.b32.xlu0 %v2742, 126
        %v2749 = vpop.permute.xlu0 %2748
        %2750 = vrot.lane.b32.xlu0 %v2743, 126
        %v2751 = vpop.permute.xlu0 %2750
        %2752 = vrot.lane.b32.xlu0 %v2744, 126
        %v2753 = vpop.permute.xlu0 %2752
        %v2757 = vmax.f32 %v2742, %v2749
        %v2758 = vmax.f32 %v2743, %v2751
        %v2759 = vmax.f32 %v2744, %v2753
        %v2760 = vrot.slane %v2742, 2
        %v2761 = vrot.slane %v2743, 2
        %v2762 = vsel %vm599, %v2760, %v2761
        %v2763 = vrot.slane %v2744, 2
        %v2764 = vsel %vm599, %v2761, %v2763
        %v2768 = vmax.f32 %v2757, %v2762
        %v2769 = vmax.f32 %v2758, %v2764
        %v2770 = vmax.f32 %v2759, %v2763
        %2771 = vrot.lane.b32.xlu0 %v2762, 126
        %v2772 = vpop.permute.xlu0 %2771
        %2773 = vrot.lane.b32.xlu0 %v2764, 126
        %v2774 = vpop.permute.xlu0 %2773
        %2775 = vrot.lane.b32.xlu0 %v2763, 126
        %v2776 = vpop.permute.xlu0 %2775
        %v2780 = vmax.f32 %v2768, %v2772
        %v2781 = vmax.f32 %v2769, %v2774
        %v2782 = vmax.f32 %v2770, %v2776
        %2785 = vrot.lane.b32.xlu0 %v2730, 2
        %v2786 = vpop.permute.xlu0 %2785
        %2787 = vrot.lane.b32.xlu0 %v2731, 2
        %v2788 = vpop.permute.xlu0 %2787
        %2791 = vst.msk [vmem:[#allocation2 + $0x2] sm:$0xff] %vm467, %v2786
        %2792 = vst.msk [vmem:[#allocation2 + $0xa] sm:$0xff] %vm467, %v2788
        %v2793 = vld [vmem:[#allocation2] sm:$0xff]
        %v2794 = vld [vmem:[#allocation2 + $0x8] sm:$0xff]
        %v2795 = vld [vmem:[#allocation2 + $0x10] sm:$0xf]
        %2799 = vrot.lane.b32.xlu0 %v2793, 126
        %v2800 = vpop.permute.xlu0 %2799
        %2801 = vrot.lane.b32.xlu0 %v2794, 126
        %v2802 = vpop.permute.xlu0 %2801
        %2803 = vrot.lane.b32.xlu0 %v2795, 126
        %v2804 = vpop.permute.xlu0 %2803
        %v2808 = vmax.f32 %v2793, %v2800
        %v2809 = vmax.f32 %v2794, %v2802
        %v2810 = vmax.f32 %v2795, %v2804
        %v2811 = vrot.slane %v2793, 2
        %v2812 = vrot.slane %v2794, 2
        %v2813 = vsel %vm599, %v2811, %v2812
        %v2814 = vrot.slane %v2795, 2
        %v2815 = vsel %vm599, %v2812, %v2814
        %v2819 = vmax.f32 %v2808, %v2813
        %v2820 = vmax.f32 %v2809, %v2815
        %v2821 = vmax.f32 %v2810, %v2814
        %2822 = vrot.lane.b32.xlu0 %v2813, 126
        %v2823 = vpop.permute.xlu0 %2822
        %2824 = vrot.lane.b32.xlu0 %v2815, 126
        %v2825 = vpop.permute.xlu0 %2824
        %2826 = vrot.lane.b32.xlu0 %v2814, 126
        %v2827 = vpop.permute.xlu0 %2826
        %v2831 = vmax.f32 %v2819, %v2823
        %v2832 = vmax.f32 %v2820, %v2825
        %v2833 = vmax.f32 %v2821, %v2827
        %2834 = vst.msk [vmem:[#allocation2] sm:$0xfc] %vm1477, %v2780
        %2835 = vst.msk [vmem:[#allocation2 + $0x8] sm:$0xff] %vm467, %v2781
        %2836 = vst.msk [vmem:[#allocation2 + $0x10] sm:$0x3] %vm1480, %v2782
        %v2837 = vld [vmem:[#allocation2] sm:$0xff]
        %v2838 = vld [vmem:[#allocation2 + $0x8] sm:$0xff]
        %v2839 = vld [vmem:[#allocation2 + $0x10] sm:$0xf]
        %vm2840 = vcmp.eq.s32.totalorder %v454, 0
        %vm2841 = vcmp.eq.s32.totalorder %v455, 0
        %vm2842 = vcmp.eq.s32.totalorder %v456, 0
        %vm2843 = vmand %vm2840, %vm2842
        %vm2844 = vmand %vm2841, %vm2842
        %v2848 = vrot.slane %v2837, 2
        %v2849 = vrot.slane %v2838, 2
        %v2850 = vsel %vm599, %v2848, %v2849
        %v2851 = vrot.slane %v2839, 2
        %v2852 = vsel %vm599, %v2849, %v2851
        %2853 = vrot.lane.b32.xlu0 %v2850, 126
        %v2854 = vpop.permute.xlu0 %2853
        %2855 = vrot.lane.b32.xlu0 %v2852, 126
        %v2856 = vpop.permute.xlu0 %2855
        %v2859 = vsel %vm2843, %v2854, 0.0
        %v2860 = vsel %vm2844, %v2856, 0.0
        %s2861 = sld [smem:[#allocation14]]
        %v2862 = vstv %s2861
        %v2863 = vmul.f32 %v2859, %v2862
        %v2864 = vmul.f32 %v2860, %v2862
        %v2865 = vadd.f32 %v2863, 0.0
        %v2866 = vadd.f32 %v2864, 0.0
        %s2867 = sld [smem:[#allocation14 + $0x4]]
        %v2868 = vstv %s2867
        %v2869 = vmul.f32 %v2859, %v2868
        %v2870 = vmul.f32 %v2860, %v2868
        %v2871 = vadd.f32 %v2869, 0.0
        %v2872 = vadd.f32 %v2870, 0.0
        %s2873 = sld [smem:[#allocation14 + $0x8]]
        %v2874 = vstv %s2873
        %v2875 = vmul.f32 %v2859, %v2874
        %v2876 = vmul.f32 %v2860, %v2874
        %v2877 = vadd.f32 %v2875, 0.0
        %v2878 = vadd.f32 %v2876, 0.0
        %s2879 = sld [smem:[#allocation14 + $0xc]]
        %v2880 = vstv %s2879
        %v2881 = vmul.f32 %v2859, %v2880
        %v2882 = vmul.f32 %v2860, %v2880
        %v2883 = vadd.f32 %v2881, 0.0
        %v2884 = vadd.f32 %v2882, 0.0
        %vm2885 = vcmp.eq.s32.totalorder %v456, 2
        %vm2886 = vmand %vm2840, %vm2885
        %vm2887 = vmand %vm2841, %vm2885
        %v2890 = vsel %vm2886, %v2850, 0.0
        %v2891 = vsel %vm2887, %v2852, 0.0
        %s2892 = sld [smem:[#allocation14 + $0x1]]
        %v2893 = vstv %s2892
        %v2894 = vmul.f32 %v2890, %v2893
        %v2895 = vmul.f32 %v2891, %v2893
        %v2896 = vadd.f32 %v2865, %v2894
        %v2897 = vadd.f32 %v2866, %v2895
        %s2898 = sld [smem:[#allocation14 + $0x5]]
        %v2899 = vstv %s2898
        %v2900 = vmul.f32 %v2890, %v2899
        %v2901 = vmul.f32 %v2891, %v2899
        %v2902 = vadd.f32 %v2871, %v2900
        %v2903 = vadd.f32 %v2872, %v2901
        %s2904 = sld [smem:[#allocation14 + $0x9]]
        %v2905 = vstv %s2904
        %v2906 = vmul.f32 %v2890, %v2905
        %v2907 = vmul.f32 %v2891, %v2905
        %v2908 = vadd.f32 %v2877, %v2906
        %v2909 = vadd.f32 %v2878, %v2907
        %s2910 = sld [smem:[#allocation14 + $0xd]]
        %v2911 = vstv %s2910
        %v2912 = vmul.f32 %v2890, %v2911
        %v2913 = vmul.f32 %v2891, %v2911
        %v2914 = vadd.f32 %v2883, %v2912
        %v2915 = vadd.f32 %v2884, %v2913
        %vm2916 = vcmp.eq.s32.totalorder %v454, 2
        %vm2917 = vcmp.eq.s32.totalorder %v455, 2
        %vm2918 = vmand %vm2916, %vm2842
        %vm2919 = vmand %vm2917, %vm2842
        %2920 = vrot.lane.b32.xlu0 %v2837, 126
        %v2921 = vpop.permute.xlu0 %2920
        %2922 = vrot.lane.b32.xlu0 %v2838, 126
        %v2923 = vpop.permute.xlu0 %2922
        %v2926 = vsel %vm2918, %v2921, 0.0
        %v2927 = vsel %vm2919, %v2923, 0.0
        %s2928 = sld [smem:[#allocation14 + $0x2]]
        %v2929 = vstv %s2928
        %v2930 = vmul.f32 %v2926, %v2929
        %v2931 = vmul.f32 %v2927, %v2929
        %v2932 = vadd.f32 %v2896, %v2930
        %v2933 = vadd.f32 %v2897, %v2931
        %s2934 = sld [smem:[#allocation14 + $0x6]]
        %v2935 = vstv %s2934
        %v2936 = vmul.f32 %v2926, %v2935
        %v2937 = vmul.f32 %v2927, %v2935
        %v2938 = vadd.f32 %v2902, %v2936
        %v2939 = vadd.f32 %v2903, %v2937
        %s2940 = sld [smem:[#allocation14 + $0xa]]
        %v2941 = vstv %s2940
        %v2942 = vmul.f32 %v2926, %v2941
        %v2943 = vmul.f32 %v2927, %v2941
        %v2944 = vadd.f32 %v2908, %v2942
        %v2945 = vadd.f32 %v2909, %v2943
        %s2946 = sld [smem:[#allocation14 + $0xe]]
        %v2947 = vstv %s2946
        %v2948 = vmul.f32 %v2926, %v2947
        %v2949 = vmul.f32 %v2927, %v2947
        %v2950 = vadd.f32 %v2914, %v2948
        %v2951 = vadd.f32 %v2915, %v2949
        %vm2952 = vmand %vm2916, %vm2885
        %vm2953 = vmand %vm2917, %vm2885
        %v2954 = vsel %vm2952, %v2837, 0.0
        %v2955 = vsel %vm2953, %v2838, 0.0
        %s2956 = sld [smem:[#allocation14 + $0x3]]
        %v2957 = vstv %s2956
        %v2958 = vmul.f32 %v2954, %v2957
        %v2959 = vmul.f32 %v2955, %v2957
        %v2960 = vadd.f32 %v2932, %v2958
        %v2961 = vadd.f32 %v2933, %v2959
        %s2962 = sld [smem:[#allocation14 + $0x7]]
        %v2963 = vstv %s2962
        %v2964 = vmul.f32 %v2954, %v2963
        %v2965 = vmul.f32 %v2955, %v2963
        %v2966 = vadd.f32 %v2938, %v2964
        %v2967 = vadd.f32 %v2939, %v2965
        %s2968 = sld [smem:[#allocation14 + $0xb]]
        %v2969 = vstv %s2968
        %v2970 = vmul.f32 %v2954, %v2969
        %v2971 = vmul.f32 %v2955, %v2969
        %v2972 = vadd.f32 %v2944, %v2970
        %v2973 = vadd.f32 %v2945, %v2971
        %s2974 = sld [smem:[#allocation14 + $0xf]]
        %v2975 = vstv %s2974
        %v2976 = vmul.f32 %v2954, %v2975
        %v2977 = vmul.f32 %v2955, %v2975
        %v2978 = vadd.f32 %v2950, %v2976
        %v2979 = vadd.f32 %v2951, %v2977
        %2980 = vst.msk [vmem:[#allocation2] sm:$0xfc] %vm1477, %v2831
        %2981 = vst.msk [vmem:[#allocation2 + $0x8] sm:$0xff] %vm467, %v2832
        %2982 = vst.msk [vmem:[#allocation2 + $0x10] sm:$0x3] %vm1480, %v2833
        %v2983 = vld [vmem:[#allocation2] sm:$0xff]
        %v2984 = vld [vmem:[#allocation2 + $0x8] sm:$0xff]
        %v2985 = vld [vmem:[#allocation2 + $0x10] sm:$0xf]
        %v2989 = vrot.slane %v2983, 2
        %v2990 = vrot.slane %v2984, 2
        %v2991 = vsel %vm599, %v2989, %v2990
        %v2992 = vrot.slane %v2985, 2
        %v2993 = vsel %vm599, %v2990, %v2992
        %2994 = vrot.lane.b32.xlu0 %v2991, 126
        %v2995 = vpop.permute.xlu0 %2994
        %2996 = vrot.lane.b32.xlu0 %v2993, 126
        %v2997 = vpop.permute.xlu0 %2996
        %v3000 = vsel %vm2843, %v2995, 0.0
        %v3001 = vsel %vm2844, %v2997, 0.0
        %s3002 = sld [smem:[#allocation14 + $0x10]]
        %v3003 = vstv %s3002
        %v3004 = vmul.f32 %v3000, %v3003
        %v3005 = vmul.f32 %v3001, %v3003
        %v3006 = vadd.f32 %v2960, %v3004
        %v3007 = vadd.f32 %v2961, %v3005
        %s3008 = sld [smem:[#allocation14 + $0x14]]
        %v3009 = vstv %s3008
        %v3010 = vmul.f32 %v3000, %v3009
        %v3011 = vmul.f32 %v3001, %v3009
        %v3012 = vadd.f32 %v2966, %v3010
        %v3013 = vadd.f32 %v2967, %v3011
        %s3014 = sld [smem:[#allocation14 + $0x18]]
        %v3015 = vstv %s3014
        %v3016 = vmul.f32 %v3000, %v3015
        %v3017 = vmul.f32 %v3001, %v3015
        %v3018 = vadd.f32 %v2972, %v3016
        %v3019 = vadd.f32 %v2973, %v3017
        %s3020 = sld [smem:[#allocation14 + $0x1c]]
        %v3021 = vstv %s3020
        %v3022 = vmul.f32 %v3000, %v3021
        %v3023 = vmul.f32 %v3001, %v3021
        %v3024 = vadd.f32 %v2978, %v3022
        %v3025 = vadd.f32 %v2979, %v3023
        %v3028 = vsel %vm2886, %v2991, 0.0
        %v3029 = vsel %vm2887, %v2993, 0.0
        %s3030 = sld [smem:[#allocation14 + $0x11]]
        %v3031 = vstv %s3030
        %v3032 = vmul.f32 %v3028, %v3031
        %v3033 = vmul.f32 %v3029, %v3031
        %v3034 = vadd.f32 %v3006, %v3032
        %v3035 = vadd.f32 %v3007, %v3033
        %s3036 = sld [smem:[#allocation14 + $0x15]]
        %v3037 = vstv %s3036
        %v3038 = vmul.f32 %v3028, %v3037
        %v3039 = vmul.f32 %v3029, %v3037
        %v3040 = vadd.f32 %v3012, %v3038
        %v3041 = vadd.f32 %v3013, %v3039
        %s3042 = sld [smem:[#allocation14 + $0x19]]
        %v3043 = vstv %s3042
        %v3044 = vmul.f32 %v3028, %v3043
        %v3045 = vmul.f32 %v3029, %v3043
        %v3046 = vadd.f32 %v3018, %v3044
        %v3047 = vadd.f32 %v3019, %v3045
        %s3048 = sld [smem:[#allocation14 + $0x1d]]
        %v3049 = vstv %s3048
        %v3050 = vmul.f32 %v3028, %v3049
        %v3051 = vmul.f32 %v3029, %v3049
        %v3052 = vadd.f32 %v3024, %v3050
        %v3053 = vadd.f32 %v3025, %v3051
        %3054 = vrot.lane.b32.xlu0 %v2983, 126
        %v3055 = vpop.permute.xlu0 %3054
        %3056 = vrot.lane.b32.xlu0 %v2984, 126
        %v3057 = vpop.permute.xlu0 %3056
        %v3060 = vsel %vm2918, %v3055, 0.0
        %v3061 = vsel %vm2919, %v3057, 0.0
        %s3062 = sld [smem:[#allocation14 + $0x12]]
        %v3063 = vstv %s3062
        %v3064 = vmul.f32 %v3060, %v3063
        %v3065 = vmul.f32 %v3061, %v3063
        %v3066 = vadd.f32 %v3034, %v3064
        %v3067 = vadd.f32 %v3035, %v3065
        %s3068 = sld [smem:[#allocation14 + $0x16]]
        %v3069 = vstv %s3068
        %v3070 = vmul.f32 %v3060, %v3069
        %v3071 = vmul.f32 %v3061, %v3069
        %v3072 = vadd.f32 %v3040, %v3070
        %v3073 = vadd.f32 %v3041, %v3071
        %s3074 = sld [smem:[#allocation14 + $0x1a]]
        %v3075 = vstv %s3074
        %v3076 = vmul.f32 %v3060, %v3075
        %v3077 = vmul.f32 %v3061, %v3075
        %v3078 = vadd.f32 %v3046, %v3076
        %v3079 = vadd.f32 %v3047, %v3077
        %s3080 = sld [smem:[#allocation14 + $0x1e]]
        %v3081 = vstv %s3080
        %v3082 = vmul.f32 %v3060, %v3081
        %v3083 = vmul.f32 %v3061, %v3081
        %v3084 = vadd.f32 %v3052, %v3082
        %v3085 = vadd.f32 %v3053, %v3083
        %v3086 = vsel %vm2952, %v2983, 0.0
        %v3087 = vsel %vm2953, %v2984, 0.0
        %s3088 = sld [smem:[#allocation14 + $0x13]]
        %v3089 = vstv %s3088
        %v3090 = vmul.f32 %v3086, %v3089
        %v3091 = vmul.f32 %v3087, %v3089
        %v3092 = vadd.f32 %v3066, %v3090
        %v3093 = vadd.f32 %v3067, %v3091
        %s3094 = sld [smem:[#allocation14 + $0x17]]
        %v3095 = vstv %s3094
        %v3096 = vmul.f32 %v3086, %v3095
        %v3097 = vmul.f32 %v3087, %v3095
        %v3098 = vadd.f32 %v3072, %v3096
        %v3099 = vadd.f32 %v3073, %v3097
        %s3100 = sld [smem:[#allocation14 + $0x1b]]
        %v3101 = vstv %s3100
        %v3102 = vmul.f32 %v3086, %v3101
        %v3103 = vmul.f32 %v3087, %v3101
        %v3104 = vadd.f32 %v3078, %v3102
        %v3105 = vadd.f32 %v3079, %v3103
        %s3106 = sld [smem:[#allocation14 + $0x1f]]
        %v3107 = vstv %s3106
        %v3108 = vmul.f32 %v3086, %v3107
        %v3109 = vmul.f32 %v3087, %v3107
        %v3110 = vadd.f32 %v3084, %v3108
        %v3111 = vadd.f32 %v3085, %v3109
        %s3112 = sld [smem:[#allocation15]]
        %v3113 = vstv %s3112
        %v3114 = vadd.f32 %v3092, %v3113
        %v3115 = vadd.f32 %v3093, %v3113
        %v3116 = vmax.f32 %v3114, 0.0
        %v3117 = vmax.f32 %v3115, 0.0
        %s3118 = sld [smem:[#allocation15 + $0x1]]
        %v3119 = vstv %s3118
        %v3120 = vadd.f32 %v3098, %v3119
        %v3121 = vadd.f32 %v3099, %v3119
        %v3122 = vmax.f32 %v3120, 0.0
        %v3123 = vmax.f32 %v3121, 0.0
        %s3124 = sld [smem:[#allocation15 + $0x2]]
        %v3125 = vstv %s3124
        %v3126 = vadd.f32 %v3104, %v3125
        %v3127 = vadd.f32 %v3105, %v3125
        %v3128 = vmax.f32 %v3126, 0.0
        %v3129 = vmax.f32 %v3127, 0.0
        %s3130 = sld [smem:[#allocation15 + $0x3]]
        %v3131 = vstv %s3130
        %v3132 = vadd.f32 %v3110, %v3131
        %v3133 = vadd.f32 %v3111, %v3131
        %v3134 = vmax.f32 %v3132, 0.0
        %v3135 = vmax.f32 %v3133, 0.0
        %3138 = vrot.lane.b32.xlu0 %v3116, 2
        %v3139 = vpop.permute.xlu0 %3138
        %3140 = vrot.lane.b32.xlu0 %v3117, 2
        %v3141 = vpop.permute.xlu0 %3140
        %3144 = vst.msk [vmem:[#allocation2 + $0x2] sm:$0xff] %vm467, %v3139
        %3145 = vst.msk [vmem:[#allocation2 + $0xa] sm:$0xff] %vm467, %v3141
        %v3146 = vld [vmem:[#allocation2] sm:$0xff]
        %v3147 = vld [vmem:[#allocation2 + $0x8] sm:$0xff]
        %v3148 = vld [vmem:[#allocation2 + $0x10] sm:$0xf]
        %vm3149 = vcmp.eq.s32.totalorder %v451, 0
        %vm3150 = vcmp.eq.s32.totalorder %v452, 0
        %vm3151 = vcmp.eq.s32.totalorder %v453, 0
        %vm3152 = vmand %vm3149, %vm3151
        %vm3153 = vmand %vm3150, %vm3151
        %v3157 = vrot.slane %v3146, 2
        %v3158 = vrot.slane %v3147, 2
        %v3159 = vsel %vm599, %v3157, %v3158
        %v3160 = vrot.slane %v3148, 2
        %v3161 = vsel %vm599, %v3158, %v3160
        %3162 = vrot.lane.b32.xlu0 %v3159, 126
        %v3163 = vpop.permute.xlu0 %3162
        %3164 = vrot.lane.b32.xlu0 %v3161, 126
        %v3165 = vpop.permute.xlu0 %3164
        %v3168 = vsel %vm3152, %v3163, 0.0
        %v3169 = vsel %vm3153, %v3165, 0.0
        %s3170 = sld [smem:[#allocation17]]
        %v3171 = vstv %s3170
        %v3172 = vmul.f32 %v3168, %v3171
        %v3173 = vmul.f32 %v3169, %v3171
        %v3174 = vadd.f32 %v3172, 0.0
        %v3175 = vadd.f32 %v3173, 0.0
        %vm3176 = vcmp.eq.s32.totalorder %v453, 1
        %vm3177 = vmand %vm3149, %vm3176
        %vm3178 = vmand %vm3150, %vm3176
        %3179 = vrot.lane.b32.xlu0 %v3159, 127
        %v3180 = vpop.permute.xlu0 %3179
        %3181 = vrot.lane.b32.xlu0 %v3161, 127
        %v3182 = vpop.permute.xlu0 %3181
        %v3185 = vsel %vm3177, %v3180, 0.0
        %v3186 = vsel %vm3178, %v3182, 0.0
        %s3187 = sld [smem:[#allocation17 + $0x1]]
        %v3188 = vstv %s3187
        %v3189 = vmul.f32 %v3185, %v3188
        %v3190 = vmul.f32 %v3186, %v3188
        %v3191 = vadd.f32 %v3174, %v3189
        %v3192 = vadd.f32 %v3175, %v3190
        %vm3193 = vcmp.eq.s32.totalorder %v451, 1
        %vm3194 = vcmp.eq.s32.totalorder %v452, 1
        %vm3195 = vmand %vm3193, %vm3151
        %vm3196 = vmand %vm3194, %vm3151
        %v3197 = vrot.slane %v3146, 1
        %v3198 = vrot.slane %v3147, 1
        %v3199 = vsel %vm529, %v3197, %v3198
        %v3200 = vrot.slane %v3148, 1
        %v3201 = vsel %vm529, %v3198, %v3200
        %3202 = vrot.lane.b32.xlu0 %v3199, 126
        %v3203 = vpop.permute.xlu0 %3202
        %3204 = vrot.lane.b32.xlu0 %v3201, 126
        %v3205 = vpop.permute.xlu0 %3204
        %v3208 = vsel %vm3195, %v3203, 0.0
        %v3209 = vsel %vm3196, %v3205, 0.0
        %s3210 = sld [smem:[#allocation17 + $0x2]]
        %v3211 = vstv %s3210
        %v3212 = vmul.f32 %v3208, %v3211
        %v3213 = vmul.f32 %v3209, %v3211
        %v3214 = vadd.f32 %v3191, %v3212
        %v3215 = vadd.f32 %v3192, %v3213
        %vm3216 = vmand %vm3193, %vm3176
        %vm3217 = vmand %vm3194, %vm3176
        %3218 = vrot.lane.b32.xlu0 %v3199, 127
        %v3219 = vpop.permute.xlu0 %3218
        %3220 = vrot.lane.b32.xlu0 %v3201, 127
        %v3221 = vpop.permute.xlu0 %3220
        %v3224 = vsel %vm3216, %v3219, 0.0
        %v3225 = vsel %vm3217, %v3221, 0.0
        %s3226 = sld [smem:[#allocation17 + $0x3]]
        %v3227 = vstv %s3226
        %v3228 = vmul.f32 %v3224, %v3227
        %v3229 = vmul.f32 %v3225, %v3227
        %v3230 = vadd.f32 %v3214, %v3228
        %v3231 = vadd.f32 %v3215, %v3229
        %3234 = vrot.lane.b32.xlu0 %v3122, 2
        %v3235 = vpop.permute.xlu0 %3234
        %3236 = vrot.lane.b32.xlu0 %v3123, 2
        %v3237 = vpop.permute.xlu0 %3236
        %3240 = vst.msk [vmem:[#allocation2 + $0x2] sm:$0xff] %vm467, %v3235
        %3241 = vst.msk [vmem:[#allocation2 + $0xa] sm:$0xff] %vm467, %v3237
        %v3242 = vld [vmem:[#allocation2] sm:$0xff]
        %v3243 = vld [vmem:[#allocation2 + $0x8] sm:$0xff]
        %v3244 = vld [vmem:[#allocation2 + $0x10] sm:$0xf]
        %v3248 = vrot.slane %v3242, 2
        %v3249 = vrot.slane %v3243, 2
        %v3250 = vsel %vm599, %v3248, %v3249
        %v3251 = vrot.slane %v3244, 2
        %v3252 = vsel %vm599, %v3249, %v3251
        %3253 = vrot.lane.b32.xlu0 %v3250, 126
        %v3254 = vpop.permute.xlu0 %3253
        %3255 = vrot.lane.b32.xlu0 %v3252, 126
        %v3256 = vpop.permute.xlu0 %3255
        %v3259 = vsel %vm3152, %v3254, 0.0
        %v3260 = vsel %vm3153, %v3256, 0.0
        %s3261 = sld [smem:[#allocation17 + $0x4]]
        %v3262 = vstv %s3261
        %v3263 = vmul.f32 %v3259, %v3262
        %v3264 = vmul.f32 %v3260, %v3262
        %v3265 = vadd.f32 %v3230, %v3263
        %v3266 = vadd.f32 %v3231, %v3264
        %3267 = vrot.lane.b32.xlu0 %v3250, 127
        %v3268 = vpop.permute.xlu0 %3267
        %3269 = vrot.lane.b32.xlu0 %v3252, 127
        %v3270 = vpop.permute.xlu0 %3269
        %v3273 = vsel %vm3177, %v3268, 0.0
        %v3274 = vsel %vm3178, %v3270, 0.0
        %s3275 = sld [smem:[#allocation17 + $0x5]]
        %v3276 = vstv %s3275
        %v3277 = vmul.f32 %v3273, %v3276
        %v3278 = vmul.f32 %v3274, %v3276
        %v3279 = vadd.f32 %v3265, %v3277
        %v3280 = vadd.f32 %v3266, %v3278
        %v3281 = vrot.slane %v3242, 1
        %v3282 = vrot.slane %v3243, 1
        %v3283 = vsel %vm529, %v3281, %v3282
        %v3284 = vrot.slane %v3244, 1
        %v3285 = vsel %vm529, %v3282, %v3284
        %3286 = vrot.lane.b32.xlu0 %v3283, 126
        %v3287 = vpop.permute.xlu0 %3286
        %3288 = vrot.lane.b32.xlu0 %v3285, 126
        %v3289 = vpop.permute.xlu0 %3288
        %v3292 = vsel %vm3195, %v3287, 0.0
        %v3293 = vsel %vm3196, %v3289, 0.0
        %s3294 = sld [smem:[#allocation17 + $0x6]]
        %v3295 = vstv %s3294
        %v3296 = vmul.f32 %v3292, %v3295
        %v3297 = vmul.f32 %v3293, %v3295
        %v3298 = vadd.f32 %v3279, %v3296
        %v3299 = vadd.f32 %v3280, %v3297
        %3300 = vrot.lane.b32.xlu0 %v3283, 127
        %v3301 = vpop.permute.xlu0 %3300
        %3302 = vrot.lane.b32.xlu0 %v3285, 127
        %v3303 = vpop.permute.xlu0 %3302
        %v3306 = vsel %vm3216, %v3301, 0.0
        %v3307 = vsel %vm3217, %v3303, 0.0
        %s3308 = sld [smem:[#allocation17 + $0x7]]
        %v3309 = vstv %s3308
        %v3310 = vmul.f32 %v3306, %v3309
        %v3311 = vmul.f32 %v3307, %v3309
        %v3312 = vadd.f32 %v3298, %v3310
        %v3313 = vadd.f32 %v3299, %v3311
        %3316 = vrot.lane.b32.xlu0 %v3128, 2
        %v3317 = vpop.permute.xlu0 %3316
        %3318 = vrot.lane.b32.xlu0 %v3129, 2
        %v3319 = vpop.permute.xlu0 %3318
        %3322 = vst.msk [vmem:[#allocation2 + $0x2] sm:$0xff] %vm467, %v3317
        %3323 = vst.msk [vmem:[#allocation2 + $0xa] sm:$0xff] %vm467, %v3319
        %v3324 = vld [vmem:[#allocation2] sm:$0xff]
        %v3325 = vld [vmem:[#allocation2 + $0x8] sm:$0xff]
        %v3326 = vld [vmem:[#allocation2 + $0x10] sm:$0xf]
        %v3330 = vrot.slane %v3324, 2
        %v3331 = vrot.slane %v3325, 2
        %v3332 = vsel %vm599, %v3330, %v3331
        %v3333 = vrot.slane %v3326, 2
        %v3334 = vsel %vm599, %v3331, %v3333
        %3335 = vrot.lane.b32.xlu0 %v3332, 126
        %v3336 = vpop.permute.xlu0 %3335
        %3337 = vrot.lane.b32.xlu0 %v3334, 126
        %v3338 = vpop.permute.xlu0 %3337
        %v3341 = vsel %vm3152, %v3336, 0.0
        %v3342 = vsel %vm3153, %v3338, 0.0
        %s3343 = sld [smem:[#allocation17 + $0x8]]
        %v3344 = vstv %s3343
        %v3345 = vmul.f32 %v3341, %v3344
        %v3346 = vmul.f32 %v3342, %v3344
        %v3347 = vadd.f32 %v3312, %v3345
        %v3348 = vadd.f32 %v3313, %v3346
        %3349 = vrot.lane.b32.xlu0 %v3332, 127
        %v3350 = vpop.permute.xlu0 %3349
        %3351 = vrot.lane.b32.xlu0 %v3334, 127
        %v3352 = vpop.permute.xlu0 %3351
        %v3355 = vsel %vm3177, %v3350, 0.0
        %v3356 = vsel %vm3178, %v3352, 0.0
        %s3357 = sld [smem:[#allocation17 + $0x9]]
        %v3358 = vstv %s3357
        %v3359 = vmul.f32 %v3355, %v3358
        %v3360 = vmul.f32 %v3356, %v3358
        %v3361 = vadd.f32 %v3347, %v3359
        %v3362 = vadd.f32 %v3348, %v3360
        %v3363 = vrot.slane %v3324, 1
        %v3364 = vrot.slane %v3325, 1
        %v3365 = vsel %vm529, %v3363, %v3364
        %v3366 = vrot.slane %v3326, 1
        %v3367 = vsel %vm529, %v3364, %v3366
        %3368 = vrot.lane.b32.xlu0 %v3365, 126
        %v3369 = vpop.permute.xlu0 %3368
        %3370 = vrot.lane.b32.xlu0 %v3367, 126
        %v3371 = vpop.permute.xlu0 %3370
        %v3374 = vsel %vm3195, %v3369, 0.0
        %v3375 = vsel %vm3196, %v3371, 0.0
        %s3376 = sld [smem:[#allocation17 + $0xa]]
        %v3377 = vstv %s3376
        %v3378 = vmul.f32 %v3374, %v3377
        %v3379 = vmul.f32 %v3375, %v3377
        %v3380 = vadd.f32 %v3361, %v3378
        %v3381 = vadd.f32 %v3362, %v3379
        %3382 = vrot.lane.b32.xlu0 %v3365, 127
        %v3383 = vpop.permute.xlu0 %3382
        %3384 = vrot.lane.b32.xlu0 %v3367, 127
        %v3385 = vpop.permute.xlu0 %3384
        %v3388 = vsel %vm3216, %v3383, 0.0
        %v3389 = vsel %vm3217, %v3385, 0.0
        %s3390 = sld [smem:[#allocation17 + $0xb]]
        %v3391 = vstv %s3390
        %v3392 = vmul.f32 %v3388, %v3391
        %v3393 = vmul.f32 %v3389, %v3391
        %v3394 = vadd.f32 %v3380, %v3392
        %v3395 = vadd.f32 %v3381, %v3393
        %3398 = vrot.lane.b32.xlu0 %v3134, 2
        %v3399 = vpop.permute.xlu0 %3398
        %3400 = vrot.lane.b32.xlu0 %v3135, 2
        %v3401 = vpop.permute.xlu0 %3400
        %3404 = vst.msk [vmem:[#allocation2 + $0x2] sm:$0xff] %vm467, %v3399
        %3405 = vst.msk [vmem:[#allocation2 + $0xa] sm:$0xff] %vm467, %v3401
        %v3406 = vld [vmem:[#allocation2] sm:$0xff]
        %v3407 = vld [vmem:[#allocation2 + $0x8] sm:$0xff]
        %v3408 = vld [vmem:[#allocation2 + $0x10] sm:$0xf]
        %v3412 = vrot.slane %v3406, 2
        %v3413 = vrot.slane %v3407, 2
        %v3414 = vsel %vm599, %v3412, %v3413
        %v3415 = vrot.slane %v3408, 2
        %v3416 = vsel %vm599, %v3413, %v3415
        %3417 = vrot.lane.b32.xlu0 %v3414, 126
        %v3418 = vpop.permute.xlu0 %3417
        %3419 = vrot.lane.b32.xlu0 %v3416, 126
        %v3420 = vpop.permute.xlu0 %3419
        %v3423 = vsel %vm3152, %v3418, 0.0
        %v3424 = vsel %vm3153, %v3420, 0.0
        %s3425 = sld [smem:[#allocation17 + $0xc]]
        %v3426 = vstv %s3425
        %v3427 = vmul.f32 %v3423, %v3426
        %v3428 = vmul.f32 %v3424, %v3426
        %v3429 = vadd.f32 %v3394, %v3427
        %v3430 = vadd.f32 %v3395, %v3428
        %3431 = vrot.lane.b32.xlu0 %v3414, 127
        %v3432 = vpop.permute.xlu0 %3431
        %3433 = vrot.lane.b32.xlu0 %v3416, 127
        %v3434 = vpop.permute.xlu0 %3433
        %v3437 = vsel %vm3177, %v3432, 0.0
        %v3438 = vsel %vm3178, %v3434, 0.0
        %s3439 = sld [smem:[#allocation17 + $0xd]]
        %v3440 = vstv %s3439
        %v3441 = vmul.f32 %v3437, %v3440
        %v3442 = vmul.f32 %v3438, %v3440
        %v3443 = vadd.f32 %v3429, %v3441
        %v3444 = vadd.f32 %v3430, %v3442
        %v3445 = vrot.slane %v3406, 1
        %v3446 = vrot.slane %v3407, 1
        %v3447 = vsel %vm529, %v3445, %v3446
        %v3448 = vrot.slane %v3408, 1
        %v3449 = vsel %vm529, %v3446, %v3448
        %3450 = vrot.lane.b32.xlu0 %v3447, 126
        %v3451 = vpop.permute.xlu0 %3450
        %3452 = vrot.lane.b32.xlu0 %v3449, 126
        %v3453 = vpop.permute.xlu0 %3452
        %v3456 = vsel %vm3195, %v3451, 0.0
        %v3457 = vsel %vm3196, %v3453, 0.0
        %s3458 = sld [smem:[#allocation17 + $0xe]]
        %v3459 = vstv %s3458
        %v3460 = vmul.f32 %v3456, %v3459
        %v3461 = vmul.f32 %v3457, %v3459
        %v3462 = vadd.f32 %v3443, %v3460
        %v3463 = vadd.f32 %v3444, %v3461
        %3464 = vrot.lane.b32.xlu0 %v3447, 127
        %v3465 = vpop.permute.xlu0 %3464
        %3466 = vrot.lane.b32.xlu0 %v3449, 127
        %v3467 = vpop.permute.xlu0 %3466
        %v3470 = vsel %vm3216, %v3465, 0.0
        %v3471 = vsel %vm3217, %v3467, 0.0
        %s3472 = sld [smem:[#allocation17 + $0xf]]
        %v3473 = vstv %s3472
        %v3474 = vmul.f32 %v3470, %v3473
        %v3475 = vmul.f32 %v3471, %v3473
        %v3476 = vadd.f32 %v3462, %v3474
        %v3477 = vadd.f32 %v3463, %v3475
        %s3478 = sld [smem:[#allocation3]]
        %v3479 = vstv %s3478
        %v3480 = vadd.f32 %v3476, %v3479
        %v3481 = vadd.f32 %v3477, %v3479
        %v3482 = vxor.u32 %v3480, 2147483648
        %v3483 = vxor.u32 %v3481, 2147483648
        %v3484 = vmul.f32 %v3482, 1.442695
        %v3485 = vpow.pop %v3484
        %v3486 = vmul.f32 %v3483, 1.442695
        %v3487 = vpow.pop %v3486
        %v3488 = vadd.f32 %v3485, 1.0
        %v3489 = vadd.f32 %v3487, 1.0
        %v3490 = vrcp.pop %v3488
        %v3491 = vmul.f32 1.0, %v3490
        %v3492 = vrcp.pop %v3489
        %v3493 = vmul.f32 1.0, %v3492
        %vm3494 = vcmask 130048
        %3495 = vst.msk [vmem:[%s440] sm:$0xff] %vm3494, %v3491
        %3496 = vst.msk [vmem:[%s440 + $0x8] sm:$0xff] %vm3494, %v3493
        %s3497 = sand.u32 %s233, 1
        %s3498 = scalar_lea.sflag [#allocation6], %s3497
        %s3499 = sand.u32 %s233, 1
        %s3500 = smul.addr %s3499, 16
        %s3501 = scalar_lea.vmem [#allocation18], %s3500
        // Predicated region
        $region89: #{tpu_custom_call.1} parent=55 // pred_check
          %p3502 = pneg %p243
        $region90: #{tpu_custom_call.1} parent=55 // pred_check_branch
          %3504 = sbr.rel (%p3502) target = $region92
        $region91: #{tpu_custom_call.1} parent=55 // pred_region
          %s3506 = ssub.s32 256, 256
          %3507 = vsyncadd %s3498, %s3506
          %s3508 = smul.addr %s31, 2
          %s3509 = smul.addr %s3508, 128
          %s3510 = scalar_lea.hbm %s9, %s3509
          %s3511 = sshll.u32 %s3501, 4
          %s3512 = int_to_ptr.vmem [resolvable:$true] %s3511
          %3517 = dma.vmem_to_hbm [thread:$0]  %s3512, 256, %s3510, %s3498, 128, 128, 8
        $region92: #{tpu_custom_call.1} parent=55 // pred_fallthru
          _
      $region56: #{tpu_custom_call.1} parent=5 // pred_fallthru
        _
      %p3518 = scmp.le.s32.totalorder 2, %s26
      // Predicated region
      $region93: #{tpu_custom_call.1} parent=5 // pred_check
        %p3519 = pneg %p3518
      $region94: #{tpu_custom_call.1} parent=5 // pred_check_branch
        %3521 = sbr.rel (%p3519) target = $region96
      $region95: #{tpu_custom_call.1} parent=5 // pred_region
        %s3522 = ssub.s32 %s26, 2
        // Predicated region
        $region97: #{tpu_custom_call.1} parent=95 // pred_check
          %p3523 = pneg %p249
        $region98: #{tpu_custom_call.1} parent=95 // pred_check_branch
          %3525 = sbr.rel (%p3523) target = $region100
        $region99: #{tpu_custom_call.1} parent=95 // pred_region
          %s3526 = sand.u32 %s234, 1
          %s3527 = scalar_lea.sflag [#allocation6], %s3526
          %s3528 = sand.u32 %s234, 1
          %s3529 = smul.addr %s3528, 16
          %s3530 = scalar_lea.vmem [#allocation18], %s3529
          %3531 = dma.done %s3527, 256
        $region100: #{tpu_custom_call.1} parent=95 // pred_fallthru
          _
      $region96: #{tpu_custom_call.1} parent=5 // pred_fallthru
        _
    $region6: #{tpu_custom_call.1} parent=1 // loop_footer
      %s30 = sadd.s32 1, %s26
    $region7: #{tpu_custom_call.1} parent=1 // loop_footer_branch
      %25 = sbr.rel target = $region3
    $region8: #{tpu_custom_call.1} parent=1 // loop_exit
      _
    %3532 = vsyncpa [#allocation5], 1
    %s3533 = scalar_lea.sflag [#allocation5], 1
    %3534 = vsyncpa %s3533, 1
    %3535 = vsyncpa [#allocation6], 1
    %s3536 = scalar_lea.sflag [#allocation6], 1
    %3537 = vsyncpa %s3536, 1
    %3538 = vsyncpa [#allocation7], 1
    %s3539 = scalar_lea.sflag [#allocation7], 1
    %3540 = vsyncpa %s3539, 1
    %3541 = vsyncpa [#allocation10], 1
    %3542 = vsyncpa [#allocation13], 1
    %3543 = vsyncpa [#allocation16], 1

</llo_original>
